<compile_context>
chip_gen: v6e
topology: v6e:2x2x1
jax: 0.10.0
libtpu: 0.0.40
codegen_flags: <defaults>
</compile_context>

<pallas_src>
import functools

import jax
import jax.numpy as jnp
from jax.experimental import pallas as pl
from jax.experimental.pallas import tpu as pltpu


# ----------------------------- Pallas kernel --------------------------------
def _conv_bn_kernel(x_ref, w_ref, scale_ref, bias_ref, out_ref, *,
                    n_kh, n_kw, oh, ow, stride, dilation):
    """Implicit-GEMM conv + fused BN epilogue for one (batch tile, Cout tile).

    x_ref:     (TN, Hp, Wp, Cin)       bf16 padded NHWC input tile
    w_ref:     (KH*KW, Cin, CT)        bf16 weight taps (lane-dense Cout tile)
    scale_ref: (1, CT)                 f32  gamma / sqrt(running_var + eps)
    bias_ref:  (1, CT)                 f32  beta - running_mean * scale
    out_ref:   (1, TN*OH*OW, CT)
    """
    tn = x_ref.shape[0]
    cin = x_ref.shape[-1]
    rows = tn * oh * ow

    acc = None                                   # f32 register/vreg accumulator
    for i in range(n_kh):
        for j in range(n_kw):
            h0 = i * dilation
            w0 = j * dilation
            if stride == 1:
                tap = x_ref[:, h0:h0 + oh, w0:w0 + ow, :]
            else:
                # Strided ref load: the stride is absorbed by the vld instead of
                # an in-VMEM gather/relayout of a loaded array (review #5).
                tap = x_ref[:, pl.ds(h0, oh, stride), pl.ds(w0, ow, stride), :]
            # Flatten leading (TN, OH, OW) dims; last (lane) dim unchanged.
            tap = tap.reshape(rows, cin)
            d = jnp.dot(tap, w_ref[i * n_kw + j],
                        preferred_element_type=jnp.float32)
            acc = d if acc is None else acc + d

    # f32 epilogue; cast only at the final (lane-dense) store.
    out_ref[0] = (acc * scale_ref[...] + bias_ref[...]).astype(out_ref.dtype)


# ------------------------------- wrapper -------------------------------------
@functools.partial(jax.jit, static_argnames=("stride", "padding", "dilation"))
def basic_conv2d(x, weight, gamma, beta, running_mean, running_var,
                 *, stride=1, padding=0, dilation=1, eps=1e-5):
    """Forward pass of BasicConv2d (Conv2d bias=False + BatchNorm2d eval mode).

    x:      (N, Cin, H, W) float32 NCHW
    weight: (Cout, Cin, KH, KW)
    gamma/beta/running_mean/running_var: (Cout,)
    returns (N, Cout, OH, OW) NCHW
    """
    n, cin, h, w = x.shape
    cout, _, kh, kw = weight.shape

    oh = (h + 2 * padding - dilation * (kh - 1) - 1) // stride + 1
    ow = (w + 2 * padding - dilation * (kw - 1) - 1) // stride + 1
    hp = h + 2 * padding
    wp = w + 2 * padding

    compute_dtype = jnp.bfloat16
    out_dtype = x.dtype

    # Lane-dense output channels.  256-wide Cout tiles when big enough (fills
    # the 256-wide v6e/v7x MXU); 128 otherwise (v5e MXU width / small Cout).
    if cout > 128:
        cout_pad = -(-cout // 256) * 256
        ct = 256
    else:
        cout_pad = 128
        ct = 128
    n_ct = cout_pad // ct

    # Batch tiling: target ~512 output rows (M) per grid step (v7x VMEM budget),
    # but never collapse the grid to a single step when N >= 2, so DMA of the
    # next tile overlaps compute and megacore can shard the parallel axes.
    rows_per_img = oh * ow
    tn = max(1, 512 // max(rows_per_img, 1))
    if n >= 2:
        tn = min(tn, -(-n // 2))
    tn = min(tn, n)
    n_pad = -(-n // tn) * tn
    g = n_pad // tn
    rows_blk = tn * rows_per_img

    # Layout plumbing for the NCHW host interface (tiny vs. the conv itself):
    # NCHW -> NHWC, zero-pad spatial + batch, cast bf16.
    x_nhwc = jnp.transpose(x, (0, 2, 3, 1))
    x_nhwc = jnp.pad(x_nhwc, ((0, n_pad - n), (padding, padding),
                              (padding, padding), (0, 0)))
    x_nhwc = x_nhwc.astype(compute_dtype)

    # (Cout, Cin, KH, KW) -> (KH*KW, Cin, Cout_pad), bf16, lane-dense in Cout.
    w_taps = jnp.transpose(weight, (2, 3, 1, 0)).reshape(kh * kw, cin, cout)
    w_taps = jnp.pad(w_taps, ((0, 0), (0, 0), (0, cout_pad - cout)))
    w_taps = w_taps.astype(compute_dtype)

    # Fold BN (eval mode) into per-channel scale + bias (f32), padded to Cout_pad.
    inv = (gamma * jax.lax.rsqrt(running_var + eps)).astype(jnp.float32)
    scale = jnp.pad(inv, (0, cout_pad - cout)).reshape(1, cout_pad)
    bias = jnp.pad((beta - running_mean * inv).astype(jnp.float32),
                   (0, cout_pad - cout)).reshape(1, cout_pad)

    kernel = functools.partial(_conv_bn_kernel, n_kh=kh, n_kw=kw, oh=oh, ow=ow,
                               stride=stride, dilation=dilation)

    flops = 2 * n_pad * rows_per_img * (cin * kh * kw) * cout_pad
    bytes_accessed = int(n_ct * x_nhwc.size * x_nhwc.dtype.itemsize
                         + g * w_taps.size * w_taps.dtype.itemsize
                         + g * rows_blk * cout_pad * jnp.dtype(out_dtype).itemsize)

    out3 = pl.pallas_call(
        kernel,
        out_shape=jax.ShapeDtypeStruct((g, rows_blk, cout_pad), out_dtype),
        grid_spec=pltpu.PrefetchScalarGridSpec(
            num_scalar_prefetch=0,
            grid=(g, n_ct),
            in_specs=[
                pl.BlockSpec((tn, hp, wp, cin), lambda i, j: (i, 0, 0, 0)),
                pl.BlockSpec((kh * kw, cin, ct), lambda i, j: (0, 0, j)),
                pl.BlockSpec((1, ct), lambda i, j: (0, j)),
                pl.BlockSpec((1, ct), lambda i, j: (0, j)),
            ],
            out_specs=pl.BlockSpec((1, rows_blk, ct), lambda i, j: (i, 0, j)),
        ),
        compiler_params=pltpu.CompilerParams(
            dimension_semantics=("parallel", "parallel"),   # megacore on v7x
            vmem_limit_bytes=32 * 1024 * 1024),              # explicit (v5e: 16 MiB default)
        cost_estimate=pl.CostEstimate(flops=flops, transcendentals=0,
                                      bytes_accessed=bytes_accessed),
    )(x_nhwc, w_taps, scale, bias)

    # (G, TN*OH*OW, Cout_pad) -> (N, Cout, OH, OW); drop batch/channel padding.
    out = out3.reshape(n_pad, oh, ow, cout_pad)[:n, :, :, :cout]
    return jnp.transpose(out, (0, 3, 1, 2))


# ------------------------------ reference ------------------------------------
def _reference(x, weight, gamma, beta, running_mean, running_var,
               stride, padding, dilation, eps=1e-5):
    y = jax.lax.conv_general_dilated(
        x, weight,
        window_strides=(stride, stride),
        padding=((padding, padding), (padding, padding)),
        rhs_dilation=(dilation, dilation),
        dimension_numbers=("NCHW", "OIHW", "NCHW"))
    inv = gamma / jnp.sqrt(running_var + eps)
    return y * inv[None, :, None, None] + (beta - running_mean * inv)[None, :, None, None]


if __name__ == "__main__":
    key = jax.random.PRNGKey(0)
    k_x, k_w, k_g, k_b, k_m, k_v = jax.random.split(key, 6)

    # Small shapes consistent with the module: in_planes=4, out_planes=8,
    # kernel_size=3, stride=1, padding=1.
    N, Cin, H, W = 2, 4, 16, 16
    Cout, KH, KW = 8, 3, 3
    stride, padding, dilation = 1, 1, 1

    x = jax.random.normal(k_x, (N, Cin, H, W), dtype=jnp.float32)
    weight = jax.random.normal(k_w, (Cout, Cin, KH, KW), dtype=jnp.float32) * 0.1
    gamma = jax.random.normal(k_g, (Cout,), dtype=jnp.float32) * 0.1 + 1.0
    beta = jax.random.normal(k_b, (Cout,), dtype=jnp.float32) * 0.1
    running_mean = jax.random.normal(k_m, (Cout,), dtype=jnp.float32) * 0.1
    running_var = jax.nn.softplus(jax.random.normal(k_v, (Cout,), dtype=jnp.float32)) + 0.5

    out = basic_conv2d(x, weight, gamma, beta, running_mean, running_var,
                       stride=stride, padding=padding, dilation=dilation)
    out = jax.block_until_ready(out)

    ref = _reference(x, weight, gamma, beta, running_mean, running_var,
                     stride, padding, dilation)
    assert out.shape == (N, Cout, H, W), out.shape
    max_err = float(jnp.max(jnp.abs(out - ref)))
    # bf16 MXU operands with f32 accumulation -> loosened tolerance vs f32 ref.
    assert max_err < 5e-2, max_err

    print("KERNEL_OK")
</pallas_src>

<mosaic_0001>
module attributes {stable_mosaic.version = 11 : i64} {
  func.func @_conv_bn_kernel(%arg0: i32, %arg1: i32, %arg2: memref<1x18x18x4xbf16, #tpu.memory_space<vmem>>, %arg3: memref<9x4x128xbf16, #tpu.memory_space<vmem>>, %arg4: memref<1x128xf32, #tpu.memory_space<vmem>>, %arg5: memref<1x128xf32, #tpu.memory_space<vmem>>, %arg6: memref<1x256x128xf32, #tpu.memory_space<vmem>>) attributes {dimension_semantics = [#tpu.dimension_semantics<parallel>, #tpu.dimension_semantics<parallel>], iteration_bounds = array<i64: 2, 1>, scalar_prefetch = 0 : i64, scratch_operands = 0 : i64, tpu.core_type = #tpu.core_type<tc>, window_params = [{transform_indices = @transform_0, window_bounds = array<i64: 1, 18, 18, 4>}, {transform_indices = @transform_1, window_bounds = array<i64: 9, 4, 128>}, {transform_indices = @transform_2, window_bounds = array<i64: 1, 128>}, {transform_indices = @transform_3, window_bounds = array<i64: 1, 128>}, {transform_indices = @transform_4, window_bounds = array<i64: 1, 256, 128>}]} {
    %c0 = arith.constant 0 : index
    %c0_0 = arith.constant 0 : index
    %c0_1 = arith.constant 0 : index
    %c0_2 = arith.constant 0 : index
    %0 = vector.load %arg2[%c0, %c0_0, %c0_1, %c0_2] : memref<1x18x18x4xbf16, #tpu.memory_space<vmem>>, vector<1x16x16x4xbf16>
    %1 = vector.shape_cast %0 : vector<1x16x16x4xbf16> to vector<256x4xbf16>
    %c0_3 = arith.constant 0 : index
    %c0_4 = arith.constant 0 : index
    %c0_5 = arith.constant 0 : index
    %2 = vector.load %arg3[%c0_3, %c0_4, %c0_5] : memref<9x4x128xbf16, #tpu.memory_space<vmem>>, vector<1x4x128xbf16>
    %3 = vector.shape_cast %2 : vector<1x4x128xbf16> to vector<4x128xbf16>
    %cst = arith.constant dense<0.000000e+00> : vector<256x128xf32>
    %4 = tpu.matmul %1, %3, %cst {dimension_numbers = #tpu.dot_dimension_numbers<[1], [0], [0], [1], [0, 0, 1, 1], [], []>} : vector<256x4xbf16>, vector<4x128xbf16>, vector<256x128xf32> -> vector<256x128xf32>
    %c0_6 = arith.constant 0 : index
    %c0_7 = arith.constant 0 : index
    %c1 = arith.constant 1 : index
    %c0_8 = arith.constant 0 : index
    %5 = vector.load %arg2[%c0_6, %c0_7, %c1, %c0_8] : memref<1x18x18x4xbf16, #tpu.memory_space<vmem>>, vector<1x16x16x4xbf16>
    %6 = vector.shape_cast %5 : vector<1x16x16x4xbf16> to vector<256x4xbf16>
    %c1_9 = arith.constant 1 : index
    %c0_10 = arith.constant 0 : index
    %c0_11 = arith.constant 0 : index
    %7 = vector.load %arg3[%c1_9, %c0_10, %c0_11] : memref<9x4x128xbf16, #tpu.memory_space<vmem>>, vector<1x4x128xbf16>
    %8 = vector.shape_cast %7 : vector<1x4x128xbf16> to vector<4x128xbf16>
    %cst_12 = arith.constant dense<0.000000e+00> : vector<256x128xf32>
    %9 = tpu.matmul %6, %8, %cst_12 {dimension_numbers = #tpu.dot_dimension_numbers<[1], [0], [0], [1], [0, 0, 1, 1], [], []>} : vector<256x4xbf16>, vector<4x128xbf16>, vector<256x128xf32> -> vector<256x128xf32>
    %10 = arith.addf %4, %9 : vector<256x128xf32>
    %c0_13 = arith.constant 0 : index
    %c0_14 = arith.constant 0 : index
    %c2 = arith.constant 2 : index
    %c0_15 = arith.constant 0 : index
    %11 = vector.load %arg2[%c0_13, %c0_14, %c2, %c0_15] : memref<1x18x18x4xbf16, #tpu.memory_space<vmem>>, vector<1x16x16x4xbf16>
    %12 = vector.shape_cast %11 : vector<1x16x16x4xbf16> to vector<256x4xbf16>
    %c2_16 = arith.constant 2 : index
    %c0_17 = arith.constant 0 : index
    %c0_18 = arith.constant 0 : index
    %13 = vector.load %arg3[%c2_16, %c0_17, %c0_18] : memref<9x4x128xbf16, #tpu.memory_space<vmem>>, vector<1x4x128xbf16>
    %14 = vector.shape_cast %13 : vector<1x4x128xbf16> to vector<4x128xbf16>
    %cst_19 = arith.constant dense<0.000000e+00> : vector<256x128xf32>
    %15 = tpu.matmul %12, %14, %cst_19 {dimension_numbers = #tpu.dot_dimension_numbers<[1], [0], [0], [1], [0, 0, 1, 1], [], []>} : vector<256x4xbf16>, vector<4x128xbf16>, vector<256x128xf32> -> vector<256x128xf32>
    %16 = arith.addf %10, %15 : vector<256x128xf32>
    %c0_20 = arith.constant 0 : index
    %c1_21 = arith.constant 1 : index
    %c0_22 = arith.constant 0 : index
    %c0_23 = arith.constant 0 : index
    %17 = vector.load %arg2[%c0_20, %c1_21, %c0_22, %c0_23] : memref<1x18x18x4xbf16, #tpu.memory_space<vmem>>, vector<1x16x16x4xbf16>
    %18 = vector.shape_cast %17 : vector<1x16x16x4xbf16> to vector<256x4xbf16>
    %c3 = arith.constant 3 : index
    %c0_24 = arith.constant 0 : index
    %c0_25 = arith.constant 0 : index
    %19 = vector.load %arg3[%c3, %c0_24, %c0_25] : memref<9x4x128xbf16, #tpu.memory_space<vmem>>, vector<1x4x128xbf16>
    %20 = vector.shape_cast %19 : vector<1x4x128xbf16> to vector<4x128xbf16>
    %cst_26 = arith.constant dense<0.000000e+00> : vector<256x128xf32>
    %21 = tpu.matmul %18, %20, %cst_26 {dimension_numbers = #tpu.dot_dimension_numbers<[1], [0], [0], [1], [0, 0, 1, 1], [], []>} : vector<256x4xbf16>, vector<4x128xbf16>, vector<256x128xf32> -> vector<256x128xf32>
    %22 = arith.addf %16, %21 : vector<256x128xf32>
    %c0_27 = arith.constant 0 : index
    %c1_28 = arith.constant 1 : index
    %c1_29 = arith.constant 1 : index
    %c0_30 = arith.constant 0 : index
    %23 = vector.load %arg2[%c0_27, %c1_28, %c1_29, %c0_30] : memref<1x18x18x4xbf16, #tpu.memory_space<vmem>>, vector<1x16x16x4xbf16>
    %24 = vector.shape_cast %23 : vector<1x16x16x4xbf16> to vector<256x4xbf16>
    %c4 = arith.constant 4 : index
    %c0_31 = arith.constant 0 : index
    %c0_32 = arith.constant 0 : index
    %25 = vector.load %arg3[%c4, %c0_31, %c0_32] : memref<9x4x128xbf16, #tpu.memory_space<vmem>>, vector<1x4x128xbf16>
    %26 = vector.shape_cast %25 : vector<1x4x128xbf16> to vector<4x128xbf16>
    %cst_33 = arith.constant dense<0.000000e+00> : vector<256x128xf32>
    %27 = tpu.matmul %24, %26, %cst_33 {dimension_numbers = #tpu.dot_dimension_numbers<[1], [0], [0], [1], [0, 0, 1, 1], [], []>} : vector<256x4xbf16>, vector<4x128xbf16>, vector<256x128xf32> -> vector<256x128xf32>
    %28 = arith.addf %22, %27 : vector<256x128xf32>
    %c0_34 = arith.constant 0 : index
    %c1_35 = arith.constant 1 : index
    %c2_36 = arith.constant 2 : index
    %c0_37 = arith.constant 0 : index
    %29 = vector.load %arg2[%c0_34, %c1_35, %c2_36, %c0_37] : memref<1x18x18x4xbf16, #tpu.memory_space<vmem>>, vector<1x16x16x4xbf16>
    %30 = vector.shape_cast %29 : vector<1x16x16x4xbf16> to vector<256x4xbf16>
    %c5 = arith.constant 5 : index
    %c0_38 = arith.constant 0 : index
    %c0_39 = arith.constant 0 : index
    %31 = vector.load %arg3[%c5, %c0_38, %c0_39] : memref<9x4x128xbf16, #tpu.memory_space<vmem>>, vector<1x4x128xbf16>
    %32 = vector.shape_cast %31 : vector<1x4x128xbf16> to vector<4x128xbf16>
    %cst_40 = arith.constant dense<0.000000e+00> : vector<256x128xf32>
    %33 = tpu.matmul %30, %32, %cst_40 {dimension_numbers = #tpu.dot_dimension_numbers<[1], [0], [0], [1], [0, 0, 1, 1], [], []>} : vector<256x4xbf16>, vector<4x128xbf16>, vector<256x128xf32> -> vector<256x128xf32>
    %34 = arith.addf %28, %33 : vector<256x128xf32>
    %c0_41 = arith.constant 0 : index
    %c2_42 = arith.constant 2 : index
    %c0_43 = arith.constant 0 : index
    %c0_44 = arith.constant 0 : index
    %35 = vector.load %arg2[%c0_41, %c2_42, %c0_43, %c0_44] : memref<1x18x18x4xbf16, #tpu.memory_space<vmem>>, vector<1x16x16x4xbf16>
    %36 = vector.shape_cast %35 : vector<1x16x16x4xbf16> to vector<256x4xbf16>
    %c6 = arith.constant 6 : index
    %c0_45 = arith.constant 0 : index
    %c0_46 = arith.constant 0 : index
    %37 = vector.load %arg3[%c6, %c0_45, %c0_46] : memref<9x4x128xbf16, #tpu.memory_space<vmem>>, vector<1x4x128xbf16>
    %38 = vector.shape_cast %37 : vector<1x4x128xbf16> to vector<4x128xbf16>
    %cst_47 = arith.constant dense<0.000000e+00> : vector<256x128xf32>
    %39 = tpu.matmul %36, %38, %cst_47 {dimension_numbers = #tpu.dot_dimension_numbers<[1], [0], [0], [1], [0, 0, 1, 1], [], []>} : vector<256x4xbf16>, vector<4x128xbf16>, vector<256x128xf32> -> vector<256x128xf32>
    %40 = arith.addf %34, %39 : vector<256x128xf32>
    %c0_48 = arith.constant 0 : index
    %c2_49 = arith.constant 2 : index
    %c1_50 = arith.constant 1 : index
    %c0_51 = arith.constant 0 : index
    %41 = vector.load %arg2[%c0_48, %c2_49, %c1_50, %c0_51] : memref<1x18x18x4xbf16, #tpu.memory_space<vmem>>, vector<1x16x16x4xbf16>
    %42 = vector.shape_cast %41 : vector<1x16x16x4xbf16> to vector<256x4xbf16>
    %c7 = arith.constant 7 : index
    %c0_52 = arith.constant 0 : index
    %c0_53 = arith.constant 0 : index
    %43 = vector.load %arg3[%c7, %c0_52, %c0_53] : memref<9x4x128xbf16, #tpu.memory_space<vmem>>, vector<1x4x128xbf16>
    %44 = vector.shape_cast %43 : vector<1x4x128xbf16> to vector<4x128xbf16>
    %cst_54 = arith.constant dense<0.000000e+00> : vector<256x128xf32>
    %45 = tpu.matmul %42, %44, %cst_54 {dimension_numbers = #tpu.dot_dimension_numbers<[1], [0], [0], [1], [0, 0, 1, 1], [], []>} : vector<256x4xbf16>, vector<4x128xbf16>, vector<256x128xf32> -> vector<256x128xf32>
    %46 = arith.addf %40, %45 : vector<256x128xf32>
    %c0_55 = arith.constant 0 : index
    %c2_56 = arith.constant 2 : index
    %c2_57 = arith.constant 2 : index
    %c0_58 = arith.constant 0 : index
    %47 = vector.load %arg2[%c0_55, %c2_56, %c2_57, %c0_58] : memref<1x18x18x4xbf16, #tpu.memory_space<vmem>>, vector<1x16x16x4xbf16>
    %48 = vector.shape_cast %47 : vector<1x16x16x4xbf16> to vector<256x4xbf16>
    %c8 = arith.constant 8 : index
    %c0_59 = arith.constant 0 : index
    %c0_60 = arith.constant 0 : index
    %49 = vector.load %arg3[%c8, %c0_59, %c0_60] : memref<9x4x128xbf16, #tpu.memory_space<vmem>>, vector<1x4x128xbf16>
    %50 = vector.shape_cast %49 : vector<1x4x128xbf16> to vector<4x128xbf16>
    %cst_61 = arith.constant dense<0.000000e+00> : vector<256x128xf32>
    %51 = tpu.matmul %48, %50, %cst_61 {dimension_numbers = #tpu.dot_dimension_numbers<[1], [0], [0], [1], [0, 0, 1, 1], [], []>} : vector<256x4xbf16>, vector<4x128xbf16>, vector<256x128xf32> -> vector<256x128xf32>
    %52 = arith.addf %46, %51 : vector<256x128xf32>
    %c0_62 = arith.constant 0 : index
    %c0_63 = arith.constant 0 : index
    %53 = vector.load %arg4[%c0_62, %c0_63] : memref<1x128xf32, #tpu.memory_space<vmem>>, vector<1x128xf32>
    %54 = vector.broadcast %53 : vector<1x128xf32> to vector<256x128xf32>
    %55 = arith.mulf %52, %54 : vector<256x128xf32>
    %c0_64 = arith.constant 0 : index
    %c0_65 = arith.constant 0 : index
    %56 = vector.load %arg5[%c0_64, %c0_65] : memref<1x128xf32, #tpu.memory_space<vmem>>, vector<1x128xf32>
    %57 = vector.broadcast %56 : vector<1x128xf32> to vector<256x128xf32>
    %58 = arith.addf %55, %57 : vector<256x128xf32>
    %c0_66 = arith.constant 0 : index
    %c0_67 = arith.constant 0 : index
    %c0_68 = arith.constant 0 : index
    %59 = vector.load %arg6[%c0_66, %c0_67, %c0_68] : memref<1x256x128xf32, #tpu.memory_space<vmem>>, vector<1x256x128xf32>
    %60 = vector.shape_cast %59 : vector<1x256x128xf32> to vector<256x128xf32>
    %61 = vector.shape_cast %58 : vector<256x128xf32> to vector<1x256x128xf32>
    tpu.vector_store %arg6[%c0_66, %c0_67, %c0_68], %61 {strides = array<i32>} : memref<1x256x128xf32, #tpu.memory_space<vmem>>, vector<1x256x128xf32>,
    return
  }
  func.func @transform_0(%arg0: i32, %arg1: i32) -> (i32, i32, i32, i32) {
    %c0_i32 = arith.constant 0 : i32
    %c0_i32_0 = arith.constant 0 : i32
    %c0_i32_1 = arith.constant 0 : i32
    %c0_i32_2 = arith.constant 0 : i32
    return %arg0, %c0_i32, %c0_i32_0, %c0_i32_1 : i32, i32, i32, i32
  }
  func.func @transform_1(%arg0: i32, %arg1: i32) -> (i32, i32, i32) {
    %c0_i32 = arith.constant 0 : i32
    %c0_i32_0 = arith.constant 0 : i32
    %c0_i32_1 = arith.constant 0 : i32
    return %c0_i32, %c0_i32_0, %arg1 : i32, i32, i32
  }
  func.func @transform_2(%arg0: i32, %arg1: i32) -> (i32, i32) {
    %c0_i32 = arith.constant 0 : i32
    %c0_i32_0 = arith.constant 0 : i32
    return %c0_i32, %arg1 : i32, i32
  }
  func.func @transform_3(%arg0: i32, %arg1: i32) -> (i32, i32) {
    %c0_i32 = arith.constant 0 : i32
    %c0_i32_0 = arith.constant 0 : i32
    return %c0_i32, %arg1 : i32, i32
  }
  func.func @transform_4(%arg0: i32, %arg1: i32) -> (i32, i32, i32) {
    %c0_i32 = arith.constant 0 : i32
    %c0_i32_0 = arith.constant 0 : i32
    return %arg0, %c0_i32, %arg1 : i32, i32, i32
  }
}

</mosaic_0001>

<llo_original>
// kernel: basic_conv2d.1
$region0: #{basic_conv2d.1}
  #allocation0 [shape = 'u32[]', space=smem, size = 0x4, offset = 0x4, fixed_abs, tag = 'smem constant byte address 0x4 - core index']
  #allocation1 [shape = 'u32[144,128]{1,0:T(1,128)}', space=vmem, size = 0x12000, scoped, tag = 'internal scratch']
  %s0 = inlined_call_operand.vmem [shape: bf16[2,18,18,4], index: 0, kind: input, shape index: {}]
  %s1 = inlined_call_operand.vmem [shape: bf16[9,4,128], index: 1, kind: input, shape index: {}]
  %s2 = inlined_call_operand.vmem [shape: f32[1,128], index: 2, kind: input, shape index: {}]
  %s3 = inlined_call_operand.vmem [shape: f32[1,128], index: 3, kind: input, shape index: {}]
  %s4 = inlined_call_operand.vmem [shape: f32[2,256,128], index: 4, kind: output, shape index: {}]
  %s5 = sld [smem:[#allocation0]]
  $region49: #{basic_conv2d.1} parent=0
    _
  %s7 = ssub.s32 1, %s5
  %s8 = scalar_select 0, %s7, %s5
  loop: start=0, step=1, limit=4
  $region2: #{basic_conv2d.1} parent=0 // loop_pre_header
    _
  $region3: #{basic_conv2d.1} parent=0 // loop_header
    %s10 = sphi 0, %s14
    %p11 = scmp.ge.s32.totalorder %s10, 4
    %s17 = sphi 0, %s29
    %s18 = sphi 0, %s25
    %s19 = sphi 0, %s17
    %s20 = sphi 0, %s18
    %s21 = sphi 0, %s19
    %s22 = sphi 0, %s20
    %s32 = sphi 0, %s34
    %s35 = sphi 0, %s32
    %s36 = sphi 0, %s35
    %s52 = sphi 0, %s36
    %s58 = sphi 0, %s60
    %s61 = sphi 0, %s58
    %s62 = sphi 0, %s61
    %s78 = sphi 0, %s62
    %s84 = sphi 0, %s86
    %s87 = sphi 0, %s84
    %s88 = sphi 0, %s87
    %s104 = sphi 0, %s88
    %s110 = sphi 0, %s112
    %s113 = sphi 0, %s110
    %s114 = sphi 0, %s113
    %s130 = sphi 0, %s114
    %s138 = sphi 0, %s140
    %s141 = sphi 0, %s138
    %s142 = sphi 0, %s141
    %s158 = sphi 0, %s142
  $region4: #{basic_conv2d.1} parent=0 // loop_header_branch
    %13 = sbr.rel (%p11) target = $region8
  $region5: #{basic_conv2d.1} parent=0 // loop_body
    %s15 = ssub.s32 %s10, 1
    %s16 = ssub.s32 %s10, 2
    %s23 = sadd.s32 1, %s18
    %p24 = scmp.ge.s32.totalorder %s23, 1
    %s25 = scalar_select %p24, 0, %s23
    %s26 = sadd.s32 1, %s17
    %s27 = scalar_select %p24, %s26, %s17
    %p28 = scmp.ge.s32.totalorder %s27, 2
    %s29 = scalar_select %p28, 0, %s27
    %s30 = ssub.s32 %s17, %s29
    %p31 = scmp.eq.s32.totalorder %s30, 0
    %s33 = sadd.s32 %s32, 1
    %s34 = scalar_select %p31, %s32, %s33
    %p37 = pneg %p31
    %p38 = scmp.eq.s32.totalorder %s10, 1
    %p39 = por %p37, %p38
    %p40 = scmp.ne.s32.totalorder %s32, %s35
    %p41 = scmp.eq.s32.totalorder %s10, 0
    %p42 = por %p40, %p41
    %p43 = scmp.ne.s32.totalorder %s32, %s35
    %p44 = scmp.eq.s32.totalorder %s15, 1
    %p45 = por %p43, %p44
    %p46 = scmp.ne.s32.totalorder %s35, %s36
    %p47 = scmp.eq.s32.totalorder %s15, 0
    %p48 = por %p46, %p47
    %p49 = scmp.ne.s32.totalorder %s35, %s36
    %p50 = scmp.eq.s32.totalorder %s16, 1
    %p51 = por %p49, %p50
    %p53 = scmp.ne.s32.totalorder %s36, %s52
    %p54 = scmp.eq.s32.totalorder %s16, 0
    %p55 = por %p53, %p54
    %s56 = ssub.s32 %s18, %s25
    %p57 = scmp.eq.s32.totalorder %s56, 0
    %s59 = sadd.s32 %s58, 1
    %s60 = scalar_select %p57, %s58, %s59
    %p63 = pneg %p57
    %p64 = scmp.eq.s32.totalorder %s10, 1
    %p65 = por %p63, %p64
    %p66 = scmp.ne.s32.totalorder %s58, %s61
    %p67 = scmp.eq.s32.totalorder %s10, 0
    %p68 = por %p66, %p67
    %p69 = scmp.ne.s32.totalorder %s58, %s61
    %p70 = scmp.eq.s32.totalorder %s15, 1
    %p71 = por %p69, %p70
    %p72 = scmp.ne.s32.totalorder %s61, %s62
    %p73 = scmp.eq.s32.totalorder %s15, 0
    %p74 = por %p72, %p73
    %p75 = scmp.ne.s32.totalorder %s61, %s62
    %p76 = scmp.eq.s32.totalorder %s16, 1
    %p77 = por %p75, %p76
    %p79 = scmp.ne.s32.totalorder %s62, %s78
    %p80 = scmp.eq.s32.totalorder %s16, 0
    %p81 = por %p79, %p80
    %s82 = ssub.s32 %s18, %s25
    %p83 = scmp.eq.s32.totalorder %s82, 0
    %s85 = sadd.s32 %s84, 1
    %s86 = scalar_select %p83, %s84, %s85
    %p89 = pneg %p83
    %p90 = scmp.eq.s32.totalorder %s10, 1
    %p91 = por %p89, %p90
    %p92 = scmp.ne.s32.totalorder %s84, %s87
    %p93 = scmp.eq.s32.totalorder %s10, 0
    %p94 = por %p92, %p93
    %p95 = scmp.ne.s32.totalorder %s84, %s87
    %p96 = scmp.eq.s32.totalorder %s15, 1
    %p97 = por %p95, %p96
    %p98 = scmp.ne.s32.totalorder %s87, %s88
    %p99 = scmp.eq.s32.totalorder %s15, 0
    %p100 = por %p98, %p99
    %p101 = scmp.ne.s32.totalorder %s87, %s88
    %p102 = scmp.eq.s32.totalorder %s16, 1
    %p103 = por %p101, %p102
    %p105 = scmp.ne.s32.totalorder %s88, %s104
    %p106 = scmp.eq.s32.totalorder %s16, 0
    %p107 = por %p105, %p106
    %s108 = ssub.s32 %s18, %s25
    %p109 = scmp.eq.s32.totalorder %s108, 0
    %s111 = sadd.s32 %s110, 1
    %s112 = scalar_select %p109, %s110, %s111
    %p115 = pneg %p109
    %p116 = scmp.eq.s32.totalorder %s10, 1
    %p117 = por %p115, %p116
    %p118 = scmp.ne.s32.totalorder %s110, %s113
    %p119 = scmp.eq.s32.totalorder %s10, 0
    %p120 = por %p118, %p119
    %p121 = scmp.ne.s32.totalorder %s110, %s113
    %p122 = scmp.eq.s32.totalorder %s15, 1
    %p123 = por %p121, %p122
    %p124 = scmp.ne.s32.totalorder %s113, %s114
    %p125 = scmp.eq.s32.totalorder %s15, 0
    %p126 = por %p124, %p125
    %p127 = scmp.ne.s32.totalorder %s113, %s114
    %p128 = scmp.eq.s32.totalorder %s16, 1
    %p129 = por %p127, %p128
    %p131 = scmp.ne.s32.totalorder %s114, %s130
    %p132 = scmp.eq.s32.totalorder %s16, 0
    %p133 = por %p131, %p132
    %s134 = ssub.s32 %s17, %s29
    %s135 = ssub.s32 %s18, %s25
    %s136 = sor.u32 %s134, %s135
    %p137 = scmp.eq.s32.totalorder %s136, 0
    %s139 = sadd.s32 %s138, 1
    %s140 = scalar_select %p137, %s138, %s139
    %p143 = pneg %p137
    %p144 = scmp.eq.s32.totalorder %s10, 1
    %p145 = por %p143, %p144
    %p146 = scmp.ne.s32.totalorder %s138, %s141
    %p147 = scmp.eq.s32.totalorder %s10, 0
    %p148 = por %p146, %p147
    %p149 = scmp.ne.s32.totalorder %s138, %s141
    %p150 = scmp.eq.s32.totalorder %s15, 1
    %p151 = por %p149, %p150
    %p152 = scmp.ne.s32.totalorder %s141, %s142
    %p153 = scmp.eq.s32.totalorder %s15, 0
    %p154 = por %p152, %p153
    %p155 = scmp.ne.s32.totalorder %s141, %s142
    %p156 = scmp.eq.s32.totalorder %s16, 1
    %p157 = por %p155, %p156
    %p159 = scmp.ne.s32.totalorder %s142, %s158
    %p160 = scmp.eq.s32.totalorder %s16, 0
    %p161 = por %p159, %p160
    %p162 = scmp.le.s32.totalorder 1, %s10
    %p163 = scmp.lt.s32.totalorder %s10, 3
    %p164 = pnand %p162, %p163
    %p165 = pneg %p164
    // Predicated region
    $region9: #{basic_conv2d.1} parent=5 // pred_check
      _
    $region10: #{basic_conv2d.1} parent=5 // pred_check_branch
      %167 = sbr.rel (%p164) target = $region12
    $region11: #{basic_conv2d.1} parent=5 // pred_region
      %s168 = ssub.s32 %s10, 1
      // Predicated region
      $region13: #{basic_conv2d.1} parent=11 // pred_check
        %p169 = pneg %p74
      $region14: #{basic_conv2d.1} parent=11 // pred_check_branch
        %171 = sbr.rel (%p169) target = $region16
      $region15: #{basic_conv2d.1} parent=11 // pred_region
        %p172 = scmp.lt.s32.totalorder %s20, 0
        %s173 = scalar_select %p172, %s20, 0
        %s174 = smul.addr %s173, 2
        %s175 = scalar_lea.vmem %s1, %s174
      $region16: #{basic_conv2d.1} parent=11 // pred_fallthru
        _
      // Predicated region
      $region17: #{basic_conv2d.1} parent=11 // pred_check
        %p176 = pneg %p100
      $region18: #{basic_conv2d.1} parent=11 // pred_check_branch
        %178 = sbr.rel (%p176) target = $region20
      $region19: #{basic_conv2d.1} parent=11 // pred_region
        %p179 = scmp.lt.s32.totalorder %s20, 0
        %s180 = scalar_select %p179, %s20, 0
        %s181 = scalar_lea.vmem %s2, %s180
      $region20: #{basic_conv2d.1} parent=11 // pred_fallthru
        _
      // Predicated region
      $region21: #{basic_conv2d.1} parent=11 // pred_check
        %p182 = pneg %p126
      $region22: #{basic_conv2d.1} parent=11 // pred_check_branch
        %184 = sbr.rel (%p182) target = $region24
      $region23: #{basic_conv2d.1} parent=11 // pred_region
        %p185 = scmp.lt.s32.totalorder %s20, 0
        %s186 = scalar_select %p185, %s20, 0
        %s187 = scalar_lea.vmem %s3, %s186
      $region24: #{basic_conv2d.1} parent=11 // pred_fallthru
        _
    $region12: #{basic_conv2d.1} parent=5 // pred_fallthru
      _
    %p188 = scmp.lt.s32.totalorder %s10, 2
    // Predicated region
    $region25: #{basic_conv2d.1} parent=5 // pred_check
      %p189 = pneg %p188
    $region26: #{basic_conv2d.1} parent=5 // pred_check_branch
      %191 = sbr.rel (%p189) target = $region28
    $region27: #{basic_conv2d.1} parent=5 // pred_region
      // Predicated region
      $region29: #{basic_conv2d.1} parent=27 // pred_check
        %p192 = pneg %p42
      $region30: #{basic_conv2d.1} parent=27 // pred_check_branch
        %194 = sbr.rel (%p192) target = $region32
      $region31: #{basic_conv2d.1} parent=27 // pred_region
        %p195 = scmp.lt.s32.totalorder %s17, 1
        %s196 = scalar_select %p195, %s17, 1
        %s197 = smul.addr %s196, 54
        %s198 = smul.addr %s197, 4
        %s199 = scalar_lea.vmem %s0, %s198
      $region32: #{basic_conv2d.1} parent=27 // pred_fallthru
        _
    $region28: #{basic_conv2d.1} parent=5 // pred_fallthru
      _
    %p200 = scmp.le.s32.totalorder 1, %s10
    %p201 = scmp.lt.s32.totalorder %s10, 3
    %p202 = pnand %p200, %p201
    %p203 = pneg %p202
    // Predicated region
    $region33: #{basic_conv2d.1} parent=5 // pred_check
      _
    $region34: #{basic_conv2d.1} parent=5 // pred_check_branch
      %205 = sbr.rel (%p202) target = $region36
    $region35: #{basic_conv2d.1} parent=5 // pred_region
      %s206 = ssub.s32 %s10, 1
      %p207 = scmp.lt.s32.totalorder %s19, 1
      %s208 = scalar_select %p207, %s19, 1
      %s209 = smul.addr %s208, 54
      %s210 = smul.addr %s209, 4
      %s211 = scalar_lea.vmem %s0, %s210
      %p212 = pneg %p48
      %p213 = pneg %p45
      %p214 = scmp.lt.s32.totalorder %s20, 0
      %s215 = scalar_select %p214, %s20, 0
      %s216 = smul.addr %s215, 2
      %s217 = scalar_lea.vmem %s1, %s216
      %p218 = pneg %p74
      %p219 = pneg %p71
      %p220 = scmp.lt.s32.totalorder %s20, 0
      %s221 = scalar_select %p220, %s20, 0
      %s222 = scalar_lea.vmem %s2, %s221
      %p223 = pneg %p100
      %p224 = pneg %p97
      %p225 = scmp.lt.s32.totalorder %s20, 0
      %s226 = scalar_select %p225, %s20, 0
      %s227 = scalar_lea.vmem %s3, %s226
      %p228 = pneg %p126
      %p229 = pneg %p123
      %p230 = pneg %p154
      %p231 = pneg %p151
      %p232 = scmp.lt.s32.totalorder %s19, 1
      %s233 = scalar_select %p232, %s19, 1
      %p234 = scmp.lt.s32.totalorder %s20, 0
      %s235 = scalar_select %p234, %s20, 0
      %s236 = smul.addr %s233, 32
      %s237 = sadd.s32 %s235, %s236
      %s238 = smul.addr %s237, 8
      %s239 = scalar_lea.vmem %s4, %s238
      %p240 = scmp.lt.s32.totalorder %s19, 1
      %s241 = scalar_select %p240, %s19, 1
      %s242 = smul.addr %s241, 54
      %s243 = smul.addr %s242, 4
      %s244 = scalar_lea.vmem %s0, %s243
      %p245 = scmp.lt.s32.totalorder %s20, 0
      %s246 = scalar_select %p245, %s20, 0
      %s247 = smul.addr %s246, 2
      %s248 = scalar_lea.vmem %s1, %s247
      %p249 = scmp.lt.s32.totalorder %s20, 0
      %s250 = scalar_select %p249, %s20, 0
      %s251 = scalar_lea.vmem %s2, %s250
      %p252 = scmp.lt.s32.totalorder %s20, 0
      %s253 = scalar_select %p252, %s20, 0
      %s254 = scalar_lea.vmem %s3, %s253
      %p255 = scmp.lt.s32.totalorder %s19, 1
      %s256 = scalar_select %p255, %s19, 1
      %p257 = scmp.lt.s32.totalorder %s20, 0
      %s258 = scalar_select %p257, %s20, 0
      %s259 = smul.addr %s256, 32
      %s260 = sadd.s32 %s258, %s259
      %s261 = smul.addr %s260, 8
      %s262 = scalar_lea.vmem %s4, %s261
      %v264 = vld [vmem:[%s244] sm:$0xf]
      %v265 = vld [vmem:[%s244 + $0x4] sm:$0xf]
      %v266 = vld [vmem:[%s244 + $0xc] sm:$0xf]
      %v267 = vld [vmem:[%s244 + $0x10] sm:$0xf]
      %v268 = vld [vmem:[%s244 + $0x18] sm:$0xf]
      %v269 = vld [vmem:[%s244 + $0x1c] sm:$0xf]
      %v270 = vld [vmem:[%s244 + $0x24] sm:$0xf]
      %v271 = vld [vmem:[%s244 + $0x28] sm:$0xf]
      %v272 = vld [vmem:[%s244 + $0x30] sm:$0xf]
      %v273 = vld [vmem:[%s244 + $0x34] sm:$0xf]
      %v274 = vld [vmem:[%s244 + $0x3c] sm:$0xf]
      %v275 = vld [vmem:[%s244 + $0x40] sm:$0xf]
      %v276 = vld [vmem:[%s244 + $0x48] sm:$0xf]
      %v277 = vld [vmem:[%s244 + $0x4c] sm:$0xf]
      %v278 = vld [vmem:[%s244 + $0x54] sm:$0xf]
      %v279 = vld [vmem:[%s244 + $0x58] sm:$0xf]
      %v280 = vld [vmem:[%s244 + $0x60] sm:$0xf]
      %v281 = vld [vmem:[%s244 + $0x64] sm:$0xf]
      %v282 = vld [vmem:[%s244 + $0x6c] sm:$0xf]
      %v283 = vld [vmem:[%s244 + $0x70] sm:$0xf]
      %v284 = vld [vmem:[%s244 + $0x78] sm:$0xf]
      %v285 = vld [vmem:[%s244 + $0x7c] sm:$0xf]
      %v286 = vld [vmem:[%s244 + $0x84] sm:$0xf]
      %v287 = vld [vmem:[%s244 + $0x88] sm:$0xf]
      %v288 = vld [vmem:[%s244 + $0x90] sm:$0xf]
      %v289 = vld [vmem:[%s244 + $0x94] sm:$0xf]
      %v290 = vld [vmem:[%s244 + $0x9c] sm:$0xf]
      %v291 = vld [vmem:[%s244 + $0xa0] sm:$0xf]
      %v292 = vld [vmem:[%s244 + $0xa8] sm:$0xf]
      %v293 = vld [vmem:[%s244 + $0xac] sm:$0xf]
      %v294 = vld [vmem:[%s244 + $0xb4] sm:$0xf]
      %v295 = vld [vmem:[%s244 + $0xb8] sm:$0xf]
      %v296 = vld [vmem:[%s248] sm:$0x3]
      %v297 = vld [vmem:[%s244 + $0x8] sm:$0x1]
      %v298 = vld [vmem:[%s244 + $0x14] sm:$0x1]
      %v299 = vld [vmem:[%s244 + $0x20] sm:$0x1]
      %v300 = vld [vmem:[%s244 + $0x2c] sm:$0x1]
      %v301 = vld [vmem:[%s244 + $0x38] sm:$0x1]
      %v302 = vld [vmem:[%s244 + $0x44] sm:$0x1]
      %v303 = vld [vmem:[%s244 + $0x50] sm:$0x1]
      %v304 = vld [vmem:[%s244 + $0x5c] sm:$0x1]
      %v305 = vld [vmem:[%s244 + $0x68] sm:$0x1]
      %v306 = vld [vmem:[%s244 + $0x74] sm:$0x1]
      %v307 = vld [vmem:[%s244 + $0x80] sm:$0x1]
      %v308 = vld [vmem:[%s244 + $0x8c] sm:$0x1]
      %v309 = vld [vmem:[%s244 + $0x98] sm:$0x1]
      %v310 = vld [vmem:[%s244 + $0xa4] sm:$0x1]
      %v311 = vld [vmem:[%s244 + $0xb0] sm:$0x1]
      %v312 = vld [vmem:[%s244 + $0xbc] sm:$0x1]
      %vm313 = vsmask.f32 3328
      %vm314 = vsmask.f32 7440
      %vm315 = vmor %vm313, %vm314
      %v317 = vshrl.u32 %v264, 16
      %v319 = vrot.slane %v317, 4
      %v320 = vshll.u32 %v264, 16
      %v322 = vrot.slane %v320, 5
      %v323 = vor.u32 %v319, %v322
      %v324 = vrot.slane %v323, 4
      %v326 = vshll.u32 %v265, 16
      %v328 = vrot.slane %v326, 5
      %v329 = vsel %vm315, %v324, %v328
      %v330 = vshrl.u32 %v265, 16
      %v332 = vrot.slane %v330, 4
      %v333 = vor.u32 %v332, %v328
      %v334 = vrot.slane %v333, 4
      %v336 = vshll.u32 %v297, 16
      %v338 = vrot.slane %v336, 5
      %v339 = vsel %vm315, %v334, %v338
      %v341 = vshrl.u32 %v266, 16
      %v343 = vrot.slane %v341, 4
      %v344 = vshll.u32 %v266, 16
      %v346 = vrot.slane %v344, 5
      %v347 = vor.u32 %v343, %v346
      %v348 = vrot.slane %v347, 4
      %v350 = vshll.u32 %v267, 16
      %v352 = vrot.slane %v350, 5
      %v353 = vsel %vm315, %v348, %v352
      %v354 = vshrl.u32 %v267, 16
      %v356 = vrot.slane %v354, 4
      %v357 = vor.u32 %v356, %v352
      %v358 = vrot.slane %v357, 4
      %v360 = vshll.u32 %v298, 16
      %v362 = vrot.slane %v360, 5
      %v363 = vsel %vm315, %v358, %v362
      %v365 = vshrl.u32 %v268, 16
      %v367 = vrot.slane %v365, 4
      %v368 = vshll.u32 %v268, 16
      %v370 = vrot.slane %v368, 5
      %v371 = vor.u32 %v367, %v370
      %v372 = vrot.slane %v371, 4
      %v374 = vshll.u32 %v269, 16
      %v376 = vrot.slane %v374, 5
      %v377 = vsel %vm315, %v372, %v376
      %v378 = vshrl.u32 %v269, 16
      %v380 = vrot.slane %v378, 4
      %v381 = vor.u32 %v380, %v376
      %v382 = vrot.slane %v381, 4
      %v384 = vshll.u32 %v299, 16
      %v386 = vrot.slane %v384, 5
      %v387 = vsel %vm315, %v382, %v386
      %v389 = vshrl.u32 %v270, 16
      %v391 = vrot.slane %v389, 4
      %v392 = vshll.u32 %v270, 16
      %v394 = vrot.slane %v392, 5
      %v395 = vor.u32 %v391, %v394
      %v396 = vrot.slane %v395, 4
      %v398 = vshll.u32 %v271, 16
      %v400 = vrot.slane %v398, 5
      %v401 = vsel %vm315, %v396, %v400
      %v402 = vshrl.u32 %v271, 16
      %v404 = vrot.slane %v402, 4
      %v405 = vor.u32 %v404, %v400
      %v406 = vrot.slane %v405, 4
      %v408 = vshll.u32 %v300, 16
      %v410 = vrot.slane %v408, 5
      %v411 = vsel %vm315, %v406, %v410
      %v413 = vshrl.u32 %v272, 16
      %v415 = vrot.slane %v413, 4
      %v416 = vshll.u32 %v272, 16
      %v418 = vrot.slane %v416, 5
      %v419 = vor.u32 %v415, %v418
      %v420 = vrot.slane %v419, 4
      %v422 = vshll.u32 %v273, 16
      %v424 = vrot.slane %v422, 5
      %v425 = vsel %vm315, %v420, %v424
      %v426 = vshrl.u32 %v273, 16
      %v428 = vrot.slane %v426, 4
      %v429 = vor.u32 %v428, %v424
      %v430 = vrot.slane %v429, 4
      %v432 = vshll.u32 %v301, 16
      %v434 = vrot.slane %v432, 5
      %v435 = vsel %vm315, %v430, %v434
      %v437 = vshrl.u32 %v274, 16
      %v439 = vrot.slane %v437, 4
      %v440 = vshll.u32 %v274, 16
      %v442 = vrot.slane %v440, 5
      %v443 = vor.u32 %v439, %v442
      %v444 = vrot.slane %v443, 4
      %v446 = vshll.u32 %v275, 16
      %v448 = vrot.slane %v446, 5
      %v449 = vsel %vm315, %v444, %v448
      %v450 = vshrl.u32 %v275, 16
      %v452 = vrot.slane %v450, 4
      %v453 = vor.u32 %v452, %v448
      %v454 = vrot.slane %v453, 4
      %v456 = vshll.u32 %v302, 16
      %v458 = vrot.slane %v456, 5
      %v459 = vsel %vm315, %v454, %v458
      %v461 = vshrl.u32 %v276, 16
      %v463 = vrot.slane %v461, 4
      %v464 = vshll.u32 %v276, 16
      %v466 = vrot.slane %v464, 5
      %v467 = vor.u32 %v463, %v466
      %v468 = vrot.slane %v467, 4
      %v470 = vshll.u32 %v277, 16
      %v472 = vrot.slane %v470, 5
      %v473 = vsel %vm315, %v468, %v472
      %v474 = vshrl.u32 %v277, 16
      %v476 = vrot.slane %v474, 4
      %v477 = vor.u32 %v476, %v472
      %v478 = vrot.slane %v477, 4
      %v480 = vshll.u32 %v303, 16
      %v482 = vrot.slane %v480, 5
      %v483 = vsel %vm315, %v478, %v482
      %v485 = vshrl.u32 %v278, 16
      %v487 = vrot.slane %v485, 4
      %v488 = vshll.u32 %v278, 16
      %v490 = vrot.slane %v488, 5
      %v491 = vor.u32 %v487, %v490
      %v492 = vrot.slane %v491, 4
      %v494 = vshll.u32 %v279, 16
      %v496 = vrot.slane %v494, 5
      %v497 = vsel %vm315, %v492, %v496
      %v498 = vshrl.u32 %v279, 16
      %v500 = vrot.slane %v498, 4
      %v501 = vor.u32 %v500, %v496
      %v502 = vrot.slane %v501, 4
      %v504 = vshll.u32 %v304, 16
      %v506 = vrot.slane %v504, 5
      %v507 = vsel %vm315, %v502, %v506
      %v509 = vshrl.u32 %v280, 16
      %v511 = vrot.slane %v509, 4
      %v512 = vshll.u32 %v280, 16
      %v514 = vrot.slane %v512, 5
      %v515 = vor.u32 %v511, %v514
      %v516 = vrot.slane %v515, 4
      %v518 = vshll.u32 %v281, 16
      %v520 = vrot.slane %v518, 5
      %v521 = vsel %vm315, %v516, %v520
      %v522 = vshrl.u32 %v281, 16
      %v524 = vrot.slane %v522, 4
      %v525 = vor.u32 %v524, %v520
      %v526 = vrot.slane %v525, 4
      %v528 = vshll.u32 %v305, 16
      %v530 = vrot.slane %v528, 5
      %v531 = vsel %vm315, %v526, %v530
      %v533 = vshrl.u32 %v282, 16
      %v535 = vrot.slane %v533, 4
      %v536 = vshll.u32 %v282, 16
      %v538 = vrot.slane %v536, 5
      %v539 = vor.u32 %v535, %v538
      %v540 = vrot.slane %v539, 4
      %v542 = vshll.u32 %v283, 16
      %v544 = vrot.slane %v542, 5
      %v545 = vsel %vm315, %v540, %v544
      %v546 = vshrl.u32 %v283, 16
      %v548 = vrot.slane %v546, 4
      %v549 = vor.u32 %v548, %v544
      %v550 = vrot.slane %v549, 4
      %v552 = vshll.u32 %v306, 16
      %v554 = vrot.slane %v552, 5
      %v555 = vsel %vm315, %v550, %v554
      %v557 = vshrl.u32 %v284, 16
      %v559 = vrot.slane %v557, 4
      %v560 = vshll.u32 %v284, 16
      %v562 = vrot.slane %v560, 5
      %v563 = vor.u32 %v559, %v562
      %v564 = vrot.slane %v563, 4
      %v566 = vshll.u32 %v285, 16
      %v568 = vrot.slane %v566, 5
      %v569 = vsel %vm315, %v564, %v568
      %v570 = vshrl.u32 %v285, 16
      %v572 = vrot.slane %v570, 4
      %v573 = vor.u32 %v572, %v568
      %v574 = vrot.slane %v573, 4
      %v576 = vshll.u32 %v307, 16
      %v578 = vrot.slane %v576, 5
      %v579 = vsel %vm315, %v574, %v578
      %v581 = vshrl.u32 %v286, 16
      %v583 = vrot.slane %v581, 4
      %v584 = vshll.u32 %v286, 16
      %v586 = vrot.slane %v584, 5
      %v587 = vor.u32 %v583, %v586
      %v588 = vrot.slane %v587, 4
      %v590 = vshll.u32 %v287, 16
      %v592 = vrot.slane %v590, 5
      %v593 = vsel %vm315, %v588, %v592
      %v594 = vshrl.u32 %v287, 16
      %v596 = vrot.slane %v594, 4
      %v597 = vor.u32 %v596, %v592
      %v598 = vrot.slane %v597, 4
      %v600 = vshll.u32 %v308, 16
      %v602 = vrot.slane %v600, 5
      %v603 = vsel %vm315, %v598, %v602
      %v605 = vshrl.u32 %v288, 16
      %v607 = vrot.slane %v605, 4
      %v608 = vshll.u32 %v288, 16
      %v610 = vrot.slane %v608, 5
      %v611 = vor.u32 %v607, %v610
      %v612 = vrot.slane %v611, 4
      %v614 = vshll.u32 %v289, 16
      %v616 = vrot.slane %v614, 5
      %v617 = vsel %vm315, %v612, %v616
      %v618 = vshrl.u32 %v289, 16
      %v620 = vrot.slane %v618, 4
      %v621 = vor.u32 %v620, %v616
      %v622 = vrot.slane %v621, 4
      %v624 = vshll.u32 %v309, 16
      %v626 = vrot.slane %v624, 5
      %v627 = vsel %vm315, %v622, %v626
      %v629 = vshrl.u32 %v290, 16
      %v631 = vrot.slane %v629, 4
      %v632 = vshll.u32 %v290, 16
      %v634 = vrot.slane %v632, 5
      %v635 = vor.u32 %v631, %v634
      %v636 = vrot.slane %v635, 4
      %v638 = vshll.u32 %v291, 16
      %v640 = vrot.slane %v638, 5
      %v641 = vsel %vm315, %v636, %v640
      %v642 = vshrl.u32 %v291, 16
      %v644 = vrot.slane %v642, 4
      %v645 = vor.u32 %v644, %v640
      %v646 = vrot.slane %v645, 4
      %v648 = vshll.u32 %v310, 16
      %v650 = vrot.slane %v648, 5
      %v651 = vsel %vm315, %v646, %v650
      %v653 = vshrl.u32 %v292, 16
      %v655 = vrot.slane %v653, 4
      %v656 = vshll.u32 %v292, 16
      %v658 = vrot.slane %v656, 5
      %v659 = vor.u32 %v655, %v658
      %v660 = vrot.slane %v659, 4
      %v662 = vshll.u32 %v293, 16
      %v664 = vrot.slane %v662, 5
      %v665 = vsel %vm315, %v660, %v664
      %v666 = vshrl.u32 %v293, 16
      %v668 = vrot.slane %v666, 4
      %v669 = vor.u32 %v668, %v664
      %v670 = vrot.slane %v669, 4
      %v672 = vshll.u32 %v311, 16
      %v674 = vrot.slane %v672, 5
      %v675 = vsel %vm315, %v670, %v674
      %v677 = vshrl.u32 %v294, 16
      %v679 = vrot.slane %v677, 4
      %v680 = vshll.u32 %v294, 16
      %v682 = vrot.slane %v680, 5
      %v683 = vor.u32 %v679, %v682
      %v684 = vrot.slane %v683, 4
      %v686 = vshll.u32 %v295, 16
      %v688 = vrot.slane %v686, 5
      %v689 = vsel %vm315, %v684, %v688
      %v690 = vshrl.u32 %v295, 16
      %v692 = vrot.slane %v690, 4
      %v693 = vor.u32 %v692, %v688
      %v694 = vrot.slane %v693, 4
      %v696 = vshll.u32 %v312, 16
      %v698 = vrot.slane %v696, 5
      %v699 = vsel %vm315, %v694, %v698
      %s700 = scalar_lea.vmem %s248, 2
      %v701 = vld [vmem:[%s700] sm:$0x3]
      %v702 = vunpack.c.l.b16 %v329
      %v703 = vunpack.c.l.b16 %v339
      %v704 = vunpack.c.l.b16 %v353
      %v705 = vunpack.c.l.b16 %v363
      %v706 = vunpack.c.l.b16 %v377
      %v707 = vunpack.c.l.b16 %v387
      %v708 = vunpack.c.l.b16 %v401
      %v709 = vunpack.c.l.b16 %v411
      %v710 = vunpack.c.l.b16 %v425
      %v711 = vunpack.c.l.b16 %v435
      %v712 = vunpack.c.l.b16 %v449
      %v713 = vunpack.c.l.b16 %v459
      %v714 = vunpack.c.l.b16 %v473
      %v715 = vunpack.c.l.b16 %v483
      %v716 = vunpack.c.l.b16 %v497
      %v717 = vunpack.c.l.b16 %v507
      %v718 = vunpack.c.l.b16 %v521
      %v719 = vunpack.c.l.b16 %v531
      %v720 = vunpack.c.l.b16 %v545
      %v721 = vunpack.c.l.b16 %v555
      %v722 = vunpack.c.l.b16 %v569
      %v723 = vunpack.c.l.b16 %v579
      %v724 = vunpack.c.l.b16 %v593
      %v725 = vunpack.c.l.b16 %v603
      %v726 = vunpack.c.l.b16 %v617
      %v727 = vunpack.c.l.b16 %v627
      %v728 = vunpack.c.l.b16 %v641
      %v729 = vunpack.c.l.b16 %v651
      %v730 = vunpack.c.l.b16 %v665
      %v731 = vunpack.c.l.b16 %v675
      %v732 = vunpack.c.l.b16 %v689
      %v733 = vunpack.c.l.b16 %v699
      %v734 = vpack.c.b16 %v703, %v702
      %v735 = vpack.c.b16 %v705, %v704
      %v736 = vpack.c.b16 %v707, %v706
      %v737 = vpack.c.b16 %v709, %v708
      %v738 = vpack.c.b16 %v711, %v710
      %v739 = vpack.c.b16 %v713, %v712
      %v740 = vpack.c.b16 %v715, %v714
      %v741 = vpack.c.b16 %v717, %v716
      %v742 = vpack.c.b16 %v719, %v718
      %v743 = vpack.c.b16 %v721, %v720
      %v744 = vpack.c.b16 %v723, %v722
      %v745 = vpack.c.b16 %v725, %v724
      %v746 = vpack.c.b16 %v727, %v726
      %v747 = vpack.c.b16 %v729, %v728
      %v748 = vpack.c.b16 %v731, %v730
      %v749 = vpack.c.b16 %v733, %v732
      %vm750 = vcmask 31744
      %v752 = vsel %vm750, %v734, 0
      %v755 = vsel %vm750, %v735, 0
      %v758 = vsel %vm750, %v736, 0
      %v761 = vsel %vm750, %v737, 0
      %v764 = vsel %vm750, %v738, 0
      %v767 = vsel %vm750, %v739, 0
      %v770 = vsel %vm750, %v740, 0
      %v773 = vsel %vm750, %v741, 0
      %v776 = vsel %vm750, %v742, 0
      %v779 = vsel %vm750, %v743, 0
      %v782 = vsel %vm750, %v744, 0
      %v785 = vsel %vm750, %v745, 0
      %v788 = vsel %vm750, %v746, 0
      %v791 = vsel %vm750, %v747, 0
      %v794 = vsel %vm750, %v748, 0
      %v797 = vsel %vm750, %v749, 0
      %vm799 = vcmask 1041408
      %v801 = vsel %vm799, %v701, 0
      %803 = vmatprep.subr.bf16.mxu0 0
      %804 = vmatpush1.bf16.msra.mxu0 0
      %805 = vmatprep.subr.bf16.mxu0 0
      %806 = vmatpush1.bf16.msra.mxu0 0
      %807 = vmatprep.subr.bf16.mxu0 0
      %808 = vmatpush1.bf16.msra.mxu0 0
      %809 = vmatprep.subr.bf16.mxu0 0
      %810 = vmatpush1.bf16.msra.mxu0 0
      %811 = vmatprep.subr.bf16.mxu0 0
      %812 = vmatpush1.bf16.msra.mxu0 0
      %813 = vmatprep.subr.bf16.mxu0 0
      %814 = vmatpush1.bf16.msra.mxu0 0
      %815 = vmatprep.subr.bf16.mxu0 0
      %816 = vmatpush1.bf16.msra.mxu0 0
      %817 = vmatprep.subr.bf16.mxu0 0
      %818 = vmatpush1.bf16.msra.mxu0 %v801
      %819 = vmatprep.subr.bf16.mxu0 0
      %820 = vmatpush2.bf16.msra.mxu0 0
      %821 = vmatprep.subr.bf16.mxu0 0
      %822 = vmatpush2.bf16.msra.mxu0 0
      %823 = vmatprep.subr.bf16.mxu0 0
      %824 = vmatpush2.bf16.msra.mxu0 0
      %825 = vmatprep.subr.bf16.mxu0 0
      %826 = vmatpush2.bf16.msra.mxu0 0
      %827 = vmatprep.subr.bf16.mxu0 0
      %828 = vmatpush2.bf16.msra.mxu0 0
      %829 = vmatprep.subr.bf16.mxu0 0
      %830 = vmatpush2.bf16.msra.mxu0 0
      %831 = vmatprep.subr.bf16.mxu0 0
      %832 = vmatpush2.bf16.msra.mxu0 0
      %833 = vmatprep.subr.bf16.mxu0 0
      %834 = vmatpush2.bf16.msra.mxu0 0
      %835 = vmatprep.mubr.bf16.mxu0 0
      %836 = vmatmul.mubr.bf16.gmra.mxu0 %v752
      %v837 = vpop.f32.mrf.mxu0
      %v838 = vadd.f32 0.0, %v837
      %v839 = vpop.f32.mrf.mxu0
      %v840 = vpop.f32.mrf.mxu0
      %v841 = vadd.f32 0.0, %v840
      %v842 = vpop.f32.mrf.mxu0
      %843 = vmatprep.mubr.bf16.mxu0 0
      %844 = vmatmul.mubr.bf16.gmra.mxu0 %v755
      %v845 = vpop.f32.mrf.mxu0
      %v846 = vadd.f32 0.0, %v845
      %v847 = vpop.f32.mrf.mxu0
      %v848 = vpop.f32.mrf.mxu0
      %v849 = vadd.f32 0.0, %v848
      %v850 = vpop.f32.mrf.mxu0
      %851 = vmatprep.mubr.bf16.mxu0 0
      %852 = vmatmul.mubr.bf16.gmra.mxu0 %v758
      %v853 = vpop.f32.mrf.mxu0
      %v854 = vadd.f32 0.0, %v853
      %v855 = vpop.f32.mrf.mxu0
      %v856 = vpop.f32.mrf.mxu0
      %v857 = vadd.f32 0.0, %v856
      %v858 = vpop.f32.mrf.mxu0
      %859 = vmatprep.mubr.bf16.mxu0 0
      %860 = vmatmul.mubr.bf16.gmra.mxu0 %v761
      %v861 = vpop.f32.mrf.mxu0
      %v862 = vadd.f32 0.0, %v861
      %v863 = vpop.f32.mrf.mxu0
      %v864 = vpop.f32.mrf.mxu0
      %v865 = vadd.f32 0.0, %v864
      %v866 = vpop.f32.mrf.mxu0
      %867 = vmatprep.mubr.bf16.mxu0 0
      %868 = vmatmul.mubr.bf16.gmra.mxu0 %v764
      %v869 = vpop.f32.mrf.mxu0
      %v870 = vadd.f32 0.0, %v869
      %v871 = vpop.f32.mrf.mxu0
      %v872 = vpop.f32.mrf.mxu0
      %v873 = vadd.f32 0.0, %v872
      %v874 = vpop.f32.mrf.mxu0
      %875 = vmatprep.mubr.bf16.mxu0 0
      %876 = vmatmul.mubr.bf16.gmra.mxu0 %v767
      %v877 = vpop.f32.mrf.mxu0
      %v878 = vadd.f32 0.0, %v877
      %v879 = vpop.f32.mrf.mxu0
      %v880 = vpop.f32.mrf.mxu0
      %v881 = vadd.f32 0.0, %v880
      %v882 = vpop.f32.mrf.mxu0
      %883 = vmatprep.mubr.bf16.mxu0 0
      %884 = vmatmul.mubr.bf16.gmra.mxu0 %v770
      %v885 = vpop.f32.mrf.mxu0
      %v886 = vadd.f32 0.0, %v885
      %v887 = vpop.f32.mrf.mxu0
      %v888 = vpop.f32.mrf.mxu0
      %v889 = vadd.f32 0.0, %v888
      %v890 = vpop.f32.mrf.mxu0
      %891 = vmatprep.mubr.bf16.mxu0 0
      %892 = vmatmul.mubr.bf16.gmra.mxu0 %v773
      %v893 = vpop.f32.mrf.mxu0
      %v894 = vadd.f32 0.0, %v893
      %v895 = vpop.f32.mrf.mxu0
      %v896 = vpop.f32.mrf.mxu0
      %v897 = vadd.f32 0.0, %v896
      %v898 = vpop.f32.mrf.mxu0
      %899 = vmatprep.mubr.bf16.mxu0 0
      %900 = vmatmul.mubr.bf16.gmra.mxu0 %v776
      %v901 = vpop.f32.mrf.mxu0
      %v902 = vadd.f32 0.0, %v901
      %v903 = vpop.f32.mrf.mxu0
      %v904 = vpop.f32.mrf.mxu0
      %v905 = vadd.f32 0.0, %v904
      %v906 = vpop.f32.mrf.mxu0
      %907 = vmatprep.mubr.bf16.mxu0 0
      %908 = vmatmul.mubr.bf16.gmra.mxu0 %v779
      %v909 = vpop.f32.mrf.mxu0
      %v910 = vadd.f32 0.0, %v909
      %v911 = vpop.f32.mrf.mxu0
      %v912 = vpop.f32.mrf.mxu0
      %v913 = vadd.f32 0.0, %v912
      %v914 = vpop.f32.mrf.mxu0
      %915 = vmatprep.mubr.bf16.mxu0 0
      %916 = vmatmul.mubr.bf16.gmra.mxu0 %v782
      %v917 = vpop.f32.mrf.mxu0
      %v918 = vadd.f32 0.0, %v917
      %v919 = vpop.f32.mrf.mxu0
      %v920 = vpop.f32.mrf.mxu0
      %v921 = vadd.f32 0.0, %v920
      %v922 = vpop.f32.mrf.mxu0
      %923 = vmatprep.mubr.bf16.mxu0 0
      %924 = vmatmul.mubr.bf16.gmra.mxu0 %v785
      %v925 = vpop.f32.mrf.mxu0
      %v926 = vadd.f32 0.0, %v925
      %v927 = vpop.f32.mrf.mxu0
      %v928 = vpop.f32.mrf.mxu0
      %v929 = vadd.f32 0.0, %v928
      %v930 = vpop.f32.mrf.mxu0
      %931 = vmatprep.mubr.bf16.mxu0 0
      %932 = vmatmul.mubr.bf16.gmra.mxu0 %v788
      %v933 = vpop.f32.mrf.mxu0
      %v934 = vadd.f32 0.0, %v933
      %v935 = vpop.f32.mrf.mxu0
      %v936 = vpop.f32.mrf.mxu0
      %v937 = vadd.f32 0.0, %v936
      %v938 = vpop.f32.mrf.mxu0
      %939 = vmatprep.mubr.bf16.mxu0 0
      %940 = vmatmul.mubr.bf16.gmra.mxu0 %v791
      %v941 = vpop.f32.mrf.mxu0
      %v942 = vadd.f32 0.0, %v941
      %v943 = vpop.f32.mrf.mxu0
      %v944 = vpop.f32.mrf.mxu0
      %v945 = vadd.f32 0.0, %v944
      %v946 = vpop.f32.mrf.mxu0
      %947 = vmatprep.mubr.bf16.mxu0 0
      %948 = vmatmul.mubr.bf16.gmra.mxu0 %v794
      %v949 = vpop.f32.mrf.mxu0
      %v950 = vadd.f32 0.0, %v949
      %v951 = vpop.f32.mrf.mxu0
      %v952 = vpop.f32.mrf.mxu0
      %v953 = vadd.f32 0.0, %v952
      %v954 = vpop.f32.mrf.mxu0
      %955 = vmatprep.mubr.bf16.mxu0 0
      %956 = vmatmul.mubr.bf16.gmra.mxu0 %v797
      %v957 = vpop.f32.mrf.mxu0
      %v958 = vadd.f32 0.0, %v957
      %v959 = vpop.f32.mrf.mxu0
      %v960 = vpop.f32.mrf.mxu0
      %v961 = vadd.f32 0.0, %v960
      %v962 = vpop.f32.mrf.mxu0
      %963 = vdwg.mxu0
      %v996 = vunpack.c.l.b16 %v264
      %v997 = vunpack.c.l.b16 %v265
      %v998 = vunpack.c.l.b16 %v266
      %v999 = vunpack.c.l.b16 %v267
      %v1000 = vunpack.c.l.b16 %v268
      %v1001 = vunpack.c.l.b16 %v269
      %v1002 = vunpack.c.l.b16 %v270
      %v1003 = vunpack.c.l.b16 %v271
      %v1004 = vunpack.c.l.b16 %v272
      %v1005 = vunpack.c.l.b16 %v273
      %v1006 = vunpack.c.l.b16 %v274
      %v1007 = vunpack.c.l.b16 %v275
      %v1008 = vunpack.c.l.b16 %v276
      %v1009 = vunpack.c.l.b16 %v277
      %v1010 = vunpack.c.l.b16 %v278
      %v1011 = vunpack.c.l.b16 %v279
      %v1012 = vunpack.c.l.b16 %v280
      %v1013 = vunpack.c.l.b16 %v281
      %v1014 = vunpack.c.l.b16 %v282
      %v1015 = vunpack.c.l.b16 %v283
      %v1016 = vunpack.c.l.b16 %v284
      %v1017 = vunpack.c.l.b16 %v285
      %v1018 = vunpack.c.l.b16 %v286
      %v1019 = vunpack.c.l.b16 %v287
      %v1020 = vunpack.c.l.b16 %v288
      %v1021 = vunpack.c.l.b16 %v289
      %v1022 = vunpack.c.l.b16 %v290
      %v1023 = vunpack.c.l.b16 %v291
      %v1024 = vunpack.c.l.b16 %v292
      %v1025 = vunpack.c.l.b16 %v293
      %v1026 = vunpack.c.l.b16 %v294
      %v1027 = vunpack.c.l.b16 %v295
      %v1028 = vpack.c.b16 %v997, %v996
      %v1029 = vpack.c.b16 %v999, %v998
      %v1030 = vpack.c.b16 %v1001, %v1000
      %v1031 = vpack.c.b16 %v1003, %v1002
      %v1032 = vpack.c.b16 %v1005, %v1004
      %v1033 = vpack.c.b16 %v1007, %v1006
      %v1034 = vpack.c.b16 %v1009, %v1008
      %v1035 = vpack.c.b16 %v1011, %v1010
      %v1036 = vpack.c.b16 %v1013, %v1012
      %v1037 = vpack.c.b16 %v1015, %v1014
      %v1038 = vpack.c.b16 %v1017, %v1016
      %v1039 = vpack.c.b16 %v1019, %v1018
      %v1040 = vpack.c.b16 %v1021, %v1020
      %v1041 = vpack.c.b16 %v1023, %v1022
      %v1042 = vpack.c.b16 %v1025, %v1024
      %v1043 = vpack.c.b16 %v1027, %v1026
      %v1045 = vsel %vm750, %v1028, 0
      %v1048 = vsel %vm750, %v1029, 0
      %v1051 = vsel %vm750, %v1030, 0
      %v1054 = vsel %vm750, %v1031, 0
      %v1057 = vsel %vm750, %v1032, 0
      %v1060 = vsel %vm750, %v1033, 0
      %v1063 = vsel %vm750, %v1034, 0
      %v1066 = vsel %vm750, %v1035, 0
      %v1069 = vsel %vm750, %v1036, 0
      %v1072 = vsel %vm750, %v1037, 0
      %v1075 = vsel %vm750, %v1038, 0
      %v1078 = vsel %vm750, %v1039, 0
      %v1081 = vsel %vm750, %v1040, 0
      %v1084 = vsel %vm750, %v1041, 0
      %v1087 = vsel %vm750, %v1042, 0
      %v1090 = vsel %vm750, %v1043, 0
      %v1093 = vsel %vm799, %v296, 0
      %1095 = vmatprep.subr.bf16.mxu0 0
      %1096 = vmatpush1.bf16.msra.mxu0 0
      %1097 = vmatprep.subr.bf16.mxu0 0
      %1098 = vmatpush1.bf16.msra.mxu0 0
      %1099 = vmatprep.subr.bf16.mxu0 0
      %1100 = vmatpush1.bf16.msra.mxu0 0
      %1101 = vmatprep.subr.bf16.mxu0 0
      %1102 = vmatpush1.bf16.msra.mxu0 0
      %1103 = vmatprep.subr.bf16.mxu0 0
      %1104 = vmatpush1.bf16.msra.mxu0 0
      %1105 = vmatprep.subr.bf16.mxu0 0
      %1106 = vmatpush1.bf16.msra.mxu0 0
      %1107 = vmatprep.subr.bf16.mxu0 0
      %1108 = vmatpush1.bf16.msra.mxu0 0
      %1109 = vmatprep.subr.bf16.mxu0 0
      %1110 = vmatpush1.bf16.msra.mxu0 %v1093
      %1111 = vmatprep.subr.bf16.mxu0 0
      %1112 = vmatpush2.bf16.msra.mxu0 0
      %1113 = vmatprep.subr.bf16.mxu0 0
      %1114 = vmatpush2.bf16.msra.mxu0 0
      %1115 = vmatprep.subr.bf16.mxu0 0
      %1116 = vmatpush2.bf16.msra.mxu0 0
      %1117 = vmatprep.subr.bf16.mxu0 0
      %1118 = vmatpush2.bf16.msra.mxu0 0
      %1119 = vmatprep.subr.bf16.mxu0 0
      %1120 = vmatpush2.bf16.msra.mxu0 0
      %1121 = vmatprep.subr.bf16.mxu0 0
      %1122 = vmatpush2.bf16.msra.mxu0 0
      %1123 = vmatprep.subr.bf16.mxu0 0
      %1124 = vmatpush2.bf16.msra.mxu0 0
      %1125 = vmatprep.subr.bf16.mxu0 0
      %1126 = vmatpush2.bf16.msra.mxu0 0
      %1127 = vmatprep.mubr.bf16.mxu0 0
      %1128 = vmatmul.mubr.bf16.gmra.mxu0 %v1045
      %v1129 = vpop.f32.mrf.mxu0
      %v1130 = vadd.f32 %v838, %v1129
      %v1131 = vpop.f32.mrf.mxu0
      %v1132 = vpop.f32.mrf.mxu0
      %v1133 = vadd.f32 %v841, %v1132
      %v1134 = vpop.f32.mrf.mxu0
      %1135 = vmatprep.mubr.bf16.mxu0 0
      %1136 = vmatmul.mubr.bf16.gmra.mxu0 %v1048
      %v1137 = vpop.f32.mrf.mxu0
      %v1138 = vadd.f32 %v846, %v1137
      %v1139 = vpop.f32.mrf.mxu0
      %v1140 = vpop.f32.mrf.mxu0
      %v1141 = vadd.f32 %v849, %v1140
      %v1142 = vpop.f32.mrf.mxu0
      %1143 = vmatprep.mubr.bf16.mxu0 0
      %1144 = vmatmul.mubr.bf16.gmra.mxu0 %v1051
      %v1145 = vpop.f32.mrf.mxu0
      %v1146 = vadd.f32 %v854, %v1145
      %v1147 = vpop.f32.mrf.mxu0
      %v1148 = vpop.f32.mrf.mxu0
      %v1149 = vadd.f32 %v857, %v1148
      %v1150 = vpop.f32.mrf.mxu0
      %1151 = vmatprep.mubr.bf16.mxu0 0
      %1152 = vmatmul.mubr.bf16.gmra.mxu0 %v1054
      %v1153 = vpop.f32.mrf.mxu0
      %v1154 = vadd.f32 %v862, %v1153
      %v1155 = vpop.f32.mrf.mxu0
      %v1156 = vpop.f32.mrf.mxu0
      %v1157 = vadd.f32 %v865, %v1156
      %v1158 = vpop.f32.mrf.mxu0
      %1159 = vmatprep.mubr.bf16.mxu0 0
      %1160 = vmatmul.mubr.bf16.gmra.mxu0 %v1057
      %v1161 = vpop.f32.mrf.mxu0
      %v1162 = vadd.f32 %v870, %v1161
      %v1163 = vpop.f32.mrf.mxu0
      %v1164 = vpop.f32.mrf.mxu0
      %v1165 = vadd.f32 %v873, %v1164
      %v1166 = vpop.f32.mrf.mxu0
      %1167 = vmatprep.mubr.bf16.mxu0 0
      %1168 = vmatmul.mubr.bf16.gmra.mxu0 %v1060
      %v1169 = vpop.f32.mrf.mxu0
      %v1170 = vadd.f32 %v878, %v1169
      %v1171 = vpop.f32.mrf.mxu0
      %v1172 = vpop.f32.mrf.mxu0
      %v1173 = vadd.f32 %v881, %v1172
      %v1174 = vpop.f32.mrf.mxu0
      %1175 = vmatprep.mubr.bf16.mxu0 0
      %1176 = vmatmul.mubr.bf16.gmra.mxu0 %v1063
      %v1177 = vpop.f32.mrf.mxu0
      %v1178 = vadd.f32 %v886, %v1177
      %v1179 = vpop.f32.mrf.mxu0
      %v1180 = vpop.f32.mrf.mxu0
      %v1181 = vadd.f32 %v889, %v1180
      %v1182 = vpop.f32.mrf.mxu0
      %1183 = vmatprep.mubr.bf16.mxu0 0
      %1184 = vmatmul.mubr.bf16.gmra.mxu0 %v1066
      %v1185 = vpop.f32.mrf.mxu0
      %v1186 = vadd.f32 %v894, %v1185
      %v1187 = vpop.f32.mrf.mxu0
      %v1188 = vpop.f32.mrf.mxu0
      %v1189 = vadd.f32 %v897, %v1188
      %v1190 = vpop.f32.mrf.mxu0
      %1191 = vmatprep.mubr.bf16.mxu0 0
      %1192 = vmatmul.mubr.bf16.gmra.mxu0 %v1069
      %v1193 = vpop.f32.mrf.mxu0
      %v1194 = vadd.f32 %v902, %v1193
      %v1195 = vpop.f32.mrf.mxu0
      %v1196 = vpop.f32.mrf.mxu0
      %v1197 = vadd.f32 %v905, %v1196
      %v1198 = vpop.f32.mrf.mxu0
      %1199 = vmatprep.mubr.bf16.mxu0 0
      %1200 = vmatmul.mubr.bf16.gmra.mxu0 %v1072
      %v1201 = vpop.f32.mrf.mxu0
      %v1202 = vadd.f32 %v910, %v1201
      %v1203 = vpop.f32.mrf.mxu0
      %v1204 = vpop.f32.mrf.mxu0
      %v1205 = vadd.f32 %v913, %v1204
      %v1206 = vpop.f32.mrf.mxu0
      %1207 = vmatprep.mubr.bf16.mxu0 0
      %1208 = vmatmul.mubr.bf16.gmra.mxu0 %v1075
      %v1209 = vpop.f32.mrf.mxu0
      %v1210 = vadd.f32 %v918, %v1209
      %v1211 = vpop.f32.mrf.mxu0
      %v1212 = vpop.f32.mrf.mxu0
      %v1213 = vadd.f32 %v921, %v1212
      %v1214 = vpop.f32.mrf.mxu0
      %1215 = vmatprep.mubr.bf16.mxu0 0
      %1216 = vmatmul.mubr.bf16.gmra.mxu0 %v1078
      %v1217 = vpop.f32.mrf.mxu0
      %v1218 = vadd.f32 %v926, %v1217
      %v1219 = vpop.f32.mrf.mxu0
      %v1220 = vpop.f32.mrf.mxu0
      %v1221 = vadd.f32 %v929, %v1220
      %v1222 = vpop.f32.mrf.mxu0
      %1223 = vmatprep.mubr.bf16.mxu0 0
      %1224 = vmatmul.mubr.bf16.gmra.mxu0 %v1081
      %v1225 = vpop.f32.mrf.mxu0
      %v1226 = vadd.f32 %v934, %v1225
      %v1227 = vpop.f32.mrf.mxu0
      %v1228 = vpop.f32.mrf.mxu0
      %v1229 = vadd.f32 %v937, %v1228
      %v1230 = vpop.f32.mrf.mxu0
      %1231 = vmatprep.mubr.bf16.mxu0 0
      %1232 = vmatmul.mubr.bf16.gmra.mxu0 %v1084
      %v1233 = vpop.f32.mrf.mxu0
      %v1234 = vadd.f32 %v942, %v1233
      %v1235 = vpop.f32.mrf.mxu0
      %v1236 = vpop.f32.mrf.mxu0
      %v1237 = vadd.f32 %v945, %v1236
      %v1238 = vpop.f32.mrf.mxu0
      %1239 = vmatprep.mubr.bf16.mxu0 0
      %1240 = vmatmul.mubr.bf16.gmra.mxu0 %v1087
      %v1241 = vpop.f32.mrf.mxu0
      %v1242 = vadd.f32 %v950, %v1241
      %v1243 = vpop.f32.mrf.mxu0
      %v1244 = vpop.f32.mrf.mxu0
      %v1245 = vadd.f32 %v953, %v1244
      %v1246 = vpop.f32.mrf.mxu0
      %1247 = vmatprep.mubr.bf16.mxu0 0
      %1248 = vmatmul.mubr.bf16.gmra.mxu0 %v1090
      %v1249 = vpop.f32.mrf.mxu0
      %v1250 = vadd.f32 %v958, %v1249
      %v1251 = vpop.f32.mrf.mxu0
      %v1252 = vpop.f32.mrf.mxu0
      %v1253 = vadd.f32 %v961, %v1252
      %v1254 = vpop.f32.mrf.mxu0
      %1255 = vdwg.mxu0
      %v1256 = vld [vmem:[%s244] sm:$0xe]
      %v1257 = vld [vmem:[%s244 + $0xc] sm:$0xe]
      %v1258 = vld [vmem:[%s244 + $0x18] sm:$0xe]
      %v1259 = vld [vmem:[%s244 + $0x24] sm:$0xe]
      %v1260 = vld [vmem:[%s244 + $0x30] sm:$0xe]
      %v1261 = vld [vmem:[%s244 + $0x3c] sm:$0xe]
      %v1262 = vld [vmem:[%s244 + $0x48] sm:$0xe]
      %v1263 = vld [vmem:[%s244 + $0x54] sm:$0xe]
      %v1264 = vld [vmem:[%s244 + $0x60] sm:$0xe]
      %v1265 = vld [vmem:[%s244 + $0x6c] sm:$0xe]
      %v1266 = vld [vmem:[%s244 + $0x78] sm:$0xe]
      %v1267 = vld [vmem:[%s244 + $0x84] sm:$0xe]
      %v1268 = vld [vmem:[%s244 + $0x90] sm:$0xe]
      %v1269 = vld [vmem:[%s244 + $0x9c] sm:$0xe]
      %v1270 = vld [vmem:[%s244 + $0xa8] sm:$0xe]
      %v1271 = vld [vmem:[%s244 + $0xb4] sm:$0xe]
      %vm1304 = vcmask 1042432
      %vm1305 = vcmask 1046532
      %vm1306 = vmor %vm1304, %vm1305
      %v1307 = vrot.slane %v1256, 5
      %v1308 = vrot.slane %v1307, 4
      %v1309 = vrot.slane %v265, 5
      %v1310 = vsel %vm1306, %v1308, %v1309
      %v1311 = vrot.slane %v1309, 4
      %v1312 = vrot.slane %v297, 5
      %v1313 = vsel %vm1306, %v1311, %v1312
      %v1314 = vrot.slane %v1257, 5
      %v1315 = vrot.slane %v1314, 4
      %v1316 = vrot.slane %v267, 5
      %v1317 = vsel %vm1306, %v1315, %v1316
      %v1318 = vrot.slane %v1316, 4
      %v1319 = vrot.slane %v298, 5
      %v1320 = vsel %vm1306, %v1318, %v1319
      %v1321 = vrot.slane %v1258, 5
      %v1322 = vrot.slane %v1321, 4
      %v1323 = vrot.slane %v269, 5
      %v1324 = vsel %vm1306, %v1322, %v1323
      %v1325 = vrot.slane %v1323, 4
      %v1326 = vrot.slane %v299, 5
      %v1327 = vsel %vm1306, %v1325, %v1326
      %v1328 = vrot.slane %v1259, 5
      %v1329 = vrot.slane %v1328, 4
      %v1330 = vrot.slane %v271, 5
      %v1331 = vsel %vm1306, %v1329, %v1330
      %v1332 = vrot.slane %v1330, 4
      %v1333 = vrot.slane %v300, 5
      %v1334 = vsel %vm1306, %v1332, %v1333
      %v1335 = vrot.slane %v1260, 5
      %v1336 = vrot.slane %v1335, 4
      %v1337 = vrot.slane %v273, 5
      %v1338 = vsel %vm1306, %v1336, %v1337
      %v1339 = vrot.slane %v1337, 4
      %v1340 = vrot.slane %v301, 5
      %v1341 = vsel %vm1306, %v1339, %v1340
      %v1342 = vrot.slane %v1261, 5
      %v1343 = vrot.slane %v1342, 4
      %v1344 = vrot.slane %v275, 5
      %v1345 = vsel %vm1306, %v1343, %v1344
      %v1346 = vrot.slane %v1344, 4
      %v1347 = vrot.slane %v302, 5
      %v1348 = vsel %vm1306, %v1346, %v1347
      %v1349 = vrot.slane %v1262, 5
      %v1350 = vrot.slane %v1349, 4
      %v1351 = vrot.slane %v277, 5
      %v1352 = vsel %vm1306, %v1350, %v1351
      %v1353 = vrot.slane %v1351, 4
      %v1354 = vrot.slane %v303, 5
      %v1355 = vsel %vm1306, %v1353, %v1354
      %v1356 = vrot.slane %v1263, 5
      %v1357 = vrot.slane %v1356, 4
      %v1358 = vrot.slane %v279, 5
      %v1359 = vsel %vm1306, %v1357, %v1358
      %v1360 = vrot.slane %v1358, 4
      %v1361 = vrot.slane %v304, 5
      %v1362 = vsel %vm1306, %v1360, %v1361
      %v1363 = vrot.slane %v1264, 5
      %v1364 = vrot.slane %v1363, 4
      %v1365 = vrot.slane %v281, 5
      %v1366 = vsel %vm1306, %v1364, %v1365
      %v1367 = vrot.slane %v1365, 4
      %v1368 = vrot.slane %v305, 5
      %v1369 = vsel %vm1306, %v1367, %v1368
      %v1370 = vrot.slane %v1265, 5
      %v1371 = vrot.slane %v1370, 4
      %v1372 = vrot.slane %v283, 5
      %v1373 = vsel %vm1306, %v1371, %v1372
      %v1374 = vrot.slane %v1372, 4
      %v1375 = vrot.slane %v306, 5
      %v1376 = vsel %vm1306, %v1374, %v1375
      %v1377 = vrot.slane %v1266, 5
      %v1378 = vrot.slane %v1377, 4
      %v1379 = vrot.slane %v285, 5
      %v1380 = vsel %vm1306, %v1378, %v1379
      %v1381 = vrot.slane %v1379, 4
      %v1382 = vrot.slane %v307, 5
      %v1383 = vsel %vm1306, %v1381, %v1382
      %v1384 = vrot.slane %v1267, 5
      %v1385 = vrot.slane %v1384, 4
      %v1386 = vrot.slane %v287, 5
      %v1387 = vsel %vm1306, %v1385, %v1386
      %v1388 = vrot.slane %v1386, 4
      %v1389 = vrot.slane %v308, 5
      %v1390 = vsel %vm1306, %v1388, %v1389
      %v1391 = vrot.slane %v1268, 5
      %v1392 = vrot.slane %v1391, 4
      %v1393 = vrot.slane %v289, 5
      %v1394 = vsel %vm1306, %v1392, %v1393
      %v1395 = vrot.slane %v1393, 4
      %v1396 = vrot.slane %v309, 5
      %v1397 = vsel %vm1306, %v1395, %v1396
      %v1398 = vrot.slane %v1269, 5
      %v1399 = vrot.slane %v1398, 4
      %v1400 = vrot.slane %v291, 5
      %v1401 = vsel %vm1306, %v1399, %v1400
      %v1402 = vrot.slane %v1400, 4
      %v1403 = vrot.slane %v310, 5
      %v1404 = vsel %vm1306, %v1402, %v1403
      %v1405 = vrot.slane %v1270, 5
      %v1406 = vrot.slane %v1405, 4
      %v1407 = vrot.slane %v293, 5
      %v1408 = vsel %vm1306, %v1406, %v1407
      %v1409 = vrot.slane %v1407, 4
      %v1410 = vrot.slane %v311, 5
      %v1411 = vsel %vm1306, %v1409, %v1410
      %v1412 = vrot.slane %v1271, 5
      %v1413 = vrot.slane %v1412, 4
      %v1414 = vrot.slane %v295, 5
      %v1415 = vsel %vm1306, %v1413, %v1414
      %v1416 = vrot.slane %v1414, 4
      %v1417 = vrot.slane %v312, 5
      %v1418 = vsel %vm1306, %v1416, %v1417
      %s1419 = scalar_lea.vmem %s248, 4
      %v1420 = vld [vmem:[%s1419] sm:$0x3]
      %v1421 = vunpack.c.l.b16 %v1310
      %v1422 = vunpack.c.l.b16 %v1313
      %v1423 = vunpack.c.l.b16 %v1317
      %v1424 = vunpack.c.l.b16 %v1320
      %v1425 = vunpack.c.l.b16 %v1324
      %v1426 = vunpack.c.l.b16 %v1327
      %v1427 = vunpack.c.l.b16 %v1331
      %v1428 = vunpack.c.l.b16 %v1334
      %v1429 = vunpack.c.l.b16 %v1338
      %v1430 = vunpack.c.l.b16 %v1341
      %v1431 = vunpack.c.l.b16 %v1345
      %v1432 = vunpack.c.l.b16 %v1348
      %v1433 = vunpack.c.l.b16 %v1352
      %v1434 = vunpack.c.l.b16 %v1355
      %v1435 = vunpack.c.l.b16 %v1359
      %v1436 = vunpack.c.l.b16 %v1362
      %v1437 = vunpack.c.l.b16 %v1366
      %v1438 = vunpack.c.l.b16 %v1369
      %v1439 = vunpack.c.l.b16 %v1373
      %v1440 = vunpack.c.l.b16 %v1376
      %v1441 = vunpack.c.l.b16 %v1380
      %v1442 = vunpack.c.l.b16 %v1383
      %v1443 = vunpack.c.l.b16 %v1387
      %v1444 = vunpack.c.l.b16 %v1390
      %v1445 = vunpack.c.l.b16 %v1394
      %v1446 = vunpack.c.l.b16 %v1397
      %v1447 = vunpack.c.l.b16 %v1401
      %v1448 = vunpack.c.l.b16 %v1404
      %v1449 = vunpack.c.l.b16 %v1408
      %v1450 = vunpack.c.l.b16 %v1411
      %v1451 = vunpack.c.l.b16 %v1415
      %v1452 = vunpack.c.l.b16 %v1418
      %v1453 = vpack.c.b16 %v1422, %v1421
      %v1454 = vpack.c.b16 %v1424, %v1423
      %v1455 = vpack.c.b16 %v1426, %v1425
      %v1456 = vpack.c.b16 %v1428, %v1427
      %v1457 = vpack.c.b16 %v1430, %v1429
      %v1458 = vpack.c.b16 %v1432, %v1431
      %v1459 = vpack.c.b16 %v1434, %v1433
      %v1460 = vpack.c.b16 %v1436, %v1435
      %v1461 = vpack.c.b16 %v1438, %v1437
      %v1462 = vpack.c.b16 %v1440, %v1439
      %v1463 = vpack.c.b16 %v1442, %v1441
      %v1464 = vpack.c.b16 %v1444, %v1443
      %v1465 = vpack.c.b16 %v1446, %v1445
      %v1466 = vpack.c.b16 %v1448, %v1447
      %v1467 = vpack.c.b16 %v1450, %v1449
      %v1468 = vpack.c.b16 %v1452, %v1451
      %v1470 = vsel %vm750, %v1453, 0
      %v1473 = vsel %vm750, %v1454, 0
      %v1476 = vsel %vm750, %v1455, 0
      %v1479 = vsel %vm750, %v1456, 0
      %v1482 = vsel %vm750, %v1457, 0
      %v1485 = vsel %vm750, %v1458, 0
      %v1488 = vsel %vm750, %v1459, 0
      %v1491 = vsel %vm750, %v1460, 0
      %v1494 = vsel %vm750, %v1461, 0
      %v1497 = vsel %vm750, %v1462, 0
      %v1500 = vsel %vm750, %v1463, 0
      %v1503 = vsel %vm750, %v1464, 0
      %v1506 = vsel %vm750, %v1465, 0
      %v1509 = vsel %vm750, %v1466, 0
      %v1512 = vsel %vm750, %v1467, 0
      %v1515 = vsel %vm750, %v1468, 0
      %v1518 = vsel %vm799, %v1420, 0
      %1520 = vmatprep.subr.bf16.mxu0 0
      %1521 = vmatpush1.bf16.msra.mxu0 0
      %1522 = vmatprep.subr.bf16.mxu0 0
      %1523 = vmatpush1.bf16.msra.mxu0 0
      %1524 = vmatprep.subr.bf16.mxu0 0
      %1525 = vmatpush1.bf16.msra.mxu0 0
      %1526 = vmatprep.subr.bf16.mxu0 0
      %1527 = vmatpush1.bf16.msra.mxu0 0
      %1528 = vmatprep.subr.bf16.mxu0 0
      %1529 = vmatpush1.bf16.msra.mxu0 0
      %1530 = vmatprep.subr.bf16.mxu0 0
      %1531 = vmatpush1.bf16.msra.mxu0 0
      %1532 = vmatprep.subr.bf16.mxu0 0
      %1533 = vmatpush1.bf16.msra.mxu0 0
      %1534 = vmatprep.subr.bf16.mxu0 0
      %1535 = vmatpush1.bf16.msra.mxu0 %v1518
      %1536 = vmatprep.subr.bf16.mxu0 0
      %1537 = vmatpush2.bf16.msra.mxu0 0
      %1538 = vmatprep.subr.bf16.mxu0 0
      %1539 = vmatpush2.bf16.msra.mxu0 0
      %1540 = vmatprep.subr.bf16.mxu0 0
      %1541 = vmatpush2.bf16.msra.mxu0 0
      %1542 = vmatprep.subr.bf16.mxu0 0
      %1543 = vmatpush2.bf16.msra.mxu0 0
      %1544 = vmatprep.subr.bf16.mxu0 0
      %1545 = vmatpush2.bf16.msra.mxu0 0
      %1546 = vmatprep.subr.bf16.mxu0 0
      %1547 = vmatpush2.bf16.msra.mxu0 0
      %1548 = vmatprep.subr.bf16.mxu0 0
      %1549 = vmatpush2.bf16.msra.mxu0 0
      %1550 = vmatprep.subr.bf16.mxu0 0
      %1551 = vmatpush2.bf16.msra.mxu0 0
      %1552 = vmatprep.mubr.bf16.mxu0 0
      %1553 = vmatmul.mubr.bf16.gmra.mxu0 %v1470
      %v1554 = vpop.f32.mrf.mxu0
      %v1555 = vadd.f32 0.0, %v1554
      %v1556 = vpop.f32.mrf.mxu0
      %v1557 = vpop.f32.mrf.mxu0
      %v1558 = vadd.f32 0.0, %v1557
      %v1559 = vpop.f32.mrf.mxu0
      %1560 = vmatprep.mubr.bf16.mxu0 0
      %1561 = vmatmul.mubr.bf16.gmra.mxu0 %v1473
      %v1562 = vpop.f32.mrf.mxu0
      %v1563 = vadd.f32 0.0, %v1562
      %v1564 = vpop.f32.mrf.mxu0
      %v1565 = vpop.f32.mrf.mxu0
      %v1566 = vadd.f32 0.0, %v1565
      %v1567 = vpop.f32.mrf.mxu0
      %1568 = vmatprep.mubr.bf16.mxu0 0
      %1569 = vmatmul.mubr.bf16.gmra.mxu0 %v1476
      %v1570 = vpop.f32.mrf.mxu0
      %v1571 = vadd.f32 0.0, %v1570
      %v1572 = vpop.f32.mrf.mxu0
      %v1573 = vpop.f32.mrf.mxu0
      %v1574 = vadd.f32 0.0, %v1573
      %v1575 = vpop.f32.mrf.mxu0
      %1576 = vmatprep.mubr.bf16.mxu0 0
      %1577 = vmatmul.mubr.bf16.gmra.mxu0 %v1479
      %v1578 = vpop.f32.mrf.mxu0
      %v1579 = vadd.f32 0.0, %v1578
      %v1580 = vpop.f32.mrf.mxu0
      %v1581 = vpop.f32.mrf.mxu0
      %v1582 = vadd.f32 0.0, %v1581
      %v1583 = vpop.f32.mrf.mxu0
      %1584 = vmatprep.mubr.bf16.mxu0 0
      %1585 = vmatmul.mubr.bf16.gmra.mxu0 %v1482
      %v1586 = vpop.f32.mrf.mxu0
      %v1587 = vadd.f32 0.0, %v1586
      %v1588 = vpop.f32.mrf.mxu0
      %v1589 = vpop.f32.mrf.mxu0
      %v1590 = vadd.f32 0.0, %v1589
      %v1591 = vpop.f32.mrf.mxu0
      %1592 = vmatprep.mubr.bf16.mxu0 0
      %1593 = vmatmul.mubr.bf16.gmra.mxu0 %v1485
      %v1594 = vpop.f32.mrf.mxu0
      %v1595 = vadd.f32 0.0, %v1594
      %v1596 = vpop.f32.mrf.mxu0
      %v1597 = vpop.f32.mrf.mxu0
      %v1598 = vadd.f32 0.0, %v1597
      %v1599 = vpop.f32.mrf.mxu0
      %1600 = vmatprep.mubr.bf16.mxu0 0
      %1601 = vmatmul.mubr.bf16.gmra.mxu0 %v1488
      %v1602 = vpop.f32.mrf.mxu0
      %v1603 = vadd.f32 0.0, %v1602
      %v1604 = vpop.f32.mrf.mxu0
      %v1605 = vpop.f32.mrf.mxu0
      %v1606 = vadd.f32 0.0, %v1605
      %v1607 = vpop.f32.mrf.mxu0
      %1608 = vmatprep.mubr.bf16.mxu0 0
      %1609 = vmatmul.mubr.bf16.gmra.mxu0 %v1491
      %v1610 = vpop.f32.mrf.mxu0
      %v1611 = vadd.f32 0.0, %v1610
      %v1612 = vpop.f32.mrf.mxu0
      %v1613 = vpop.f32.mrf.mxu0
      %v1614 = vadd.f32 0.0, %v1613
      %v1615 = vpop.f32.mrf.mxu0
      %1616 = vmatprep.mubr.bf16.mxu0 0
      %1617 = vmatmul.mubr.bf16.gmra.mxu0 %v1494
      %v1618 = vpop.f32.mrf.mxu0
      %v1619 = vadd.f32 0.0, %v1618
      %v1620 = vpop.f32.mrf.mxu0
      %v1621 = vpop.f32.mrf.mxu0
      %v1622 = vadd.f32 0.0, %v1621
      %v1623 = vpop.f32.mrf.mxu0
      %1624 = vmatprep.mubr.bf16.mxu0 0
      %1625 = vmatmul.mubr.bf16.gmra.mxu0 %v1497
      %v1626 = vpop.f32.mrf.mxu0
      %v1627 = vadd.f32 0.0, %v1626
      %v1628 = vpop.f32.mrf.mxu0
      %v1629 = vpop.f32.mrf.mxu0
      %v1630 = vadd.f32 0.0, %v1629
      %v1631 = vpop.f32.mrf.mxu0
      %1632 = vmatprep.mubr.bf16.mxu0 0
      %1633 = vmatmul.mubr.bf16.gmra.mxu0 %v1500
      %v1634 = vpop.f32.mrf.mxu0
      %v1635 = vadd.f32 0.0, %v1634
      %v1636 = vpop.f32.mrf.mxu0
      %v1637 = vpop.f32.mrf.mxu0
      %v1638 = vadd.f32 0.0, %v1637
      %v1639 = vpop.f32.mrf.mxu0
      %1640 = vmatprep.mubr.bf16.mxu0 0
      %1641 = vmatmul.mubr.bf16.gmra.mxu0 %v1503
      %v1642 = vpop.f32.mrf.mxu0
      %v1643 = vadd.f32 0.0, %v1642
      %v1644 = vpop.f32.mrf.mxu0
      %v1645 = vpop.f32.mrf.mxu0
      %v1646 = vadd.f32 0.0, %v1645
      %v1647 = vpop.f32.mrf.mxu0
      %1648 = vmatprep.mubr.bf16.mxu0 0
      %1649 = vmatmul.mubr.bf16.gmra.mxu0 %v1506
      %v1650 = vpop.f32.mrf.mxu0
      %v1651 = vadd.f32 0.0, %v1650
      %v1652 = vpop.f32.mrf.mxu0
      %v1653 = vpop.f32.mrf.mxu0
      %v1654 = vadd.f32 0.0, %v1653
      %v1655 = vpop.f32.mrf.mxu0
      %1656 = vmatprep.mubr.bf16.mxu0 0
      %1657 = vmatmul.mubr.bf16.gmra.mxu0 %v1509
      %v1658 = vpop.f32.mrf.mxu0
      %v1659 = vadd.f32 0.0, %v1658
      %v1660 = vpop.f32.mrf.mxu0
      %v1661 = vpop.f32.mrf.mxu0
      %v1662 = vadd.f32 0.0, %v1661
      %v1663 = vpop.f32.mrf.mxu0
      %1664 = vmatprep.mubr.bf16.mxu0 0
      %1665 = vmatmul.mubr.bf16.gmra.mxu0 %v1512
      %v1666 = vpop.f32.mrf.mxu0
      %v1667 = vadd.f32 0.0, %v1666
      %v1668 = vpop.f32.mrf.mxu0
      %v1669 = vpop.f32.mrf.mxu0
      %v1670 = vadd.f32 0.0, %v1669
      %v1671 = vpop.f32.mrf.mxu0
      %1672 = vmatprep.mubr.bf16.mxu0 0
      %1673 = vmatmul.mubr.bf16.gmra.mxu0 %v1515
      %v1674 = vpop.f32.mrf.mxu0
      %v1675 = vadd.f32 0.0, %v1674
      %v1676 = vpop.f32.mrf.mxu0
      %v1677 = vpop.f32.mrf.mxu0
      %v1678 = vadd.f32 0.0, %v1677
      %v1679 = vpop.f32.mrf.mxu0
      %1680 = vdwg.mxu0
      %v1681 = vadd.f32 %v1130, %v1555
      %v1682 = vadd.f32 %v1133, %v1558
      %v1683 = vadd.f32 %v1138, %v1563
      %v1684 = vadd.f32 %v1141, %v1566
      %v1685 = vadd.f32 %v1146, %v1571
      %v1686 = vadd.f32 %v1149, %v1574
      %v1687 = vadd.f32 %v1154, %v1579
      %v1688 = vadd.f32 %v1157, %v1582
      %v1689 = vadd.f32 %v1162, %v1587
      %v1690 = vadd.f32 %v1165, %v1590
      %v1691 = vadd.f32 %v1170, %v1595
      %v1692 = vadd.f32 %v1173, %v1598
      %v1693 = vadd.f32 %v1178, %v1603
      %v1694 = vadd.f32 %v1181, %v1606
      %v1695 = vadd.f32 %v1186, %v1611
      %v1696 = vadd.f32 %v1189, %v1614
      %v1697 = vadd.f32 %v1194, %v1619
      %v1698 = vadd.f32 %v1197, %v1622
      %v1699 = vadd.f32 %v1202, %v1627
      %v1700 = vadd.f32 %v1205, %v1630
      %v1701 = vadd.f32 %v1210, %v1635
      %v1702 = vadd.f32 %v1213, %v1638
      %v1703 = vadd.f32 %v1218, %v1643
      %v1704 = vadd.f32 %v1221, %v1646
      %v1705 = vadd.f32 %v1226, %v1651
      %v1706 = vadd.f32 %v1229, %v1654
      %v1707 = vadd.f32 %v1234, %v1659
      %v1708 = vadd.f32 %v1237, %v1662
      %v1709 = vadd.f32 %v1242, %v1667
      %v1710 = vadd.f32 %v1245, %v1670
      %v1711 = vadd.f32 %v1250, %v1675
      %v1712 = vadd.f32 %v1253, %v1678
      %s1713 = scalar_lea.vmem %s244, 12
      %v1714 = vld [vmem:[%s1713] sm:$0xf]
      %v1715 = vld [vmem:[%s1713 + $0x4] sm:$0xf]
      %v1716 = vld [vmem:[%s1713 + $0xc] sm:$0xf]
      %v1717 = vld [vmem:[%s1713 + $0x10] sm:$0xf]
      %v1718 = vld [vmem:[%s1713 + $0x18] sm:$0xf]
      %v1719 = vld [vmem:[%s1713 + $0x1c] sm:$0xf]
      %v1720 = vld [vmem:[%s1713 + $0x24] sm:$0xf]
      %v1721 = vld [vmem:[%s1713 + $0x28] sm:$0xf]
      %v1722 = vld [vmem:[%s1713 + $0x30] sm:$0xf]
      %v1723 = vld [vmem:[%s1713 + $0x34] sm:$0xf]
      %v1724 = vld [vmem:[%s1713 + $0x3c] sm:$0xf]
      %v1725 = vld [vmem:[%s1713 + $0x40] sm:$0xf]
      %v1726 = vld [vmem:[%s1713 + $0x48] sm:$0xf]
      %v1727 = vld [vmem:[%s1713 + $0x4c] sm:$0xf]
      %v1728 = vld [vmem:[%s1713 + $0x54] sm:$0xf]
      %v1729 = vld [vmem:[%s1713 + $0x58] sm:$0xf]
      %v1730 = vld [vmem:[%s1713 + $0x60] sm:$0xf]
      %v1731 = vld [vmem:[%s1713 + $0x64] sm:$0xf]
      %v1732 = vld [vmem:[%s1713 + $0x6c] sm:$0xf]
      %v1733 = vld [vmem:[%s1713 + $0x70] sm:$0xf]
      %v1734 = vld [vmem:[%s1713 + $0x78] sm:$0xf]
      %v1735 = vld [vmem:[%s1713 + $0x7c] sm:$0xf]
      %v1736 = vld [vmem:[%s1713 + $0x84] sm:$0xf]
      %v1737 = vld [vmem:[%s1713 + $0x88] sm:$0xf]
      %v1738 = vld [vmem:[%s1713 + $0x90] sm:$0xf]
      %v1739 = vld [vmem:[%s1713 + $0x94] sm:$0xf]
      %v1740 = vld [vmem:[%s1713 + $0x9c] sm:$0xf]
      %v1741 = vld [vmem:[%s1713 + $0xa0] sm:$0xf]
      %v1742 = vld [vmem:[%s1713 + $0xa8] sm:$0xf]
      %v1743 = vld [vmem:[%s1713 + $0xac] sm:$0xf]
      %v1744 = vld [vmem:[%s1713 + $0xb4] sm:$0xf]
      %v1745 = vld [vmem:[%s1713 + $0xb8] sm:$0xf]
      %s1746 = scalar_lea.vmem %s248, 6
      %v1747 = vld [vmem:[%s1746] sm:$0x3]
      %v1780 = vunpack.c.l.b16 %v1714
      %v1781 = vunpack.c.l.b16 %v1715
      %v1782 = vunpack.c.l.b16 %v1716
      %v1783 = vunpack.c.l.b16 %v1717
      %v1784 = vunpack.c.l.b16 %v1718
      %v1785 = vunpack.c.l.b16 %v1719
      %v1786 = vunpack.c.l.b16 %v1720
      %v1787 = vunpack.c.l.b16 %v1721
      %v1788 = vunpack.c.l.b16 %v1722
      %v1789 = vunpack.c.l.b16 %v1723
      %v1790 = vunpack.c.l.b16 %v1724
      %v1791 = vunpack.c.l.b16 %v1725
      %v1792 = vunpack.c.l.b16 %v1726
      %v1793 = vunpack.c.l.b16 %v1727
      %v1794 = vunpack.c.l.b16 %v1728
      %v1795 = vunpack.c.l.b16 %v1729
      %v1796 = vunpack.c.l.b16 %v1730
      %v1797 = vunpack.c.l.b16 %v1731
      %v1798 = vunpack.c.l.b16 %v1732
      %v1799 = vunpack.c.l.b16 %v1733
      %v1800 = vunpack.c.l.b16 %v1734
      %v1801 = vunpack.c.l.b16 %v1735
      %v1802 = vunpack.c.l.b16 %v1736
      %v1803 = vunpack.c.l.b16 %v1737
      %v1804 = vunpack.c.l.b16 %v1738
      %v1805 = vunpack.c.l.b16 %v1739
      %v1806 = vunpack.c.l.b16 %v1740
      %v1807 = vunpack.c.l.b16 %v1741
      %v1808 = vunpack.c.l.b16 %v1742
      %v1809 = vunpack.c.l.b16 %v1743
      %v1810 = vunpack.c.l.b16 %v1744
      %v1811 = vunpack.c.l.b16 %v1745
      %v1812 = vpack.c.b16 %v1781, %v1780
      %v1813 = vpack.c.b16 %v1783, %v1782
      %v1814 = vpack.c.b16 %v1785, %v1784
      %v1815 = vpack.c.b16 %v1787, %v1786
      %v1816 = vpack.c.b16 %v1789, %v1788
      %v1817 = vpack.c.b16 %v1791, %v1790
      %v1818 = vpack.c.b16 %v1793, %v1792
      %v1819 = vpack.c.b16 %v1795, %v1794
      %v1820 = vpack.c.b16 %v1797, %v1796
      %v1821 = vpack.c.b16 %v1799, %v1798
      %v1822 = vpack.c.b16 %v1801, %v1800
      %v1823 = vpack.c.b16 %v1803, %v1802
      %v1824 = vpack.c.b16 %v1805, %v1804
      %v1825 = vpack.c.b16 %v1807, %v1806
      %v1826 = vpack.c.b16 %v1809, %v1808
      %v1827 = vpack.c.b16 %v1811, %v1810
      %v1829 = vsel %vm750, %v1812, 0
      %v1832 = vsel %vm750, %v1813, 0
      %v1835 = vsel %vm750, %v1814, 0
      %v1838 = vsel %vm750, %v1815, 0
      %v1841 = vsel %vm750, %v1816, 0
      %v1844 = vsel %vm750, %v1817, 0
      %v1847 = vsel %vm750, %v1818, 0
      %v1850 = vsel %vm750, %v1819, 0
      %v1853 = vsel %vm750, %v1820, 0
      %v1856 = vsel %vm750, %v1821, 0
      %v1859 = vsel %vm750, %v1822, 0
      %v1862 = vsel %vm750, %v1823, 0
      %v1865 = vsel %vm750, %v1824, 0
      %v1868 = vsel %vm750, %v1825, 0
      %v1871 = vsel %vm750, %v1826, 0
      %v1874 = vsel %vm750, %v1827, 0
      %v1877 = vsel %vm799, %v1747, 0
      %1879 = vmatprep.subr.bf16.mxu0 0
      %1880 = vmatpush1.bf16.msra.mxu0 0
      %1881 = vmatprep.subr.bf16.mxu0 0
      %1882 = vmatpush1.bf16.msra.mxu0 0
      %1883 = vmatprep.subr.bf16.mxu0 0
      %1884 = vmatpush1.bf16.msra.mxu0 0
      %1885 = vmatprep.subr.bf16.mxu0 0
      %1886 = vmatpush1.bf16.msra.mxu0 0
      %1887 = vmatprep.subr.bf16.mxu0 0
      %1888 = vmatpush1.bf16.msra.mxu0 0
      %1889 = vmatprep.subr.bf16.mxu0 0
      %1890 = vmatpush1.bf16.msra.mxu0 0
      %1891 = vmatprep.subr.bf16.mxu0 0
      %1892 = vmatpush1.bf16.msra.mxu0 0
      %1893 = vmatprep.subr.bf16.mxu0 0
      %1894 = vmatpush1.bf16.msra.mxu0 %v1877
      %1895 = vmatprep.subr.bf16.mxu0 0
      %1896 = vmatpush2.bf16.msra.mxu0 0
      %1897 = vmatprep.subr.bf16.mxu0 0
      %1898 = vmatpush2.bf16.msra.mxu0 0
      %1899 = vmatprep.subr.bf16.mxu0 0
      %1900 = vmatpush2.bf16.msra.mxu0 0
      %1901 = vmatprep.subr.bf16.mxu0 0
      %1902 = vmatpush2.bf16.msra.mxu0 0
      %1903 = vmatprep.subr.bf16.mxu0 0
      %1904 = vmatpush2.bf16.msra.mxu0 0
      %1905 = vmatprep.subr.bf16.mxu0 0
      %1906 = vmatpush2.bf16.msra.mxu0 0
      %1907 = vmatprep.subr.bf16.mxu0 0
      %1908 = vmatpush2.bf16.msra.mxu0 0
      %1909 = vmatprep.subr.bf16.mxu0 0
      %1910 = vmatpush2.bf16.msra.mxu0 0
      %1911 = vmatprep.mubr.bf16.mxu0 0
      %1912 = vmatmul.mubr.bf16.gmra.mxu0 %v1829
      %v1913 = vpop.f32.mrf.mxu0
      %v1914 = vadd.f32 0.0, %v1913
      %v1915 = vpop.f32.mrf.mxu0
      %v1916 = vpop.f32.mrf.mxu0
      %v1917 = vadd.f32 0.0, %v1916
      %v1918 = vpop.f32.mrf.mxu0
      %1919 = vmatprep.mubr.bf16.mxu0 0
      %1920 = vmatmul.mubr.bf16.gmra.mxu0 %v1832
      %v1921 = vpop.f32.mrf.mxu0
      %v1922 = vadd.f32 0.0, %v1921
      %v1923 = vpop.f32.mrf.mxu0
      %v1924 = vpop.f32.mrf.mxu0
      %v1925 = vadd.f32 0.0, %v1924
      %v1926 = vpop.f32.mrf.mxu0
      %1927 = vmatprep.mubr.bf16.mxu0 0
      %1928 = vmatmul.mubr.bf16.gmra.mxu0 %v1835
      %v1929 = vpop.f32.mrf.mxu0
      %v1930 = vadd.f32 0.0, %v1929
      %v1931 = vpop.f32.mrf.mxu0
      %v1932 = vpop.f32.mrf.mxu0
      %v1933 = vadd.f32 0.0, %v1932
      %v1934 = vpop.f32.mrf.mxu0
      %1935 = vmatprep.mubr.bf16.mxu0 0
      %1936 = vmatmul.mubr.bf16.gmra.mxu0 %v1838
      %v1937 = vpop.f32.mrf.mxu0
      %v1938 = vadd.f32 0.0, %v1937
      %v1939 = vpop.f32.mrf.mxu0
      %v1940 = vpop.f32.mrf.mxu0
      %v1941 = vadd.f32 0.0, %v1940
      %v1942 = vpop.f32.mrf.mxu0
      %1943 = vmatprep.mubr.bf16.mxu0 0
      %1944 = vmatmul.mubr.bf16.gmra.mxu0 %v1841
      %v1945 = vpop.f32.mrf.mxu0
      %v1946 = vadd.f32 0.0, %v1945
      %v1947 = vpop.f32.mrf.mxu0
      %v1948 = vpop.f32.mrf.mxu0
      %v1949 = vadd.f32 0.0, %v1948
      %v1950 = vpop.f32.mrf.mxu0
      %1951 = vmatprep.mubr.bf16.mxu0 0
      %1952 = vmatmul.mubr.bf16.gmra.mxu0 %v1844
      %v1953 = vpop.f32.mrf.mxu0
      %v1954 = vadd.f32 0.0, %v1953
      %v1955 = vpop.f32.mrf.mxu0
      %v1956 = vpop.f32.mrf.mxu0
      %v1957 = vadd.f32 0.0, %v1956
      %v1958 = vpop.f32.mrf.mxu0
      %1959 = vmatprep.mubr.bf16.mxu0 0
      %1960 = vmatmul.mubr.bf16.gmra.mxu0 %v1847
      %v1961 = vpop.f32.mrf.mxu0
      %v1962 = vadd.f32 0.0, %v1961
      %v1963 = vpop.f32.mrf.mxu0
      %v1964 = vpop.f32.mrf.mxu0
      %v1965 = vadd.f32 0.0, %v1964
      %v1966 = vpop.f32.mrf.mxu0
      %1967 = vmatprep.mubr.bf16.mxu0 0
      %1968 = vmatmul.mubr.bf16.gmra.mxu0 %v1850
      %v1969 = vpop.f32.mrf.mxu0
      %v1970 = vadd.f32 0.0, %v1969
      %v1971 = vpop.f32.mrf.mxu0
      %v1972 = vpop.f32.mrf.mxu0
      %v1973 = vadd.f32 0.0, %v1972
      %v1974 = vpop.f32.mrf.mxu0
      %1975 = vmatprep.mubr.bf16.mxu0 0
      %1976 = vmatmul.mubr.bf16.gmra.mxu0 %v1853
      %v1977 = vpop.f32.mrf.mxu0
      %v1978 = vadd.f32 0.0, %v1977
      %v1979 = vpop.f32.mrf.mxu0
      %v1980 = vpop.f32.mrf.mxu0
      %v1981 = vadd.f32 0.0, %v1980
      %v1982 = vpop.f32.mrf.mxu0
      %1983 = vmatprep.mubr.bf16.mxu0 0
      %1984 = vmatmul.mubr.bf16.gmra.mxu0 %v1856
      %v1985 = vpop.f32.mrf.mxu0
      %v1986 = vadd.f32 0.0, %v1985
      %v1987 = vpop.f32.mrf.mxu0
      %v1988 = vpop.f32.mrf.mxu0
      %v1989 = vadd.f32 0.0, %v1988
      %v1990 = vpop.f32.mrf.mxu0
      %1991 = vmatprep.mubr.bf16.mxu0 0
      %1992 = vmatmul.mubr.bf16.gmra.mxu0 %v1859
      %v1993 = vpop.f32.mrf.mxu0
      %v1994 = vadd.f32 0.0, %v1993
      %v1995 = vpop.f32.mrf.mxu0
      %v1996 = vpop.f32.mrf.mxu0
      %v1997 = vadd.f32 0.0, %v1996
      %v1998 = vpop.f32.mrf.mxu0
      %1999 = vmatprep.mubr.bf16.mxu0 0
      %2000 = vmatmul.mubr.bf16.gmra.mxu0 %v1862
      %v2001 = vpop.f32.mrf.mxu0
      %v2002 = vadd.f32 0.0, %v2001
      %v2003 = vpop.f32.mrf.mxu0
      %v2004 = vpop.f32.mrf.mxu0
      %v2005 = vadd.f32 0.0, %v2004
      %v2006 = vpop.f32.mrf.mxu0
      %2007 = vmatprep.mubr.bf16.mxu0 0
      %2008 = vmatmul.mubr.bf16.gmra.mxu0 %v1865
      %v2009 = vpop.f32.mrf.mxu0
      %v2010 = vadd.f32 0.0, %v2009
      %v2011 = vpop.f32.mrf.mxu0
      %v2012 = vpop.f32.mrf.mxu0
      %v2013 = vadd.f32 0.0, %v2012
      %v2014 = vpop.f32.mrf.mxu0
      %2015 = vmatprep.mubr.bf16.mxu0 0
      %2016 = vmatmul.mubr.bf16.gmra.mxu0 %v1868
      %v2017 = vpop.f32.mrf.mxu0
      %v2018 = vadd.f32 0.0, %v2017
      %v2019 = vpop.f32.mrf.mxu0
      %v2020 = vpop.f32.mrf.mxu0
      %v2021 = vadd.f32 0.0, %v2020
      %v2022 = vpop.f32.mrf.mxu0
      %2023 = vmatprep.mubr.bf16.mxu0 0
      %2024 = vmatmul.mubr.bf16.gmra.mxu0 %v1871
      %v2025 = vpop.f32.mrf.mxu0
      %v2026 = vadd.f32 0.0, %v2025
      %v2027 = vpop.f32.mrf.mxu0
      %v2028 = vpop.f32.mrf.mxu0
      %v2029 = vadd.f32 0.0, %v2028
      %v2030 = vpop.f32.mrf.mxu0
      %2031 = vmatprep.mubr.bf16.mxu0 0
      %2032 = vmatmul.mubr.bf16.gmra.mxu0 %v1874
      %v2033 = vpop.f32.mrf.mxu0
      %v2034 = vadd.f32 0.0, %v2033
      %v2035 = vpop.f32.mrf.mxu0
      %v2036 = vpop.f32.mrf.mxu0
      %v2037 = vadd.f32 0.0, %v2036
      %v2038 = vpop.f32.mrf.mxu0
      %2039 = vdwg.mxu0
      %v2040 = vadd.f32 %v1681, %v1914
      %v2041 = vadd.f32 %v1682, %v1917
      %v2042 = vadd.f32 %v1683, %v1922
      %v2043 = vadd.f32 %v1684, %v1925
      %v2044 = vadd.f32 %v1685, %v1930
      %v2045 = vadd.f32 %v1686, %v1933
      %v2046 = vadd.f32 %v1687, %v1938
      %v2047 = vadd.f32 %v1688, %v1941
      %v2048 = vadd.f32 %v1689, %v1946
      %v2049 = vadd.f32 %v1690, %v1949
      %v2050 = vadd.f32 %v1691, %v1954
      %v2051 = vadd.f32 %v1692, %v1957
      %v2052 = vadd.f32 %v1693, %v1962
      %v2053 = vadd.f32 %v1694, %v1965
      %v2054 = vadd.f32 %v1695, %v1970
      %v2055 = vadd.f32 %v1696, %v1973
      %v2056 = vadd.f32 %v1697, %v1978
      %v2057 = vadd.f32 %v1698, %v1981
      %v2058 = vadd.f32 %v1699, %v1986
      %v2059 = vadd.f32 %v1700, %v1989
      %v2060 = vadd.f32 %v1701, %v1994
      %v2061 = vadd.f32 %v1702, %v1997
      %v2062 = vadd.f32 %v1703, %v2002
      %v2063 = vadd.f32 %v1704, %v2005
      %v2064 = vadd.f32 %v1705, %v2010
      %v2065 = vadd.f32 %v1706, %v2013
      %v2066 = vadd.f32 %v1707, %v2018
      %v2067 = vadd.f32 %v1708, %v2021
      %v2068 = vadd.f32 %v1709, %v2026
      %v2069 = vadd.f32 %v1710, %v2029
      %v2070 = vadd.f32 %v1711, %v2034
      %v2071 = vadd.f32 %v1712, %v2037
      %v2072 = vld [vmem:[%s1713] sm:$0xf]
      %v2073 = vld [vmem:[%s1713 + $0x4] sm:$0xf]
      %v2074 = vld [vmem:[%s1713 + $0x8] sm:$0x1]
      %v2075 = vld [vmem:[%s1713 + $0xc] sm:$0xf]
      %v2076 = vld [vmem:[%s1713 + $0x10] sm:$0xf]
      %v2077 = vld [vmem:[%s1713 + $0x14] sm:$0x1]
      %v2078 = vld [vmem:[%s1713 + $0x18] sm:$0xf]
      %v2079 = vld [vmem:[%s1713 + $0x1c] sm:$0xf]
      %v2080 = vld [vmem:[%s1713 + $0x20] sm:$0x1]
      %v2081 = vld [vmem:[%s1713 + $0x24] sm:$0xf]
      %v2082 = vld [vmem:[%s1713 + $0x28] sm:$0xf]
      %v2083 = vld [vmem:[%s1713 + $0x2c] sm:$0x1]
      %v2084 = vld [vmem:[%s1713 + $0x30] sm:$0xf]
      %v2085 = vld [vmem:[%s1713 + $0x34] sm:$0xf]
      %v2086 = vld [vmem:[%s1713 + $0x38] sm:$0x1]
      %v2087 = vld [vmem:[%s1713 + $0x3c] sm:$0xf]
      %v2088 = vld [vmem:[%s1713 + $0x40] sm:$0xf]
      %v2089 = vld [vmem:[%s1713 + $0x44] sm:$0x1]
      %v2090 = vld [vmem:[%s1713 + $0x48] sm:$0xf]
      %v2091 = vld [vmem:[%s1713 + $0x4c] sm:$0xf]
      %v2092 = vld [vmem:[%s1713 + $0x50] sm:$0x1]
      %v2093 = vld [vmem:[%s1713 + $0x54] sm:$0xf]
      %v2094 = vld [vmem:[%s1713 + $0x58] sm:$0xf]
      %v2095 = vld [vmem:[%s1713 + $0x5c] sm:$0x1]
      %v2096 = vld [vmem:[%s1713 + $0x60] sm:$0xf]
      %v2097 = vld [vmem:[%s1713 + $0x64] sm:$0xf]
      %v2098 = vld [vmem:[%s1713 + $0x68] sm:$0x1]
      %v2099 = vld [vmem:[%s1713 + $0x6c] sm:$0xf]
      %v2100 = vld [vmem:[%s1713 + $0x70] sm:$0xf]
      %v2101 = vld [vmem:[%s1713 + $0x74] sm:$0x1]
      %v2102 = vld [vmem:[%s1713 + $0x78] sm:$0xf]
      %v2103 = vld [vmem:[%s1713 + $0x7c] sm:$0xf]
      %v2104 = vld [vmem:[%s1713 + $0x80] sm:$0x1]
      %v2105 = vld [vmem:[%s1713 + $0x84] sm:$0xf]
      %v2106 = vld [vmem:[%s1713 + $0x88] sm:$0xf]
      %v2107 = vld [vmem:[%s1713 + $0x8c] sm:$0x1]
      %v2108 = vld [vmem:[%s1713 + $0x90] sm:$0xf]
      %v2109 = vld [vmem:[%s1713 + $0x94] sm:$0xf]
      %v2110 = vld [vmem:[%s1713 + $0x98] sm:$0x1]
      %v2111 = vld [vmem:[%s1713 + $0x9c] sm:$0xf]
      %v2112 = vld [vmem:[%s1713 + $0xa0] sm:$0xf]
      %v2113 = vld [vmem:[%s1713 + $0xa4] sm:$0x1]
      %v2114 = vld [vmem:[%s1713 + $0xa8] sm:$0xf]
      %v2115 = vld [vmem:[%s1713 + $0xac] sm:$0xf]
      %v2116 = vld [vmem:[%s1713 + $0xb0] sm:$0x1]
      %v2117 = vld [vmem:[%s1713 + $0xb4] sm:$0xf]
      %v2118 = vld [vmem:[%s1713 + $0xb8] sm:$0xf]
      %v2119 = vld [vmem:[%s1713 + $0xbc] sm:$0x1]
      %v2121 = vshrl.u32 %v2072, 16
      %v2123 = vrot.slane %v2121, 4
      %v2124 = vshll.u32 %v2072, 16
      %v2126 = vrot.slane %v2124, 5
      %v2127 = vor.u32 %v2123, %v2126
      %v2128 = vrot.slane %v2127, 4
      %v2130 = vshll.u32 %v2073, 16
      %v2132 = vrot.slane %v2130, 5
      %v2133 = vsel %vm315, %v2128, %v2132
      %v2134 = vshrl.u32 %v2073, 16
      %v2136 = vrot.slane %v2134, 4
      %v2137 = vor.u32 %v2136, %v2132
      %v2138 = vrot.slane %v2137, 4
      %v2140 = vshll.u32 %v2074, 16
      %v2142 = vrot.slane %v2140, 5
      %v2143 = vsel %vm315, %v2138, %v2142
      %v2145 = vshrl.u32 %v2075, 16
      %v2147 = vrot.slane %v2145, 4
      %v2148 = vshll.u32 %v2075, 16
      %v2150 = vrot.slane %v2148, 5
      %v2151 = vor.u32 %v2147, %v2150
      %v2152 = vrot.slane %v2151, 4
      %v2154 = vshll.u32 %v2076, 16
      %v2156 = vrot.slane %v2154, 5
      %v2157 = vsel %vm315, %v2152, %v2156
      %v2158 = vshrl.u32 %v2076, 16
      %v2160 = vrot.slane %v2158, 4
      %v2161 = vor.u32 %v2160, %v2156
      %v2162 = vrot.slane %v2161, 4
      %v2164 = vshll.u32 %v2077, 16
      %v2166 = vrot.slane %v2164, 5
      %v2167 = vsel %vm315, %v2162, %v2166
      %v2169 = vshrl.u32 %v2078, 16
      %v2171 = vrot.slane %v2169, 4
      %v2172 = vshll.u32 %v2078, 16
      %v2174 = vrot.slane %v2172, 5
      %v2175 = vor.u32 %v2171, %v2174
      %v2176 = vrot.slane %v2175, 4
      %v2178 = vshll.u32 %v2079, 16
      %v2180 = vrot.slane %v2178, 5
      %v2181 = vsel %vm315, %v2176, %v2180
      %v2182 = vshrl.u32 %v2079, 16
      %v2184 = vrot.slane %v2182, 4
      %v2185 = vor.u32 %v2184, %v2180
      %v2186 = vrot.slane %v2185, 4
      %v2188 = vshll.u32 %v2080, 16
      %v2190 = vrot.slane %v2188, 5
      %v2191 = vsel %vm315, %v2186, %v2190
      %v2193 = vshrl.u32 %v2081, 16
      %v2195 = vrot.slane %v2193, 4
      %v2196 = vshll.u32 %v2081, 16
      %v2198 = vrot.slane %v2196, 5
      %v2199 = vor.u32 %v2195, %v2198
      %v2200 = vrot.slane %v2199, 4
      %v2202 = vshll.u32 %v2082, 16
      %v2204 = vrot.slane %v2202, 5
      %v2205 = vsel %vm315, %v2200, %v2204
      %v2206 = vshrl.u32 %v2082, 16
      %v2208 = vrot.slane %v2206, 4
      %v2209 = vor.u32 %v2208, %v2204
      %v2210 = vrot.slane %v2209, 4
      %v2212 = vshll.u32 %v2083, 16
      %v2214 = vrot.slane %v2212, 5
      %v2215 = vsel %vm315, %v2210, %v2214
      %v2217 = vshrl.u32 %v2084, 16
      %v2219 = vrot.slane %v2217, 4
      %v2220 = vshll.u32 %v2084, 16
      %v2222 = vrot.slane %v2220, 5
      %v2223 = vor.u32 %v2219, %v2222
      %v2224 = vrot.slane %v2223, 4
      %v2226 = vshll.u32 %v2085, 16
      %v2228 = vrot.slane %v2226, 5
      %v2229 = vsel %vm315, %v2224, %v2228
      %v2230 = vshrl.u32 %v2085, 16
      %v2232 = vrot.slane %v2230, 4
      %v2233 = vor.u32 %v2232, %v2228
      %v2234 = vrot.slane %v2233, 4
      %v2236 = vshll.u32 %v2086, 16
      %v2238 = vrot.slane %v2236, 5
      %v2239 = vsel %vm315, %v2234, %v2238
      %v2241 = vshrl.u32 %v2087, 16
      %v2243 = vrot.slane %v2241, 4
      %v2244 = vshll.u32 %v2087, 16
      %v2246 = vrot.slane %v2244, 5
      %v2247 = vor.u32 %v2243, %v2246
      %v2248 = vrot.slane %v2247, 4
      %v2250 = vshll.u32 %v2088, 16
      %v2252 = vrot.slane %v2250, 5
      %v2253 = vsel %vm315, %v2248, %v2252
      %v2254 = vshrl.u32 %v2088, 16
      %v2256 = vrot.slane %v2254, 4
      %v2257 = vor.u32 %v2256, %v2252
      %v2258 = vrot.slane %v2257, 4
      %v2260 = vshll.u32 %v2089, 16
      %v2262 = vrot.slane %v2260, 5
      %v2263 = vsel %vm315, %v2258, %v2262
      %v2265 = vshrl.u32 %v2090, 16
      %v2267 = vrot.slane %v2265, 4
      %v2268 = vshll.u32 %v2090, 16
      %v2270 = vrot.slane %v2268, 5
      %v2271 = vor.u32 %v2267, %v2270
      %v2272 = vrot.slane %v2271, 4
      %v2274 = vshll.u32 %v2091, 16
      %v2276 = vrot.slane %v2274, 5
      %v2277 = vsel %vm315, %v2272, %v2276
      %v2278 = vshrl.u32 %v2091, 16
      %v2280 = vrot.slane %v2278, 4
      %v2281 = vor.u32 %v2280, %v2276
      %v2282 = vrot.slane %v2281, 4
      %v2284 = vshll.u32 %v2092, 16
      %v2286 = vrot.slane %v2284, 5
      %v2287 = vsel %vm315, %v2282, %v2286
      %v2289 = vshrl.u32 %v2093, 16
      %v2291 = vrot.slane %v2289, 4
      %v2292 = vshll.u32 %v2093, 16
      %v2294 = vrot.slane %v2292, 5
      %v2295 = vor.u32 %v2291, %v2294
      %v2296 = vrot.slane %v2295, 4
      %v2298 = vshll.u32 %v2094, 16
      %v2300 = vrot.slane %v2298, 5
      %v2301 = vsel %vm315, %v2296, %v2300
      %v2302 = vshrl.u32 %v2094, 16
      %v2304 = vrot.slane %v2302, 4
      %v2305 = vor.u32 %v2304, %v2300
      %v2306 = vrot.slane %v2305, 4
      %v2308 = vshll.u32 %v2095, 16
      %v2310 = vrot.slane %v2308, 5
      %v2311 = vsel %vm315, %v2306, %v2310
      %v2313 = vshrl.u32 %v2096, 16
      %v2315 = vrot.slane %v2313, 4
      %v2316 = vshll.u32 %v2096, 16
      %v2318 = vrot.slane %v2316, 5
      %v2319 = vor.u32 %v2315, %v2318
      %v2320 = vrot.slane %v2319, 4
      %v2322 = vshll.u32 %v2097, 16
      %v2324 = vrot.slane %v2322, 5
      %v2325 = vsel %vm315, %v2320, %v2324
      %v2326 = vshrl.u32 %v2097, 16
      %v2328 = vrot.slane %v2326, 4
      %v2329 = vor.u32 %v2328, %v2324
      %v2330 = vrot.slane %v2329, 4
      %v2332 = vshll.u32 %v2098, 16
      %v2334 = vrot.slane %v2332, 5
      %v2335 = vsel %vm315, %v2330, %v2334
      %v2337 = vshrl.u32 %v2099, 16
      %v2339 = vrot.slane %v2337, 4
      %v2340 = vshll.u32 %v2099, 16
      %v2342 = vrot.slane %v2340, 5
      %v2343 = vor.u32 %v2339, %v2342
      %v2344 = vrot.slane %v2343, 4
      %v2346 = vshll.u32 %v2100, 16
      %v2348 = vrot.slane %v2346, 5
      %v2349 = vsel %vm315, %v2344, %v2348
      %v2350 = vshrl.u32 %v2100, 16
      %v2352 = vrot.slane %v2350, 4
      %v2353 = vor.u32 %v2352, %v2348
      %v2354 = vrot.slane %v2353, 4
      %v2356 = vshll.u32 %v2101, 16
      %v2358 = vrot.slane %v2356, 5
      %v2359 = vsel %vm315, %v2354, %v2358
      %v2361 = vshrl.u32 %v2102, 16
      %v2363 = vrot.slane %v2361, 4
      %v2364 = vshll.u32 %v2102, 16
      %v2366 = vrot.slane %v2364, 5
      %v2367 = vor.u32 %v2363, %v2366
      %v2368 = vrot.slane %v2367, 4
      %v2370 = vshll.u32 %v2103, 16
      %v2372 = vrot.slane %v2370, 5
      %v2373 = vsel %vm315, %v2368, %v2372
      %v2374 = vshrl.u32 %v2103, 16
      %v2376 = vrot.slane %v2374, 4
      %v2377 = vor.u32 %v2376, %v2372
      %v2378 = vrot.slane %v2377, 4
      %v2380 = vshll.u32 %v2104, 16
      %v2382 = vrot.slane %v2380, 5
      %v2383 = vsel %vm315, %v2378, %v2382
      %v2385 = vshrl.u32 %v2105, 16
      %v2387 = vrot.slane %v2385, 4
      %v2388 = vshll.u32 %v2105, 16
      %v2390 = vrot.slane %v2388, 5
      %v2391 = vor.u32 %v2387, %v2390
      %v2392 = vrot.slane %v2391, 4
      %v2394 = vshll.u32 %v2106, 16
      %v2396 = vrot.slane %v2394, 5
      %v2397 = vsel %vm315, %v2392, %v2396
      %v2398 = vshrl.u32 %v2106, 16
      %v2400 = vrot.slane %v2398, 4
      %v2401 = vor.u32 %v2400, %v2396
      %v2402 = vrot.slane %v2401, 4
      %v2404 = vshll.u32 %v2107, 16
      %v2406 = vrot.slane %v2404, 5
      %v2407 = vsel %vm315, %v2402, %v2406
      %v2409 = vshrl.u32 %v2108, 16
      %v2411 = vrot.slane %v2409, 4
      %v2412 = vshll.u32 %v2108, 16
      %v2414 = vrot.slane %v2412, 5
      %v2415 = vor.u32 %v2411, %v2414
      %v2416 = vrot.slane %v2415, 4
      %v2418 = vshll.u32 %v2109, 16
      %v2420 = vrot.slane %v2418, 5
      %v2421 = vsel %vm315, %v2416, %v2420
      %v2422 = vshrl.u32 %v2109, 16
      %v2424 = vrot.slane %v2422, 4
      %v2425 = vor.u32 %v2424, %v2420
      %v2426 = vrot.slane %v2425, 4
      %v2428 = vshll.u32 %v2110, 16
      %v2430 = vrot.slane %v2428, 5
      %v2431 = vsel %vm315, %v2426, %v2430
      %v2433 = vshrl.u32 %v2111, 16
      %v2435 = vrot.slane %v2433, 4
      %v2436 = vshll.u32 %v2111, 16
      %v2438 = vrot.slane %v2436, 5
      %v2439 = vor.u32 %v2435, %v2438
      %v2440 = vrot.slane %v2439, 4
      %v2442 = vshll.u32 %v2112, 16
      %v2444 = vrot.slane %v2442, 5
      %v2445 = vsel %vm315, %v2440, %v2444
      %v2446 = vshrl.u32 %v2112, 16
      %v2448 = vrot.slane %v2446, 4
      %v2449 = vor.u32 %v2448, %v2444
      %v2450 = vrot.slane %v2449, 4
      %v2452 = vshll.u32 %v2113, 16
      %v2454 = vrot.slane %v2452, 5
      %v2455 = vsel %vm315, %v2450, %v2454
      %v2457 = vshrl.u32 %v2114, 16
      %v2459 = vrot.slane %v2457, 4
      %v2460 = vshll.u32 %v2114, 16
      %v2462 = vrot.slane %v2460, 5
      %v2463 = vor.u32 %v2459, %v2462
      %v2464 = vrot.slane %v2463, 4
      %v2466 = vshll.u32 %v2115, 16
      %v2468 = vrot.slane %v2466, 5
      %v2469 = vsel %vm315, %v2464, %v2468
      %v2470 = vshrl.u32 %v2115, 16
      %v2472 = vrot.slane %v2470, 4
      %v2473 = vor.u32 %v2472, %v2468
      %v2474 = vrot.slane %v2473, 4
      %v2476 = vshll.u32 %v2116, 16
      %v2478 = vrot.slane %v2476, 5
      %v2479 = vsel %vm315, %v2474, %v2478
      %v2481 = vshrl.u32 %v2117, 16
      %v2483 = vrot.slane %v2481, 4
      %v2484 = vshll.u32 %v2117, 16
      %v2486 = vrot.slane %v2484, 5
      %v2487 = vor.u32 %v2483, %v2486
      %v2488 = vrot.slane %v2487, 4
      %v2490 = vshll.u32 %v2118, 16
      %v2492 = vrot.slane %v2490, 5
      %v2493 = vsel %vm315, %v2488, %v2492
      %v2494 = vshrl.u32 %v2118, 16
      %v2496 = vrot.slane %v2494, 4
      %v2497 = vor.u32 %v2496, %v2492
      %v2498 = vrot.slane %v2497, 4
      %v2500 = vshll.u32 %v2119, 16
      %v2502 = vrot.slane %v2500, 5
      %v2503 = vsel %vm315, %v2498, %v2502
      %s2504 = scalar_lea.vmem %s248, 8
      %v2505 = vld [vmem:[%s2504] sm:$0x3]
      %v2506 = vunpack.c.l.b16 %v2133
      %v2507 = vunpack.c.l.b16 %v2143
      %v2508 = vunpack.c.l.b16 %v2157
      %v2509 = vunpack.c.l.b16 %v2167
      %v2510 = vunpack.c.l.b16 %v2181
      %v2511 = vunpack.c.l.b16 %v2191
      %v2512 = vunpack.c.l.b16 %v2205
      %v2513 = vunpack.c.l.b16 %v2215
      %v2514 = vunpack.c.l.b16 %v2229
      %v2515 = vunpack.c.l.b16 %v2239
      %v2516 = vunpack.c.l.b16 %v2253
      %v2517 = vunpack.c.l.b16 %v2263
      %v2518 = vunpack.c.l.b16 %v2277
      %v2519 = vunpack.c.l.b16 %v2287
      %v2520 = vunpack.c.l.b16 %v2301
      %v2521 = vunpack.c.l.b16 %v2311
      %v2522 = vunpack.c.l.b16 %v2325
      %v2523 = vunpack.c.l.b16 %v2335
      %v2524 = vunpack.c.l.b16 %v2349
      %v2525 = vunpack.c.l.b16 %v2359
      %v2526 = vunpack.c.l.b16 %v2373
      %v2527 = vunpack.c.l.b16 %v2383
      %v2528 = vunpack.c.l.b16 %v2397
      %v2529 = vunpack.c.l.b16 %v2407
      %v2530 = vunpack.c.l.b16 %v2421
      %v2531 = vunpack.c.l.b16 %v2431
      %v2532 = vunpack.c.l.b16 %v2445
      %v2533 = vunpack.c.l.b16 %v2455
      %v2534 = vunpack.c.l.b16 %v2469
      %v2535 = vunpack.c.l.b16 %v2479
      %v2536 = vunpack.c.l.b16 %v2493
      %v2537 = vunpack.c.l.b16 %v2503
      %v2538 = vpack.c.b16 %v2507, %v2506
      %v2539 = vpack.c.b16 %v2509, %v2508
      %v2540 = vpack.c.b16 %v2511, %v2510
      %v2541 = vpack.c.b16 %v2513, %v2512
      %v2542 = vpack.c.b16 %v2515, %v2514
      %v2543 = vpack.c.b16 %v2517, %v2516
      %v2544 = vpack.c.b16 %v2519, %v2518
      %v2545 = vpack.c.b16 %v2521, %v2520
      %v2546 = vpack.c.b16 %v2523, %v2522
      %v2547 = vpack.c.b16 %v2525, %v2524
      %v2548 = vpack.c.b16 %v2527, %v2526
      %v2549 = vpack.c.b16 %v2529, %v2528
      %v2550 = vpack.c.b16 %v2531, %v2530
      %v2551 = vpack.c.b16 %v2533, %v2532
      %v2552 = vpack.c.b16 %v2535, %v2534
      %v2553 = vpack.c.b16 %v2537, %v2536
      %v2555 = vsel %vm750, %v2538, 0
      %v2558 = vsel %vm750, %v2539, 0
      %v2561 = vsel %vm750, %v2540, 0
      %v2564 = vsel %vm750, %v2541, 0
      %v2567 = vsel %vm750, %v2542, 0
      %v2570 = vsel %vm750, %v2543, 0
      %v2573 = vsel %vm750, %v2544, 0
      %v2576 = vsel %vm750, %v2545, 0
      %v2579 = vsel %vm750, %v2546, 0
      %v2582 = vsel %vm750, %v2547, 0
      %v2585 = vsel %vm750, %v2548, 0
      %v2588 = vsel %vm750, %v2549, 0
      %v2591 = vsel %vm750, %v2550, 0
      %v2594 = vsel %vm750, %v2551, 0
      %v2597 = vsel %vm750, %v2552, 0
      %v2600 = vsel %vm750, %v2553, 0
      %v2603 = vsel %vm799, %v2505, 0
      %2605 = vmatprep.subr.bf16.mxu0 0
      %2606 = vmatpush1.bf16.msra.mxu0 0
      %2607 = vmatprep.subr.bf16.mxu0 0
      %2608 = vmatpush1.bf16.msra.mxu0 0
      %2609 = vmatprep.subr.bf16.mxu0 0
      %2610 = vmatpush1.bf16.msra.mxu0 0
      %2611 = vmatprep.subr.bf16.mxu0 0
      %2612 = vmatpush1.bf16.msra.mxu0 0
      %2613 = vmatprep.subr.bf16.mxu0 0
      %2614 = vmatpush1.bf16.msra.mxu0 0
      %2615 = vmatprep.subr.bf16.mxu0 0
      %2616 = vmatpush1.bf16.msra.mxu0 0
      %2617 = vmatprep.subr.bf16.mxu0 0
      %2618 = vmatpush1.bf16.msra.mxu0 0
      %2619 = vmatprep.subr.bf16.mxu0 0
      %2620 = vmatpush1.bf16.msra.mxu0 %v2603
      %2621 = vmatprep.subr.bf16.mxu0 0
      %2622 = vmatpush2.bf16.msra.mxu0 0
      %2623 = vmatprep.subr.bf16.mxu0 0
      %2624 = vmatpush2.bf16.msra.mxu0 0
      %2625 = vmatprep.subr.bf16.mxu0 0
      %2626 = vmatpush2.bf16.msra.mxu0 0
      %2627 = vmatprep.subr.bf16.mxu0 0
      %2628 = vmatpush2.bf16.msra.mxu0 0
      %2629 = vmatprep.subr.bf16.mxu0 0
      %2630 = vmatpush2.bf16.msra.mxu0 0
      %2631 = vmatprep.subr.bf16.mxu0 0
      %2632 = vmatpush2.bf16.msra.mxu0 0
      %2633 = vmatprep.subr.bf16.mxu0 0
      %2634 = vmatpush2.bf16.msra.mxu0 0
      %2635 = vmatprep.subr.bf16.mxu0 0
      %2636 = vmatpush2.bf16.msra.mxu0 0
      %2637 = vmatprep.mubr.bf16.mxu0 0
      %2638 = vmatmul.mubr.bf16.gmra.mxu0 %v2555
      %v2639 = vpop.f32.mrf.mxu0
      %v2640 = vadd.f32 0.0, %v2639
      %v2641 = vpop.f32.mrf.mxu0
      %v2642 = vpop.f32.mrf.mxu0
      %v2643 = vadd.f32 0.0, %v2642
      %v2644 = vpop.f32.mrf.mxu0
      %2645 = vmatprep.mubr.bf16.mxu0 0
      %2646 = vmatmul.mubr.bf16.gmra.mxu0 %v2558
      %v2647 = vpop.f32.mrf.mxu0
      %v2648 = vadd.f32 0.0, %v2647
      %v2649 = vpop.f32.mrf.mxu0
      %v2650 = vpop.f32.mrf.mxu0
      %v2651 = vadd.f32 0.0, %v2650
      %v2652 = vpop.f32.mrf.mxu0
      %2653 = vmatprep.mubr.bf16.mxu0 0
      %2654 = vmatmul.mubr.bf16.gmra.mxu0 %v2561
      %v2655 = vpop.f32.mrf.mxu0
      %v2656 = vadd.f32 0.0, %v2655
      %v2657 = vpop.f32.mrf.mxu0
      %v2658 = vpop.f32.mrf.mxu0
      %v2659 = vadd.f32 0.0, %v2658
      %v2660 = vpop.f32.mrf.mxu0
      %2661 = vmatprep.mubr.bf16.mxu0 0
      %2662 = vmatmul.mubr.bf16.gmra.mxu0 %v2564
      %v2663 = vpop.f32.mrf.mxu0
      %v2664 = vadd.f32 0.0, %v2663
      %v2665 = vpop.f32.mrf.mxu0
      %v2666 = vpop.f32.mrf.mxu0
      %v2667 = vadd.f32 0.0, %v2666
      %v2668 = vpop.f32.mrf.mxu0
      %2669 = vmatprep.mubr.bf16.mxu0 0
      %2670 = vmatmul.mubr.bf16.gmra.mxu0 %v2567
      %v2671 = vpop.f32.mrf.mxu0
      %v2672 = vadd.f32 0.0, %v2671
      %v2673 = vpop.f32.mrf.mxu0
      %v2674 = vpop.f32.mrf.mxu0
      %v2675 = vadd.f32 0.0, %v2674
      %v2676 = vpop.f32.mrf.mxu0
      %2677 = vmatprep.mubr.bf16.mxu0 0
      %2678 = vmatmul.mubr.bf16.gmra.mxu0 %v2570
      %v2679 = vpop.f32.mrf.mxu0
      %v2680 = vadd.f32 0.0, %v2679
      %v2681 = vpop.f32.mrf.mxu0
      %v2682 = vpop.f32.mrf.mxu0
      %v2683 = vadd.f32 0.0, %v2682
      %v2684 = vpop.f32.mrf.mxu0
      %2685 = vmatprep.mubr.bf16.mxu0 0
      %2686 = vmatmul.mubr.bf16.gmra.mxu0 %v2573
      %v2687 = vpop.f32.mrf.mxu0
      %v2688 = vadd.f32 0.0, %v2687
      %v2689 = vpop.f32.mrf.mxu0
      %v2690 = vpop.f32.mrf.mxu0
      %v2691 = vadd.f32 0.0, %v2690
      %v2692 = vpop.f32.mrf.mxu0
      %2693 = vmatprep.mubr.bf16.mxu0 0
      %2694 = vmatmul.mubr.bf16.gmra.mxu0 %v2576
      %v2695 = vpop.f32.mrf.mxu0
      %v2696 = vadd.f32 0.0, %v2695
      %v2697 = vpop.f32.mrf.mxu0
      %v2698 = vpop.f32.mrf.mxu0
      %v2699 = vadd.f32 0.0, %v2698
      %v2700 = vpop.f32.mrf.mxu0
      %2701 = vmatprep.mubr.bf16.mxu0 0
      %2702 = vmatmul.mubr.bf16.gmra.mxu0 %v2579
      %v2703 = vpop.f32.mrf.mxu0
      %v2704 = vadd.f32 0.0, %v2703
      %v2705 = vpop.f32.mrf.mxu0
      %v2706 = vpop.f32.mrf.mxu0
      %v2707 = vadd.f32 0.0, %v2706
      %v2708 = vpop.f32.mrf.mxu0
      %2709 = vmatprep.mubr.bf16.mxu0 0
      %2710 = vmatmul.mubr.bf16.gmra.mxu0 %v2582
      %v2711 = vpop.f32.mrf.mxu0
      %v2712 = vadd.f32 0.0, %v2711
      %v2713 = vpop.f32.mrf.mxu0
      %v2714 = vpop.f32.mrf.mxu0
      %v2715 = vadd.f32 0.0, %v2714
      %v2716 = vpop.f32.mrf.mxu0
      %2717 = vmatprep.mubr.bf16.mxu0 0
      %2718 = vmatmul.mubr.bf16.gmra.mxu0 %v2585
      %v2719 = vpop.f32.mrf.mxu0
      %v2720 = vadd.f32 0.0, %v2719
      %v2721 = vpop.f32.mrf.mxu0
      %v2722 = vpop.f32.mrf.mxu0
      %v2723 = vadd.f32 0.0, %v2722
      %v2724 = vpop.f32.mrf.mxu0
      %2725 = vmatprep.mubr.bf16.mxu0 0
      %2726 = vmatmul.mubr.bf16.gmra.mxu0 %v2588
      %v2727 = vpop.f32.mrf.mxu0
      %v2728 = vadd.f32 0.0, %v2727
      %v2729 = vpop.f32.mrf.mxu0
      %v2730 = vpop.f32.mrf.mxu0
      %v2731 = vadd.f32 0.0, %v2730
      %v2732 = vpop.f32.mrf.mxu0
      %2733 = vmatprep.mubr.bf16.mxu0 0
      %2734 = vmatmul.mubr.bf16.gmra.mxu0 %v2591
      %v2735 = vpop.f32.mrf.mxu0
      %v2736 = vadd.f32 0.0, %v2735
      %v2737 = vpop.f32.mrf.mxu0
      %v2738 = vpop.f32.mrf.mxu0
      %v2739 = vadd.f32 0.0, %v2738
      %v2740 = vpop.f32.mrf.mxu0
      %2741 = vmatprep.mubr.bf16.mxu0 0
      %2742 = vmatmul.mubr.bf16.gmra.mxu0 %v2594
      %v2743 = vpop.f32.mrf.mxu0
      %v2744 = vadd.f32 0.0, %v2743
      %v2745 = vpop.f32.mrf.mxu0
      %v2746 = vpop.f32.mrf.mxu0
      %v2747 = vadd.f32 0.0, %v2746
      %v2748 = vpop.f32.mrf.mxu0
      %2749 = vmatprep.mubr.bf16.mxu0 0
      %2750 = vmatmul.mubr.bf16.gmra.mxu0 %v2597
      %v2751 = vpop.f32.mrf.mxu0
      %v2752 = vadd.f32 0.0, %v2751
      %v2753 = vpop.f32.mrf.mxu0
      %v2754 = vpop.f32.mrf.mxu0
      %v2755 = vadd.f32 0.0, %v2754
      %v2756 = vpop.f32.mrf.mxu0
      %2757 = vmatprep.mubr.bf16.mxu0 0
      %2758 = vmatmul.mubr.bf16.gmra.mxu0 %v2600
      %v2759 = vpop.f32.mrf.mxu0
      %v2760 = vadd.f32 0.0, %v2759
      %v2761 = vpop.f32.mrf.mxu0
      %v2762 = vpop.f32.mrf.mxu0
      %v2763 = vadd.f32 0.0, %v2762
      %v2764 = vpop.f32.mrf.mxu0
      %2765 = vdwg.mxu0
      %v2766 = vadd.f32 %v2040, %v2640
      %v2767 = vadd.f32 %v2041, %v2643
      %v2768 = vadd.f32 %v2042, %v2648
      %v2769 = vadd.f32 %v2043, %v2651
      %v2770 = vadd.f32 %v2044, %v2656
      %v2771 = vadd.f32 %v2045, %v2659
      %v2772 = vadd.f32 %v2046, %v2664
      %v2773 = vadd.f32 %v2047, %v2667
      %v2774 = vadd.f32 %v2048, %v2672
      %v2775 = vadd.f32 %v2049, %v2675
      %v2776 = vadd.f32 %v2050, %v2680
      %v2777 = vadd.f32 %v2051, %v2683
      %v2778 = vadd.f32 %v2052, %v2688
      %v2779 = vadd.f32 %v2053, %v2691
      %v2780 = vadd.f32 %v2054, %v2696
      %v2781 = vadd.f32 %v2055, %v2699
      %v2782 = vadd.f32 %v2056, %v2704
      %v2783 = vadd.f32 %v2057, %v2707
      %v2784 = vadd.f32 %v2058, %v2712
      %v2785 = vadd.f32 %v2059, %v2715
      %v2786 = vadd.f32 %v2060, %v2720
      %v2787 = vadd.f32 %v2061, %v2723
      %v2788 = vadd.f32 %v2062, %v2728
      %v2789 = vadd.f32 %v2063, %v2731
      %v2790 = vadd.f32 %v2064, %v2736
      %v2791 = vadd.f32 %v2065, %v2739
      %v2792 = vadd.f32 %v2066, %v2744
      %v2793 = vadd.f32 %v2067, %v2747
      %v2794 = vadd.f32 %v2068, %v2752
      %v2795 = vadd.f32 %v2069, %v2755
      %v2796 = vadd.f32 %v2070, %v2760
      %v2797 = vadd.f32 %v2071, %v2763
      %v2798 = vld [vmem:[%s1713] sm:$0xe]
      %v2799 = vld [vmem:[%s1713 + $0xc] sm:$0xe]
      %v2800 = vld [vmem:[%s1713 + $0x18] sm:$0xe]
      %v2801 = vld [vmem:[%s1713 + $0x24] sm:$0xe]
      %v2802 = vld [vmem:[%s1713 + $0x30] sm:$0xe]
      %v2803 = vld [vmem:[%s1713 + $0x3c] sm:$0xe]
      %v2804 = vld [vmem:[%s1713 + $0x48] sm:$0xe]
      %v2805 = vld [vmem:[%s1713 + $0x54] sm:$0xe]
      %v2806 = vld [vmem:[%s1713 + $0x60] sm:$0xe]
      %v2807 = vld [vmem:[%s1713 + $0x6c] sm:$0xe]
      %v2808 = vld [vmem:[%s1713 + $0x78] sm:$0xe]
      %v2809 = vld [vmem:[%s1713 + $0x84] sm:$0xe]
      %v2810 = vld [vmem:[%s1713 + $0x90] sm:$0xe]
      %v2811 = vld [vmem:[%s1713 + $0x9c] sm:$0xe]
      %v2812 = vld [vmem:[%s1713 + $0xa8] sm:$0xe]
      %v2813 = vld [vmem:[%s1713 + $0xb4] sm:$0xe]
      %v2862 = vrot.slane %v2798, 5
      %v2863 = vrot.slane %v2862, 4
      %v2864 = vrot.slane %v2073, 5
      %v2865 = vsel %vm1306, %v2863, %v2864
      %v2866 = vrot.slane %v2864, 4
      %v2867 = vrot.slane %v2074, 5
      %v2868 = vsel %vm1306, %v2866, %v2867
      %v2869 = vrot.slane %v2799, 5
      %v2870 = vrot.slane %v2869, 4
      %v2871 = vrot.slane %v2076, 5
      %v2872 = vsel %vm1306, %v2870, %v2871
      %v2873 = vrot.slane %v2871, 4
      %v2874 = vrot.slane %v2077, 5
      %v2875 = vsel %vm1306, %v2873, %v2874
      %v2876 = vrot.slane %v2800, 5
      %v2877 = vrot.slane %v2876, 4
      %v2878 = vrot.slane %v2079, 5
      %v2879 = vsel %vm1306, %v2877, %v2878
      %v2880 = vrot.slane %v2878, 4
      %v2881 = vrot.slane %v2080, 5
      %v2882 = vsel %vm1306, %v2880, %v2881
      %v2883 = vrot.slane %v2801, 5
      %v2884 = vrot.slane %v2883, 4
      %v2885 = vrot.slane %v2082, 5
      %v2886 = vsel %vm1306, %v2884, %v2885
      %v2887 = vrot.slane %v2885, 4
      %v2888 = vrot.slane %v2083, 5
      %v2889 = vsel %vm1306, %v2887, %v2888
      %v2890 = vrot.slane %v2802, 5
      %v2891 = vrot.slane %v2890, 4
      %v2892 = vrot.slane %v2085, 5
      %v2893 = vsel %vm1306, %v2891, %v2892
      %v2894 = vrot.slane %v2892, 4
      %v2895 = vrot.slane %v2086, 5
      %v2896 = vsel %vm1306, %v2894, %v2895
      %v2897 = vrot.slane %v2803, 5
      %v2898 = vrot.slane %v2897, 4
      %v2899 = vrot.slane %v2088, 5
      %v2900 = vsel %vm1306, %v2898, %v2899
      %v2901 = vrot.slane %v2899, 4
      %v2902 = vrot.slane %v2089, 5
      %v2903 = vsel %vm1306, %v2901, %v2902
      %v2904 = vrot.slane %v2804, 5
      %v2905 = vrot.slane %v2904, 4
      %v2906 = vrot.slane %v2091, 5
      %v2907 = vsel %vm1306, %v2905, %v2906
      %v2908 = vrot.slane %v2906, 4
      %v2909 = vrot.slane %v2092, 5
      %v2910 = vsel %vm1306, %v2908, %v2909
      %v2911 = vrot.slane %v2805, 5
      %v2912 = vrot.slane %v2911, 4
      %v2913 = vrot.slane %v2094, 5
      %v2914 = vsel %vm1306, %v2912, %v2913
      %v2915 = vrot.slane %v2913, 4
      %v2916 = vrot.slane %v2095, 5
      %v2917 = vsel %vm1306, %v2915, %v2916
      %v2918 = vrot.slane %v2806, 5
      %v2919 = vrot.slane %v2918, 4
      %v2920 = vrot.slane %v2097, 5
      %v2921 = vsel %vm1306, %v2919, %v2920
      %v2922 = vrot.slane %v2920, 4
      %v2923 = vrot.slane %v2098, 5
      %v2924 = vsel %vm1306, %v2922, %v2923
      %v2925 = vrot.slane %v2807, 5
      %v2926 = vrot.slane %v2925, 4
      %v2927 = vrot.slane %v2100, 5
      %v2928 = vsel %vm1306, %v2926, %v2927
      %v2929 = vrot.slane %v2927, 4
      %v2930 = vrot.slane %v2101, 5
      %v2931 = vsel %vm1306, %v2929, %v2930
      %v2932 = vrot.slane %v2808, 5
      %v2933 = vrot.slane %v2932, 4
      %v2934 = vrot.slane %v2103, 5
      %v2935 = vsel %vm1306, %v2933, %v2934
      %v2936 = vrot.slane %v2934, 4
      %v2937 = vrot.slane %v2104, 5
      %v2938 = vsel %vm1306, %v2936, %v2937
      %v2939 = vrot.slane %v2809, 5
      %v2940 = vrot.slane %v2939, 4
      %v2941 = vrot.slane %v2106, 5
      %v2942 = vsel %vm1306, %v2940, %v2941
      %v2943 = vrot.slane %v2941, 4
      %v2944 = vrot.slane %v2107, 5
      %v2945 = vsel %vm1306, %v2943, %v2944
      %v2946 = vrot.slane %v2810, 5
      %v2947 = vrot.slane %v2946, 4
      %v2948 = vrot.slane %v2109, 5
      %v2949 = vsel %vm1306, %v2947, %v2948
      %v2950 = vrot.slane %v2948, 4
      %v2951 = vrot.slane %v2110, 5
      %v2952 = vsel %vm1306, %v2950, %v2951
      %v2953 = vrot.slane %v2811, 5
      %v2954 = vrot.slane %v2953, 4
      %v2955 = vrot.slane %v2112, 5
      %v2956 = vsel %vm1306, %v2954, %v2955
      %v2957 = vrot.slane %v2955, 4
      %v2958 = vrot.slane %v2113, 5
      %v2959 = vsel %vm1306, %v2957, %v2958
      %v2960 = vrot.slane %v2812, 5
      %v2961 = vrot.slane %v2960, 4
      %v2962 = vrot.slane %v2115, 5
      %v2963 = vsel %vm1306, %v2961, %v2962
      %v2964 = vrot.slane %v2962, 4
      %v2965 = vrot.slane %v2116, 5
      %v2966 = vsel %vm1306, %v2964, %v2965
      %v2967 = vrot.slane %v2813, 5
      %v2968 = vrot.slane %v2967, 4
      %v2969 = vrot.slane %v2118, 5
      %v2970 = vsel %vm1306, %v2968, %v2969
      %v2971 = vrot.slane %v2969, 4
      %v2972 = vrot.slane %v2119, 5
      %v2973 = vsel %vm1306, %v2971, %v2972
      %s2974 = scalar_lea.vmem %s248, 10
      %v2975 = vld [vmem:[%s2974] sm:$0x3]
      %v2976 = vunpack.c.l.b16 %v2865
      %v2977 = vunpack.c.l.b16 %v2868
      %v2978 = vunpack.c.l.b16 %v2872
      %v2979 = vunpack.c.l.b16 %v2875
      %v2980 = vunpack.c.l.b16 %v2879
      %v2981 = vunpack.c.l.b16 %v2882
      %v2982 = vunpack.c.l.b16 %v2886
      %v2983 = vunpack.c.l.b16 %v2889
      %v2984 = vunpack.c.l.b16 %v2893
      %v2985 = vunpack.c.l.b16 %v2896
      %v2986 = vunpack.c.l.b16 %v2900
      %v2987 = vunpack.c.l.b16 %v2903
      %v2988 = vunpack.c.l.b16 %v2907
      %v2989 = vunpack.c.l.b16 %v2910
      %v2990 = vunpack.c.l.b16 %v2914
      %v2991 = vunpack.c.l.b16 %v2917
      %v2992 = vunpack.c.l.b16 %v2921
      %v2993 = vunpack.c.l.b16 %v2924
      %v2994 = vunpack.c.l.b16 %v2928
      %v2995 = vunpack.c.l.b16 %v2931
      %v2996 = vunpack.c.l.b16 %v2935
      %v2997 = vunpack.c.l.b16 %v2938
      %v2998 = vunpack.c.l.b16 %v2942
      %v2999 = vunpack.c.l.b16 %v2945
      %v3000 = vunpack.c.l.b16 %v2949
      %v3001 = vunpack.c.l.b16 %v2952
      %v3002 = vunpack.c.l.b16 %v2956
      %v3003 = vunpack.c.l.b16 %v2959
      %v3004 = vunpack.c.l.b16 %v2963
      %v3005 = vunpack.c.l.b16 %v2966
      %v3006 = vunpack.c.l.b16 %v2970
      %v3007 = vunpack.c.l.b16 %v2973
      %v3008 = vpack.c.b16 %v2977, %v2976
      %v3009 = vpack.c.b16 %v2979, %v2978
      %v3010 = vpack.c.b16 %v2981, %v2980
      %v3011 = vpack.c.b16 %v2983, %v2982
      %v3012 = vpack.c.b16 %v2985, %v2984
      %v3013 = vpack.c.b16 %v2987, %v2986
      %v3014 = vpack.c.b16 %v2989, %v2988
      %v3015 = vpack.c.b16 %v2991, %v2990
      %v3016 = vpack.c.b16 %v2993, %v2992
      %v3017 = vpack.c.b16 %v2995, %v2994
      %v3018 = vpack.c.b16 %v2997, %v2996
      %v3019 = vpack.c.b16 %v2999, %v2998
      %v3020 = vpack.c.b16 %v3001, %v3000
      %v3021 = vpack.c.b16 %v3003, %v3002
      %v3022 = vpack.c.b16 %v3005, %v3004
      %v3023 = vpack.c.b16 %v3007, %v3006
      %v3025 = vsel %vm750, %v3008, 0
      %v3028 = vsel %vm750, %v3009, 0
      %v3031 = vsel %vm750, %v3010, 0
      %v3034 = vsel %vm750, %v3011, 0
      %v3037 = vsel %vm750, %v3012, 0
      %v3040 = vsel %vm750, %v3013, 0
      %v3043 = vsel %vm750, %v3014, 0
      %v3046 = vsel %vm750, %v3015, 0
      %v3049 = vsel %vm750, %v3016, 0
      %v3052 = vsel %vm750, %v3017, 0
      %v3055 = vsel %vm750, %v3018, 0
      %v3058 = vsel %vm750, %v3019, 0
      %v3061 = vsel %vm750, %v3020, 0
      %v3064 = vsel %vm750, %v3021, 0
      %v3067 = vsel %vm750, %v3022, 0
      %v3070 = vsel %vm750, %v3023, 0
      %v3073 = vsel %vm799, %v2975, 0
      %3075 = vmatprep.subr.bf16.mxu0 0
      %3076 = vmatpush1.bf16.msra.mxu0 0
      %3077 = vmatprep.subr.bf16.mxu0 0
      %3078 = vmatpush1.bf16.msra.mxu0 0
      %3079 = vmatprep.subr.bf16.mxu0 0
      %3080 = vmatpush1.bf16.msra.mxu0 0
      %3081 = vmatprep.subr.bf16.mxu0 0
      %3082 = vmatpush1.bf16.msra.mxu0 0
      %3083 = vmatprep.subr.bf16.mxu0 0
      %3084 = vmatpush1.bf16.msra.mxu0 0
      %3085 = vmatprep.subr.bf16.mxu0 0
      %3086 = vmatpush1.bf16.msra.mxu0 0
      %3087 = vmatprep.subr.bf16.mxu0 0
      %3088 = vmatpush1.bf16.msra.mxu0 0
      %3089 = vmatprep.subr.bf16.mxu0 0
      %3090 = vmatpush1.bf16.msra.mxu0 %v3073
      %3091 = vmatprep.subr.bf16.mxu0 0
      %3092 = vmatpush2.bf16.msra.mxu0 0
      %3093 = vmatprep.subr.bf16.mxu0 0
      %3094 = vmatpush2.bf16.msra.mxu0 0
      %3095 = vmatprep.subr.bf16.mxu0 0
      %3096 = vmatpush2.bf16.msra.mxu0 0
      %3097 = vmatprep.subr.bf16.mxu0 0
      %3098 = vmatpush2.bf16.msra.mxu0 0
      %3099 = vmatprep.subr.bf16.mxu0 0
      %3100 = vmatpush2.bf16.msra.mxu0 0
      %3101 = vmatprep.subr.bf16.mxu0 0
      %3102 = vmatpush2.bf16.msra.mxu0 0
      %3103 = vmatprep.subr.bf16.mxu0 0
      %3104 = vmatpush2.bf16.msra.mxu0 0
      %3105 = vmatprep.subr.bf16.mxu0 0
      %3106 = vmatpush2.bf16.msra.mxu0 0
      %3107 = vmatprep.mubr.bf16.mxu0 0
      %3108 = vmatmul.mubr.bf16.gmra.mxu0 %v3025
      %v3109 = vpop.f32.mrf.mxu0
      %v3110 = vadd.f32 0.0, %v3109
      %v3111 = vpop.f32.mrf.mxu0
      %v3112 = vpop.f32.mrf.mxu0
      %v3113 = vadd.f32 0.0, %v3112
      %v3114 = vpop.f32.mrf.mxu0
      %3115 = vmatprep.mubr.bf16.mxu0 0
      %3116 = vmatmul.mubr.bf16.gmra.mxu0 %v3028
      %v3117 = vpop.f32.mrf.mxu0
      %v3118 = vadd.f32 0.0, %v3117
      %v3119 = vpop.f32.mrf.mxu0
      %v3120 = vpop.f32.mrf.mxu0
      %v3121 = vadd.f32 0.0, %v3120
      %v3122 = vpop.f32.mrf.mxu0
      %3123 = vmatprep.mubr.bf16.mxu0 0
      %3124 = vmatmul.mubr.bf16.gmra.mxu0 %v3031
      %v3125 = vpop.f32.mrf.mxu0
      %v3126 = vadd.f32 0.0, %v3125
      %v3127 = vpop.f32.mrf.mxu0
      %v3128 = vpop.f32.mrf.mxu0
      %v3129 = vadd.f32 0.0, %v3128
      %v3130 = vpop.f32.mrf.mxu0
      %3131 = vmatprep.mubr.bf16.mxu0 0
      %3132 = vmatmul.mubr.bf16.gmra.mxu0 %v3034
      %v3133 = vpop.f32.mrf.mxu0
      %v3134 = vadd.f32 0.0, %v3133
      %v3135 = vpop.f32.mrf.mxu0
      %v3136 = vpop.f32.mrf.mxu0
      %v3137 = vadd.f32 0.0, %v3136
      %v3138 = vpop.f32.mrf.mxu0
      %3139 = vmatprep.mubr.bf16.mxu0 0
      %3140 = vmatmul.mubr.bf16.gmra.mxu0 %v3037
      %v3141 = vpop.f32.mrf.mxu0
      %v3142 = vadd.f32 0.0, %v3141
      %v3143 = vpop.f32.mrf.mxu0
      %v3144 = vpop.f32.mrf.mxu0
      %v3145 = vadd.f32 0.0, %v3144
      %v3146 = vpop.f32.mrf.mxu0
      %3147 = vmatprep.mubr.bf16.mxu0 0
      %3148 = vmatmul.mubr.bf16.gmra.mxu0 %v3040
      %v3149 = vpop.f32.mrf.mxu0
      %v3150 = vadd.f32 0.0, %v3149
      %v3151 = vpop.f32.mrf.mxu0
      %v3152 = vpop.f32.mrf.mxu0
      %v3153 = vadd.f32 0.0, %v3152
      %v3154 = vpop.f32.mrf.mxu0
      %3155 = vmatprep.mubr.bf16.mxu0 0
      %3156 = vmatmul.mubr.bf16.gmra.mxu0 %v3043
      %v3157 = vpop.f32.mrf.mxu0
      %v3158 = vadd.f32 0.0, %v3157
      %v3159 = vpop.f32.mrf.mxu0
      %v3160 = vpop.f32.mrf.mxu0
      %v3161 = vadd.f32 0.0, %v3160
      %v3162 = vpop.f32.mrf.mxu0
      %3163 = vmatprep.mubr.bf16.mxu0 0
      %3164 = vmatmul.mubr.bf16.gmra.mxu0 %v3046
      %v3165 = vpop.f32.mrf.mxu0
      %v3166 = vadd.f32 0.0, %v3165
      %v3167 = vpop.f32.mrf.mxu0
      %v3168 = vpop.f32.mrf.mxu0
      %v3169 = vadd.f32 0.0, %v3168
      %v3170 = vpop.f32.mrf.mxu0
      %3171 = vmatprep.mubr.bf16.mxu0 0
      %3172 = vmatmul.mubr.bf16.gmra.mxu0 %v3049
      %v3173 = vpop.f32.mrf.mxu0
      %v3174 = vadd.f32 0.0, %v3173
      %v3175 = vpop.f32.mrf.mxu0
      %v3176 = vpop.f32.mrf.mxu0
      %v3177 = vadd.f32 0.0, %v3176
      %v3178 = vpop.f32.mrf.mxu0
      %3179 = vmatprep.mubr.bf16.mxu0 0
      %3180 = vmatmul.mubr.bf16.gmra.mxu0 %v3052
      %v3181 = vpop.f32.mrf.mxu0
      %v3182 = vadd.f32 0.0, %v3181
      %v3183 = vpop.f32.mrf.mxu0
      %v3184 = vpop.f32.mrf.mxu0
      %v3185 = vadd.f32 0.0, %v3184
      %v3186 = vpop.f32.mrf.mxu0
      %3187 = vmatprep.mubr.bf16.mxu0 0
      %3188 = vmatmul.mubr.bf16.gmra.mxu0 %v3055
      %v3189 = vpop.f32.mrf.mxu0
      %v3190 = vadd.f32 0.0, %v3189
      %v3191 = vpop.f32.mrf.mxu0
      %v3192 = vpop.f32.mrf.mxu0
      %v3193 = vadd.f32 0.0, %v3192
      %v3194 = vpop.f32.mrf.mxu0
      %3195 = vmatprep.mubr.bf16.mxu0 0
      %3196 = vmatmul.mubr.bf16.gmra.mxu0 %v3058
      %v3197 = vpop.f32.mrf.mxu0
      %v3198 = vadd.f32 0.0, %v3197
      %v3199 = vpop.f32.mrf.mxu0
      %v3200 = vpop.f32.mrf.mxu0
      %v3201 = vadd.f32 0.0, %v3200
      %v3202 = vpop.f32.mrf.mxu0
      %3203 = vmatprep.mubr.bf16.mxu0 0
      %3204 = vmatmul.mubr.bf16.gmra.mxu0 %v3061
      %v3205 = vpop.f32.mrf.mxu0
      %v3206 = vadd.f32 0.0, %v3205
      %v3207 = vpop.f32.mrf.mxu0
      %v3208 = vpop.f32.mrf.mxu0
      %v3209 = vadd.f32 0.0, %v3208
      %v3210 = vpop.f32.mrf.mxu0
      %3211 = vmatprep.mubr.bf16.mxu0 0
      %3212 = vmatmul.mubr.bf16.gmra.mxu0 %v3064
      %v3213 = vpop.f32.mrf.mxu0
      %v3214 = vadd.f32 0.0, %v3213
      %v3215 = vpop.f32.mrf.mxu0
      %v3216 = vpop.f32.mrf.mxu0
      %v3217 = vadd.f32 0.0, %v3216
      %v3218 = vpop.f32.mrf.mxu0
      %3219 = vmatprep.mubr.bf16.mxu0 0
      %3220 = vmatmul.mubr.bf16.gmra.mxu0 %v3067
      %v3221 = vpop.f32.mrf.mxu0
      %v3222 = vadd.f32 0.0, %v3221
      %v3223 = vpop.f32.mrf.mxu0
      %v3224 = vpop.f32.mrf.mxu0
      %v3225 = vadd.f32 0.0, %v3224
      %v3226 = vpop.f32.mrf.mxu0
      %3227 = vmatprep.mubr.bf16.mxu0 0
      %3228 = vmatmul.mubr.bf16.gmra.mxu0 %v3070
      %v3229 = vpop.f32.mrf.mxu0
      %v3230 = vadd.f32 0.0, %v3229
      %v3231 = vpop.f32.mrf.mxu0
      %v3232 = vpop.f32.mrf.mxu0
      %v3233 = vadd.f32 0.0, %v3232
      %v3234 = vpop.f32.mrf.mxu0
      %3235 = vdwg.mxu0
      %v3236 = vadd.f32 %v2766, %v3110
      %v3237 = vadd.f32 %v2767, %v3113
      %v3238 = vadd.f32 %v2768, %v3118
      %v3239 = vadd.f32 %v2769, %v3121
      %v3240 = vadd.f32 %v2770, %v3126
      %v3241 = vadd.f32 %v2771, %v3129
      %v3242 = vadd.f32 %v2772, %v3134
      %v3243 = vadd.f32 %v2773, %v3137
      %v3244 = vadd.f32 %v2774, %v3142
      %v3245 = vadd.f32 %v2775, %v3145
      %v3246 = vadd.f32 %v2776, %v3150
      %v3247 = vadd.f32 %v2777, %v3153
      %v3248 = vadd.f32 %v2778, %v3158
      %v3249 = vadd.f32 %v2779, %v3161
      %v3250 = vadd.f32 %v2780, %v3166
      %v3251 = vadd.f32 %v2781, %v3169
      %v3252 = vadd.f32 %v2782, %v3174
      %v3253 = vadd.f32 %v2783, %v3177
      %v3254 = vadd.f32 %v2784, %v3182
      %v3255 = vadd.f32 %v2785, %v3185
      %v3256 = vadd.f32 %v2786, %v3190
      %v3257 = vadd.f32 %v2787, %v3193
      %v3258 = vadd.f32 %v2788, %v3198
      %v3259 = vadd.f32 %v2789, %v3201
      %v3260 = vadd.f32 %v2790, %v3206
      %v3261 = vadd.f32 %v2791, %v3209
      %v3262 = vadd.f32 %v2792, %v3214
      %v3263 = vadd.f32 %v2793, %v3217
      %v3264 = vadd.f32 %v2794, %v3222
      %v3265 = vadd.f32 %v2795, %v3225
      %v3266 = vadd.f32 %v2796, %v3230
      %v3267 = vadd.f32 %v2797, %v3233
      %s3268 = scalar_lea.vmem %s244, 24
      %v3269 = vld [vmem:[%s3268] sm:$0xf]
      %v3270 = vld [vmem:[%s3268 + $0x4] sm:$0xf]
      %v3271 = vld [vmem:[%s3268 + $0xc] sm:$0xf]
      %v3272 = vld [vmem:[%s3268 + $0x10] sm:$0xf]
      %v3273 = vld [vmem:[%s3268 + $0x18] sm:$0xf]
      %v3274 = vld [vmem:[%s3268 + $0x1c] sm:$0xf]
      %v3275 = vld [vmem:[%s3268 + $0x24] sm:$0xf]
      %v3276 = vld [vmem:[%s3268 + $0x28] sm:$0xf]
      %v3277 = vld [vmem:[%s3268 + $0x30] sm:$0xf]
      %v3278 = vld [vmem:[%s3268 + $0x34] sm:$0xf]
      %v3279 = vld [vmem:[%s3268 + $0x3c] sm:$0xf]
      %v3280 = vld [vmem:[%s3268 + $0x40] sm:$0xf]
      %v3281 = vld [vmem:[%s3268 + $0x48] sm:$0xf]
      %v3282 = vld [vmem:[%s3268 + $0x4c] sm:$0xf]
      %v3283 = vld [vmem:[%s3268 + $0x54] sm:$0xf]
      %v3284 = vld [vmem:[%s3268 + $0x58] sm:$0xf]
      %v3285 = vld [vmem:[%s3268 + $0x60] sm:$0xf]
      %v3286 = vld [vmem:[%s3268 + $0x64] sm:$0xf]
      %v3287 = vld [vmem:[%s3268 + $0x6c] sm:$0xf]
      %v3288 = vld [vmem:[%s3268 + $0x70] sm:$0xf]
      %v3289 = vld [vmem:[%s3268 + $0x78] sm:$0xf]
      %v3290 = vld [vmem:[%s3268 + $0x7c] sm:$0xf]
      %v3291 = vld [vmem:[%s3268 + $0x84] sm:$0xf]
      %v3292 = vld [vmem:[%s3268 + $0x88] sm:$0xf]
      %v3293 = vld [vmem:[%s3268 + $0x90] sm:$0xf]
      %v3294 = vld [vmem:[%s3268 + $0x94] sm:$0xf]
      %v3295 = vld [vmem:[%s3268 + $0x9c] sm:$0xf]
      %v3296 = vld [vmem:[%s3268 + $0xa0] sm:$0xf]
      %v3297 = vld [vmem:[%s3268 + $0xa8] sm:$0xf]
      %v3298 = vld [vmem:[%s3268 + $0xac] sm:$0xf]
      %v3299 = vld [vmem:[%s3268 + $0xb4] sm:$0xf]
      %v3300 = vld [vmem:[%s3268 + $0xb8] sm:$0xf]
      %s3301 = scalar_lea.vmem %s248, 12
      %v3302 = vld [vmem:[%s3301] sm:$0x3]
      %v3335 = vunpack.c.l.b16 %v3269
      %v3336 = vunpack.c.l.b16 %v3270
      %v3337 = vunpack.c.l.b16 %v3271
      %v3338 = vunpack.c.l.b16 %v3272
      %v3339 = vunpack.c.l.b16 %v3273
      %v3340 = vunpack.c.l.b16 %v3274
      %v3341 = vunpack.c.l.b16 %v3275
      %v3342 = vunpack.c.l.b16 %v3276
      %v3343 = vunpack.c.l.b16 %v3277
      %v3344 = vunpack.c.l.b16 %v3278
      %v3345 = vunpack.c.l.b16 %v3279
      %v3346 = vunpack.c.l.b16 %v3280
      %v3347 = vunpack.c.l.b16 %v3281
      %v3348 = vunpack.c.l.b16 %v3282
      %v3349 = vunpack.c.l.b16 %v3283
      %v3350 = vunpack.c.l.b16 %v3284
      %v3351 = vunpack.c.l.b16 %v3285
      %v3352 = vunpack.c.l.b16 %v3286
      %v3353 = vunpack.c.l.b16 %v3287
      %v3354 = vunpack.c.l.b16 %v3288
      %v3355 = vunpack.c.l.b16 %v3289
      %v3356 = vunpack.c.l.b16 %v3290
      %v3357 = vunpack.c.l.b16 %v3291
      %v3358 = vunpack.c.l.b16 %v3292
      %v3359 = vunpack.c.l.b16 %v3293
      %v3360 = vunpack.c.l.b16 %v3294
      %v3361 = vunpack.c.l.b16 %v3295
      %v3362 = vunpack.c.l.b16 %v3296
      %v3363 = vunpack.c.l.b16 %v3297
      %v3364 = vunpack.c.l.b16 %v3298
      %v3365 = vunpack.c.l.b16 %v3299
      %v3366 = vunpack.c.l.b16 %v3300
      %v3367 = vpack.c.b16 %v3336, %v3335
      %v3368 = vpack.c.b16 %v3338, %v3337
      %v3369 = vpack.c.b16 %v3340, %v3339
      %v3370 = vpack.c.b16 %v3342, %v3341
      %v3371 = vpack.c.b16 %v3344, %v3343
      %v3372 = vpack.c.b16 %v3346, %v3345
      %v3373 = vpack.c.b16 %v3348, %v3347
      %v3374 = vpack.c.b16 %v3350, %v3349
      %v3375 = vpack.c.b16 %v3352, %v3351
      %v3376 = vpack.c.b16 %v3354, %v3353
      %v3377 = vpack.c.b16 %v3356, %v3355
      %v3378 = vpack.c.b16 %v3358, %v3357
      %v3379 = vpack.c.b16 %v3360, %v3359
      %v3380 = vpack.c.b16 %v3362, %v3361
      %v3381 = vpack.c.b16 %v3364, %v3363
      %v3382 = vpack.c.b16 %v3366, %v3365
      %v3384 = vsel %vm750, %v3367, 0
      %v3387 = vsel %vm750, %v3368, 0
      %v3390 = vsel %vm750, %v3369, 0
      %v3393 = vsel %vm750, %v3370, 0
      %v3396 = vsel %vm750, %v3371, 0
      %v3399 = vsel %vm750, %v3372, 0
      %v3402 = vsel %vm750, %v3373, 0
      %v3405 = vsel %vm750, %v3374, 0
      %v3408 = vsel %vm750, %v3375, 0
      %v3411 = vsel %vm750, %v3376, 0
      %v3414 = vsel %vm750, %v3377, 0
      %v3417 = vsel %vm750, %v3378, 0
      %v3420 = vsel %vm750, %v3379, 0
      %v3423 = vsel %vm750, %v3380, 0
      %v3426 = vsel %vm750, %v3381, 0
      %v3429 = vsel %vm750, %v3382, 0
      %v3432 = vsel %vm799, %v3302, 0
      %3434 = vmatprep.subr.bf16.mxu0 0
      %3435 = vmatpush1.bf16.msra.mxu0 0
      %3436 = vmatprep.subr.bf16.mxu0 0
      %3437 = vmatpush1.bf16.msra.mxu0 0
      %3438 = vmatprep.subr.bf16.mxu0 0
      %3439 = vmatpush1.bf16.msra.mxu0 0
      %3440 = vmatprep.subr.bf16.mxu0 0
      %3441 = vmatpush1.bf16.msra.mxu0 0
      %3442 = vmatprep.subr.bf16.mxu0 0
      %3443 = vmatpush1.bf16.msra.mxu0 0
      %3444 = vmatprep.subr.bf16.mxu0 0
      %3445 = vmatpush1.bf16.msra.mxu0 0
      %3446 = vmatprep.subr.bf16.mxu0 0
      %3447 = vmatpush1.bf16.msra.mxu0 0
      %3448 = vmatprep.subr.bf16.mxu0 0
      %3449 = vmatpush1.bf16.msra.mxu0 %v3432
      %3450 = vmatprep.subr.bf16.mxu0 0
      %3451 = vmatpush2.bf16.msra.mxu0 0
      %3452 = vmatprep.subr.bf16.mxu0 0
      %3453 = vmatpush2.bf16.msra.mxu0 0
      %3454 = vmatprep.subr.bf16.mxu0 0
      %3455 = vmatpush2.bf16.msra.mxu0 0
      %3456 = vmatprep.subr.bf16.mxu0 0
      %3457 = vmatpush2.bf16.msra.mxu0 0
      %3458 = vmatprep.subr.bf16.mxu0 0
      %3459 = vmatpush2.bf16.msra.mxu0 0
      %3460 = vmatprep.subr.bf16.mxu0 0
      %3461 = vmatpush2.bf16.msra.mxu0 0
      %3462 = vmatprep.subr.bf16.mxu0 0
      %3463 = vmatpush2.bf16.msra.mxu0 0
      %3464 = vmatprep.subr.bf16.mxu0 0
      %3465 = vmatpush2.bf16.msra.mxu0 0
      %3466 = vmatprep.mubr.bf16.mxu0 0
      %3467 = vmatmul.mubr.bf16.gmra.mxu0 %v3384
      %v3468 = vpop.f32.mrf.mxu0
      %v3469 = vadd.f32 0.0, %v3468
      %v3470 = vpop.f32.mrf.mxu0
      %v3471 = vpop.f32.mrf.mxu0
      %v3472 = vadd.f32 0.0, %v3471
      %v3473 = vpop.f32.mrf.mxu0
      %3474 = vmatprep.mubr.bf16.mxu0 0
      %3475 = vmatmul.mubr.bf16.gmra.mxu0 %v3387
      %v3476 = vpop.f32.mrf.mxu0
      %v3477 = vadd.f32 0.0, %v3476
      %v3478 = vpop.f32.mrf.mxu0
      %v3479 = vpop.f32.mrf.mxu0
      %v3480 = vadd.f32 0.0, %v3479
      %v3481 = vpop.f32.mrf.mxu0
      %3482 = vmatprep.mubr.bf16.mxu0 0
      %3483 = vmatmul.mubr.bf16.gmra.mxu0 %v3390
      %v3484 = vpop.f32.mrf.mxu0
      %v3485 = vadd.f32 0.0, %v3484
      %v3486 = vpop.f32.mrf.mxu0
      %v3487 = vpop.f32.mrf.mxu0
      %v3488 = vadd.f32 0.0, %v3487
      %v3489 = vpop.f32.mrf.mxu0
      %3490 = vmatprep.mubr.bf16.mxu0 0
      %3491 = vmatmul.mubr.bf16.gmra.mxu0 %v3393
      %v3492 = vpop.f32.mrf.mxu0
      %v3493 = vadd.f32 0.0, %v3492
      %v3494 = vpop.f32.mrf.mxu0
      %v3495 = vpop.f32.mrf.mxu0
      %v3496 = vadd.f32 0.0, %v3495
      %v3497 = vpop.f32.mrf.mxu0
      %3498 = vmatprep.mubr.bf16.mxu0 0
      %3499 = vmatmul.mubr.bf16.gmra.mxu0 %v3396
      %v3500 = vpop.f32.mrf.mxu0
      %v3501 = vadd.f32 0.0, %v3500
      %v3502 = vpop.f32.mrf.mxu0
      %v3503 = vpop.f32.mrf.mxu0
      %v3504 = vadd.f32 0.0, %v3503
      %v3505 = vpop.f32.mrf.mxu0
      %3506 = vmatprep.mubr.bf16.mxu0 0
      %3507 = vmatmul.mubr.bf16.gmra.mxu0 %v3399
      %v3508 = vpop.f32.mrf.mxu0
      %v3509 = vadd.f32 0.0, %v3508
      %v3510 = vpop.f32.mrf.mxu0
      %v3511 = vpop.f32.mrf.mxu0
      %v3512 = vadd.f32 0.0, %v3511
      %v3513 = vpop.f32.mrf.mxu0
      %3514 = vmatprep.mubr.bf16.mxu0 0
      %3515 = vmatmul.mubr.bf16.gmra.mxu0 %v3402
      %v3516 = vpop.f32.mrf.mxu0
      %v3517 = vadd.f32 0.0, %v3516
      %v3518 = vpop.f32.mrf.mxu0
      %v3519 = vpop.f32.mrf.mxu0
      %v3520 = vadd.f32 0.0, %v3519
      %v3521 = vpop.f32.mrf.mxu0
      %3522 = vmatprep.mubr.bf16.mxu0 0
      %3523 = vmatmul.mubr.bf16.gmra.mxu0 %v3405
      %v3524 = vpop.f32.mrf.mxu0
      %v3525 = vadd.f32 0.0, %v3524
      %v3526 = vpop.f32.mrf.mxu0
      %v3527 = vpop.f32.mrf.mxu0
      %v3528 = vadd.f32 0.0, %v3527
      %v3529 = vpop.f32.mrf.mxu0
      %3530 = vmatprep.mubr.bf16.mxu0 0
      %3531 = vmatmul.mubr.bf16.gmra.mxu0 %v3408
      %v3532 = vpop.f32.mrf.mxu0
      %v3533 = vadd.f32 0.0, %v3532
      %v3534 = vpop.f32.mrf.mxu0
      %v3535 = vpop.f32.mrf.mxu0
      %v3536 = vadd.f32 0.0, %v3535
      %v3537 = vpop.f32.mrf.mxu0
      %3538 = vmatprep.mubr.bf16.mxu0 0
      %3539 = vmatmul.mubr.bf16.gmra.mxu0 %v3411
      %v3540 = vpop.f32.mrf.mxu0
      %v3541 = vadd.f32 0.0, %v3540
      %v3542 = vpop.f32.mrf.mxu0
      %v3543 = vpop.f32.mrf.mxu0
      %v3544 = vadd.f32 0.0, %v3543
      %v3545 = vpop.f32.mrf.mxu0
      %3546 = vmatprep.mubr.bf16.mxu0 0
      %3547 = vmatmul.mubr.bf16.gmra.mxu0 %v3414
      %v3548 = vpop.f32.mrf.mxu0
      %v3549 = vadd.f32 0.0, %v3548
      %v3550 = vpop.f32.mrf.mxu0
      %v3551 = vpop.f32.mrf.mxu0
      %v3552 = vadd.f32 0.0, %v3551
      %v3553 = vpop.f32.mrf.mxu0
      %3554 = vmatprep.mubr.bf16.mxu0 0
      %3555 = vmatmul.mubr.bf16.gmra.mxu0 %v3417
      %v3556 = vpop.f32.mrf.mxu0
      %v3557 = vadd.f32 0.0, %v3556
      %v3558 = vpop.f32.mrf.mxu0
      %v3559 = vpop.f32.mrf.mxu0
      %v3560 = vadd.f32 0.0, %v3559
      %v3561 = vpop.f32.mrf.mxu0
      %3562 = vmatprep.mubr.bf16.mxu0 0
      %3563 = vmatmul.mubr.bf16.gmra.mxu0 %v3420
      %v3564 = vpop.f32.mrf.mxu0
      %v3565 = vadd.f32 0.0, %v3564
      %v3566 = vpop.f32.mrf.mxu0
      %v3567 = vpop.f32.mrf.mxu0
      %v3568 = vadd.f32 0.0, %v3567
      %v3569 = vpop.f32.mrf.mxu0
      %3570 = vmatprep.mubr.bf16.mxu0 0
      %3571 = vmatmul.mubr.bf16.gmra.mxu0 %v3423
      %v3572 = vpop.f32.mrf.mxu0
      %v3573 = vadd.f32 0.0, %v3572
      %v3574 = vpop.f32.mrf.mxu0
      %v3575 = vpop.f32.mrf.mxu0
      %v3576 = vadd.f32 0.0, %v3575
      %v3577 = vpop.f32.mrf.mxu0
      %3578 = vmatprep.mubr.bf16.mxu0 0
      %3579 = vmatmul.mubr.bf16.gmra.mxu0 %v3426
      %v3580 = vpop.f32.mrf.mxu0
      %v3581 = vadd.f32 0.0, %v3580
      %v3582 = vpop.f32.mrf.mxu0
      %v3583 = vpop.f32.mrf.mxu0
      %v3584 = vadd.f32 0.0, %v3583
      %v3585 = vpop.f32.mrf.mxu0
      %3586 = vmatprep.mubr.bf16.mxu0 0
      %3587 = vmatmul.mubr.bf16.gmra.mxu0 %v3429
      %v3588 = vpop.f32.mrf.mxu0
      %v3589 = vadd.f32 0.0, %v3588
      %v3590 = vpop.f32.mrf.mxu0
      %v3591 = vpop.f32.mrf.mxu0
      %v3592 = vadd.f32 0.0, %v3591
      %v3593 = vpop.f32.mrf.mxu0
      %3594 = vdwg.mxu0
      %v3595 = vadd.f32 %v3236, %v3469
      %v3596 = vadd.f32 %v3237, %v3472
      %v3597 = vadd.f32 %v3238, %v3477
      %v3598 = vadd.f32 %v3239, %v3480
      %v3599 = vadd.f32 %v3240, %v3485
      %v3600 = vadd.f32 %v3241, %v3488
      %v3601 = vadd.f32 %v3242, %v3493
      %v3602 = vadd.f32 %v3243, %v3496
      %v3603 = vadd.f32 %v3244, %v3501
      %v3604 = vadd.f32 %v3245, %v3504
      %v3605 = vadd.f32 %v3246, %v3509
      %v3606 = vadd.f32 %v3247, %v3512
      %v3607 = vadd.f32 %v3248, %v3517
      %v3608 = vadd.f32 %v3249, %v3520
      %v3609 = vadd.f32 %v3250, %v3525
      %v3610 = vadd.f32 %v3251, %v3528
      %v3611 = vadd.f32 %v3252, %v3533
      %v3612 = vadd.f32 %v3253, %v3536
      %v3613 = vadd.f32 %v3254, %v3541
      %v3614 = vadd.f32 %v3255, %v3544
      %v3615 = vadd.f32 %v3256, %v3549
      %v3616 = vadd.f32 %v3257, %v3552
      %v3617 = vadd.f32 %v3258, %v3557
      %v3618 = vadd.f32 %v3259, %v3560
      %v3619 = vadd.f32 %v3260, %v3565
      %v3620 = vadd.f32 %v3261, %v3568
      %v3621 = vadd.f32 %v3262, %v3573
      %v3622 = vadd.f32 %v3263, %v3576
      %v3623 = vadd.f32 %v3264, %v3581
      %v3624 = vadd.f32 %v3265, %v3584
      %v3625 = vadd.f32 %v3266, %v3589
      %v3626 = vadd.f32 %v3267, %v3592
      %v3627 = vld [vmem:[%s3268] sm:$0xf]
      %v3628 = vld [vmem:[%s3268 + $0x4] sm:$0xf]
      %v3629 = vld [vmem:[%s3268 + $0x8] sm:$0x1]
      %v3630 = vld [vmem:[%s3268 + $0xc] sm:$0xf]
      %v3631 = vld [vmem:[%s3268 + $0x10] sm:$0xf]
      %v3632 = vld [vmem:[%s3268 + $0x14] sm:$0x1]
      %v3633 = vld [vmem:[%s3268 + $0x18] sm:$0xf]
      %v3634 = vld [vmem:[%s3268 + $0x1c] sm:$0xf]
      %v3635 = vld [vmem:[%s3268 + $0x20] sm:$0x1]
      %v3636 = vld [vmem:[%s3268 + $0x24] sm:$0xf]
      %v3637 = vld [vmem:[%s3268 + $0x28] sm:$0xf]
      %v3638 = vld [vmem:[%s3268 + $0x2c] sm:$0x1]
      %v3639 = vld [vmem:[%s3268 + $0x30] sm:$0xf]
      %v3640 = vld [vmem:[%s3268 + $0x34] sm:$0xf]
      %v3641 = vld [vmem:[%s3268 + $0x38] sm:$0x1]
      %v3642 = vld [vmem:[%s3268 + $0x3c] sm:$0xf]
      %v3643 = vld [vmem:[%s3268 + $0x40] sm:$0xf]
      %v3644 = vld [vmem:[%s3268 + $0x44] sm:$0x1]
      %v3645 = vld [vmem:[%s3268 + $0x48] sm:$0xf]
      %v3646 = vld [vmem:[%s3268 + $0x4c] sm:$0xf]
      %v3647 = vld [vmem:[%s3268 + $0x50] sm:$0x1]
      %v3648 = vld [vmem:[%s3268 + $0x54] sm:$0xf]
      %v3649 = vld [vmem:[%s3268 + $0x58] sm:$0xf]
      %v3650 = vld [vmem:[%s3268 + $0x5c] sm:$0x1]
      %v3651 = vld [vmem:[%s3268 + $0x60] sm:$0xf]
      %v3652 = vld [vmem:[%s3268 + $0x64] sm:$0xf]
      %v3653 = vld [vmem:[%s3268 + $0x68] sm:$0x1]
      %v3654 = vld [vmem:[%s3268 + $0x6c] sm:$0xf]
      %v3655 = vld [vmem:[%s3268 + $0x70] sm:$0xf]
      %v3656 = vld [vmem:[%s3268 + $0x74] sm:$0x1]
      %v3657 = vld [vmem:[%s3268 + $0x78] sm:$0xf]
      %v3658 = vld [vmem:[%s3268 + $0x7c] sm:$0xf]
      %v3659 = vld [vmem:[%s3268 + $0x80] sm:$0x1]
      %v3660 = vld [vmem:[%s3268 + $0x84] sm:$0xf]
      %v3661 = vld [vmem:[%s3268 + $0x88] sm:$0xf]
      %v3662 = vld [vmem:[%s3268 + $0x8c] sm:$0x1]
      %v3663 = vld [vmem:[%s3268 + $0x90] sm:$0xf]
      %v3664 = vld [vmem:[%s3268 + $0x94] sm:$0xf]
      %v3665 = vld [vmem:[%s3268 + $0x98] sm:$0x1]
      %v3666 = vld [vmem:[%s3268 + $0x9c] sm:$0xf]
      %v3667 = vld [vmem:[%s3268 + $0xa0] sm:$0xf]
      %v3668 = vld [vmem:[%s3268 + $0xa4] sm:$0x1]
      %v3669 = vld [vmem:[%s3268 + $0xa8] sm:$0xf]
      %v3670 = vld [vmem:[%s3268 + $0xac] sm:$0xf]
      %v3671 = vld [vmem:[%s3268 + $0xb0] sm:$0x1]
      %v3672 = vld [vmem:[%s3268 + $0xb4] sm:$0xf]
      %v3673 = vld [vmem:[%s3268 + $0xb8] sm:$0xf]
      %v3674 = vld [vmem:[%s3268 + $0xbc] sm:$0x1]
      %v3676 = vshrl.u32 %v3627, 16
      %v3678 = vrot.slane %v3676, 4
      %v3679 = vshll.u32 %v3627, 16
      %v3681 = vrot.slane %v3679, 5
      %v3682 = vor.u32 %v3678, %v3681
      %v3683 = vrot.slane %v3682, 4
      %v3685 = vshll.u32 %v3628, 16
      %v3687 = vrot.slane %v3685, 5
      %v3688 = vsel %vm315, %v3683, %v3687
      %v3689 = vshrl.u32 %v3628, 16
      %v3691 = vrot.slane %v3689, 4
      %v3692 = vor.u32 %v3691, %v3687
      %v3693 = vrot.slane %v3692, 4
      %v3695 = vshll.u32 %v3629, 16
      %v3697 = vrot.slane %v3695, 5
      %v3698 = vsel %vm315, %v3693, %v3697
      %v3700 = vshrl.u32 %v3630, 16
      %v3702 = vrot.slane %v3700, 4
      %v3703 = vshll.u32 %v3630, 16
      %v3705 = vrot.slane %v3703, 5
      %v3706 = vor.u32 %v3702, %v3705
      %v3707 = vrot.slane %v3706, 4
      %v3709 = vshll.u32 %v3631, 16
      %v3711 = vrot.slane %v3709, 5
      %v3712 = vsel %vm315, %v3707, %v3711
      %v3713 = vshrl.u32 %v3631, 16
      %v3715 = vrot.slane %v3713, 4
      %v3716 = vor.u32 %v3715, %v3711
      %v3717 = vrot.slane %v3716, 4
      %v3719 = vshll.u32 %v3632, 16
      %v3721 = vrot.slane %v3719, 5
      %v3722 = vsel %vm315, %v3717, %v3721
      %v3724 = vshrl.u32 %v3633, 16
      %v3726 = vrot.slane %v3724, 4
      %v3727 = vshll.u32 %v3633, 16
      %v3729 = vrot.slane %v3727, 5
      %v3730 = vor.u32 %v3726, %v3729
      %v3731 = vrot.slane %v3730, 4
      %v3733 = vshll.u32 %v3634, 16
      %v3735 = vrot.slane %v3733, 5
      %v3736 = vsel %vm315, %v3731, %v3735
      %v3737 = vshrl.u32 %v3634, 16
      %v3739 = vrot.slane %v3737, 4
      %v3740 = vor.u32 %v3739, %v3735
      %v3741 = vrot.slane %v3740, 4
      %v3743 = vshll.u32 %v3635, 16
      %v3745 = vrot.slane %v3743, 5
      %v3746 = vsel %vm315, %v3741, %v3745
      %v3748 = vshrl.u32 %v3636, 16
      %v3750 = vrot.slane %v3748, 4
      %v3751 = vshll.u32 %v3636, 16
      %v3753 = vrot.slane %v3751, 5
      %v3754 = vor.u32 %v3750, %v3753
      %v3755 = vrot.slane %v3754, 4
      %v3757 = vshll.u32 %v3637, 16
      %v3759 = vrot.slane %v3757, 5
      %v3760 = vsel %vm315, %v3755, %v3759
      %v3761 = vshrl.u32 %v3637, 16
      %v3763 = vrot.slane %v3761, 4
      %v3764 = vor.u32 %v3763, %v3759
      %v3765 = vrot.slane %v3764, 4
      %v3767 = vshll.u32 %v3638, 16
      %v3769 = vrot.slane %v3767, 5
      %v3770 = vsel %vm315, %v3765, %v3769
      %v3772 = vshrl.u32 %v3639, 16
      %v3774 = vrot.slane %v3772, 4
      %v3775 = vshll.u32 %v3639, 16
      %v3777 = vrot.slane %v3775, 5
      %v3778 = vor.u32 %v3774, %v3777
      %v3779 = vrot.slane %v3778, 4
      %v3781 = vshll.u32 %v3640, 16
      %v3783 = vrot.slane %v3781, 5
      %v3784 = vsel %vm315, %v3779, %v3783
      %v3785 = vshrl.u32 %v3640, 16
      %v3787 = vrot.slane %v3785, 4
      %v3788 = vor.u32 %v3787, %v3783
      %v3789 = vrot.slane %v3788, 4
      %v3791 = vshll.u32 %v3641, 16
      %v3793 = vrot.slane %v3791, 5
      %v3794 = vsel %vm315, %v3789, %v3793
      %v3796 = vshrl.u32 %v3642, 16
      %v3798 = vrot.slane %v3796, 4
      %v3799 = vshll.u32 %v3642, 16
      %v3801 = vrot.slane %v3799, 5
      %v3802 = vor.u32 %v3798, %v3801
      %v3803 = vrot.slane %v3802, 4
      %v3805 = vshll.u32 %v3643, 16
      %v3807 = vrot.slane %v3805, 5
      %v3808 = vsel %vm315, %v3803, %v3807
      %v3809 = vshrl.u32 %v3643, 16
      %v3811 = vrot.slane %v3809, 4
      %v3812 = vor.u32 %v3811, %v3807
      %v3813 = vrot.slane %v3812, 4
      %v3815 = vshll.u32 %v3644, 16
      %v3817 = vrot.slane %v3815, 5
      %v3818 = vsel %vm315, %v3813, %v3817
      %v3820 = vshrl.u32 %v3645, 16
      %v3822 = vrot.slane %v3820, 4
      %v3823 = vshll.u32 %v3645, 16
      %v3825 = vrot.slane %v3823, 5
      %v3826 = vor.u32 %v3822, %v3825
      %v3827 = vrot.slane %v3826, 4
      %v3829 = vshll.u32 %v3646, 16
      %v3831 = vrot.slane %v3829, 5
      %v3832 = vsel %vm315, %v3827, %v3831
      %v3833 = vshrl.u32 %v3646, 16
      %v3835 = vrot.slane %v3833, 4
      %v3836 = vor.u32 %v3835, %v3831
      %v3837 = vrot.slane %v3836, 4
      %v3839 = vshll.u32 %v3647, 16
      %v3841 = vrot.slane %v3839, 5
      %v3842 = vsel %vm315, %v3837, %v3841
      %v3844 = vshrl.u32 %v3648, 16
      %v3846 = vrot.slane %v3844, 4
      %v3847 = vshll.u32 %v3648, 16
      %v3849 = vrot.slane %v3847, 5
      %v3850 = vor.u32 %v3846, %v3849
      %v3851 = vrot.slane %v3850, 4
      %v3853 = vshll.u32 %v3649, 16
      %v3855 = vrot.slane %v3853, 5
      %v3856 = vsel %vm315, %v3851, %v3855
      %v3857 = vshrl.u32 %v3649, 16
      %v3859 = vrot.slane %v3857, 4
      %v3860 = vor.u32 %v3859, %v3855
      %v3861 = vrot.slane %v3860, 4
      %v3863 = vshll.u32 %v3650, 16
      %v3865 = vrot.slane %v3863, 5
      %v3866 = vsel %vm315, %v3861, %v3865
      %v3868 = vshrl.u32 %v3651, 16
      %v3870 = vrot.slane %v3868, 4
      %v3871 = vshll.u32 %v3651, 16
      %v3873 = vrot.slane %v3871, 5
      %v3874 = vor.u32 %v3870, %v3873
      %v3875 = vrot.slane %v3874, 4
      %v3877 = vshll.u32 %v3652, 16
      %v3879 = vrot.slane %v3877, 5
      %v3880 = vsel %vm315, %v3875, %v3879
      %v3881 = vshrl.u32 %v3652, 16
      %v3883 = vrot.slane %v3881, 4
      %v3884 = vor.u32 %v3883, %v3879
      %v3885 = vrot.slane %v3884, 4
      %v3887 = vshll.u32 %v3653, 16
      %v3889 = vrot.slane %v3887, 5
      %v3890 = vsel %vm315, %v3885, %v3889
      %v3892 = vshrl.u32 %v3654, 16
      %v3894 = vrot.slane %v3892, 4
      %v3895 = vshll.u32 %v3654, 16
      %v3897 = vrot.slane %v3895, 5
      %v3898 = vor.u32 %v3894, %v3897
      %v3899 = vrot.slane %v3898, 4
      %v3901 = vshll.u32 %v3655, 16
      %v3903 = vrot.slane %v3901, 5
      %v3904 = vsel %vm315, %v3899, %v3903
      %v3905 = vshrl.u32 %v3655, 16
      %v3907 = vrot.slane %v3905, 4
      %v3908 = vor.u32 %v3907, %v3903
      %v3909 = vrot.slane %v3908, 4
      %v3911 = vshll.u32 %v3656, 16
      %v3913 = vrot.slane %v3911, 5
      %v3914 = vsel %vm315, %v3909, %v3913
      %v3916 = vshrl.u32 %v3657, 16
      %v3918 = vrot.slane %v3916, 4
      %v3919 = vshll.u32 %v3657, 16
      %v3921 = vrot.slane %v3919, 5
      %v3922 = vor.u32 %v3918, %v3921
      %v3923 = vrot.slane %v3922, 4
      %v3925 = vshll.u32 %v3658, 16
      %v3927 = vrot.slane %v3925, 5
      %v3928 = vsel %vm315, %v3923, %v3927
      %v3929 = vshrl.u32 %v3658, 16
      %v3931 = vrot.slane %v3929, 4
      %v3932 = vor.u32 %v3931, %v3927
      %v3933 = vrot.slane %v3932, 4
      %v3935 = vshll.u32 %v3659, 16
      %v3937 = vrot.slane %v3935, 5
      %v3938 = vsel %vm315, %v3933, %v3937
      %v3940 = vshrl.u32 %v3660, 16
      %v3942 = vrot.slane %v3940, 4
      %v3943 = vshll.u32 %v3660, 16
      %v3945 = vrot.slane %v3943, 5
      %v3946 = vor.u32 %v3942, %v3945
      %v3947 = vrot.slane %v3946, 4
      %v3949 = vshll.u32 %v3661, 16
      %v3951 = vrot.slane %v3949, 5
      %v3952 = vsel %vm315, %v3947, %v3951
      %v3953 = vshrl.u32 %v3661, 16
      %v3955 = vrot.slane %v3953, 4
      %v3956 = vor.u32 %v3955, %v3951
      %v3957 = vrot.slane %v3956, 4
      %v3959 = vshll.u32 %v3662, 16
      %v3961 = vrot.slane %v3959, 5
      %v3962 = vsel %vm315, %v3957, %v3961
      %v3964 = vshrl.u32 %v3663, 16
      %v3966 = vrot.slane %v3964, 4
      %v3967 = vshll.u32 %v3663, 16
      %v3969 = vrot.slane %v3967, 5
      %v3970 = vor.u32 %v3966, %v3969
      %v3971 = vrot.slane %v3970, 4
      %v3973 = vshll.u32 %v3664, 16
      %v3975 = vrot.slane %v3973, 5
      %v3976 = vsel %vm315, %v3971, %v3975
      %v3977 = vshrl.u32 %v3664, 16
      %v3979 = vrot.slane %v3977, 4
      %v3980 = vor.u32 %v3979, %v3975
      %v3981 = vrot.slane %v3980, 4
      %v3983 = vshll.u32 %v3665, 16
      %v3985 = vrot.slane %v3983, 5
      %v3986 = vsel %vm315, %v3981, %v3985
      %v3988 = vshrl.u32 %v3666, 16
      %v3990 = vrot.slane %v3988, 4
      %v3991 = vshll.u32 %v3666, 16
      %v3993 = vrot.slane %v3991, 5
      %v3994 = vor.u32 %v3990, %v3993
      %v3995 = vrot.slane %v3994, 4
      %v3997 = vshll.u32 %v3667, 16
      %v3999 = vrot.slane %v3997, 5
      %v4000 = vsel %vm315, %v3995, %v3999
      %v4001 = vshrl.u32 %v3667, 16
      %v4003 = vrot.slane %v4001, 4
      %v4004 = vor.u32 %v4003, %v3999
      %v4005 = vrot.slane %v4004, 4
      %v4007 = vshll.u32 %v3668, 16
      %v4009 = vrot.slane %v4007, 5
      %v4010 = vsel %vm315, %v4005, %v4009
      %v4012 = vshrl.u32 %v3669, 16
      %v4014 = vrot.slane %v4012, 4
      %v4015 = vshll.u32 %v3669, 16
      %v4017 = vrot.slane %v4015, 5
      %v4018 = vor.u32 %v4014, %v4017
      %v4019 = vrot.slane %v4018, 4
      %v4021 = vshll.u32 %v3670, 16
      %v4023 = vrot.slane %v4021, 5
      %v4024 = vsel %vm315, %v4019, %v4023
      %v4025 = vshrl.u32 %v3670, 16
      %v4027 = vrot.slane %v4025, 4
      %v4028 = vor.u32 %v4027, %v4023
      %v4029 = vrot.slane %v4028, 4
      %v4031 = vshll.u32 %v3671, 16
      %v4033 = vrot.slane %v4031, 5
      %v4034 = vsel %vm315, %v4029, %v4033
      %v4036 = vshrl.u32 %v3672, 16
      %v4038 = vrot.slane %v4036, 4
      %v4039 = vshll.u32 %v3672, 16
      %v4041 = vrot.slane %v4039, 5
      %v4042 = vor.u32 %v4038, %v4041
      %v4043 = vrot.slane %v4042, 4
      %v4045 = vshll.u32 %v3673, 16
      %v4047 = vrot.slane %v4045, 5
      %v4048 = vsel %vm315, %v4043, %v4047
      %v4049 = vshrl.u32 %v3673, 16
      %v4051 = vrot.slane %v4049, 4
      %v4052 = vor.u32 %v4051, %v4047
      %v4053 = vrot.slane %v4052, 4
      %v4055 = vshll.u32 %v3674, 16
      %v4057 = vrot.slane %v4055, 5
      %v4058 = vsel %vm315, %v4053, %v4057
      %s4059 = scalar_lea.vmem %s248, 14
      %v4060 = vld [vmem:[%s4059] sm:$0x3]
      %v4061 = vunpack.c.l.b16 %v3688
      %v4062 = vunpack.c.l.b16 %v3698
      %v4063 = vunpack.c.l.b16 %v3712
      %v4064 = vunpack.c.l.b16 %v3722
      %v4065 = vunpack.c.l.b16 %v3736
      %v4066 = vunpack.c.l.b16 %v3746
      %v4067 = vunpack.c.l.b16 %v3760
      %v4068 = vunpack.c.l.b16 %v3770
      %v4069 = vunpack.c.l.b16 %v3784
      %v4070 = vunpack.c.l.b16 %v3794
      %v4071 = vunpack.c.l.b16 %v3808
      %v4072 = vunpack.c.l.b16 %v3818
      %v4073 = vunpack.c.l.b16 %v3832
      %v4074 = vunpack.c.l.b16 %v3842
      %v4075 = vunpack.c.l.b16 %v3856
      %v4076 = vunpack.c.l.b16 %v3866
      %v4077 = vunpack.c.l.b16 %v3880
      %v4078 = vunpack.c.l.b16 %v3890
      %v4079 = vunpack.c.l.b16 %v3904
      %v4080 = vunpack.c.l.b16 %v3914
      %v4081 = vunpack.c.l.b16 %v3928
      %v4082 = vunpack.c.l.b16 %v3938
      %v4083 = vunpack.c.l.b16 %v3952
      %v4084 = vunpack.c.l.b16 %v3962
      %v4085 = vunpack.c.l.b16 %v3976
      %v4086 = vunpack.c.l.b16 %v3986
      %v4087 = vunpack.c.l.b16 %v4000
      %v4088 = vunpack.c.l.b16 %v4010
      %v4089 = vunpack.c.l.b16 %v4024
      %v4090 = vunpack.c.l.b16 %v4034
      %v4091 = vunpack.c.l.b16 %v4048
      %v4092 = vunpack.c.l.b16 %v4058
      %v4093 = vpack.c.b16 %v4062, %v4061
      %v4094 = vpack.c.b16 %v4064, %v4063
      %v4095 = vpack.c.b16 %v4066, %v4065
      %v4096 = vpack.c.b16 %v4068, %v4067
      %v4097 = vpack.c.b16 %v4070, %v4069
      %v4098 = vpack.c.b16 %v4072, %v4071
      %v4099 = vpack.c.b16 %v4074, %v4073
      %v4100 = vpack.c.b16 %v4076, %v4075
      %v4101 = vpack.c.b16 %v4078, %v4077
      %v4102 = vpack.c.b16 %v4080, %v4079
      %v4103 = vpack.c.b16 %v4082, %v4081
      %v4104 = vpack.c.b16 %v4084, %v4083
      %v4105 = vpack.c.b16 %v4086, %v4085
      %v4106 = vpack.c.b16 %v4088, %v4087
      %v4107 = vpack.c.b16 %v4090, %v4089
      %v4108 = vpack.c.b16 %v4092, %v4091
      %v4110 = vsel %vm750, %v4093, 0
      %v4113 = vsel %vm750, %v4094, 0
      %v4116 = vsel %vm750, %v4095, 0
      %v4119 = vsel %vm750, %v4096, 0
      %v4122 = vsel %vm750, %v4097, 0
      %v4125 = vsel %vm750, %v4098, 0
      %v4128 = vsel %vm750, %v4099, 0
      %v4131 = vsel %vm750, %v4100, 0
      %v4134 = vsel %vm750, %v4101, 0
      %v4137 = vsel %vm750, %v4102, 0
      %v4140 = vsel %vm750, %v4103, 0
      %v4143 = vsel %vm750, %v4104, 0
      %v4146 = vsel %vm750, %v4105, 0
      %v4149 = vsel %vm750, %v4106, 0
      %v4152 = vsel %vm750, %v4107, 0
      %v4155 = vsel %vm750, %v4108, 0
      %v4158 = vsel %vm799, %v4060, 0
      %4160 = vmatprep.subr.bf16.mxu0 0
      %4161 = vmatpush1.bf16.msra.mxu0 0
      %4162 = vmatprep.subr.bf16.mxu0 0
      %4163 = vmatpush1.bf16.msra.mxu0 0
      %4164 = vmatprep.subr.bf16.mxu0 0
      %4165 = vmatpush1.bf16.msra.mxu0 0
      %4166 = vmatprep.subr.bf16.mxu0 0
      %4167 = vmatpush1.bf16.msra.mxu0 0
      %4168 = vmatprep.subr.bf16.mxu0 0
      %4169 = vmatpush1.bf16.msra.mxu0 0
      %4170 = vmatprep.subr.bf16.mxu0 0
      %4171 = vmatpush1.bf16.msra.mxu0 0
      %4172 = vmatprep.subr.bf16.mxu0 0
      %4173 = vmatpush1.bf16.msra.mxu0 0
      %4174 = vmatprep.subr.bf16.mxu0 0
      %4175 = vmatpush1.bf16.msra.mxu0 %v4158
      %4176 = vmatprep.subr.bf16.mxu0 0
      %4177 = vmatpush2.bf16.msra.mxu0 0
      %4178 = vmatprep.subr.bf16.mxu0 0
      %4179 = vmatpush2.bf16.msra.mxu0 0
      %4180 = vmatprep.subr.bf16.mxu0 0
      %4181 = vmatpush2.bf16.msra.mxu0 0
      %4182 = vmatprep.subr.bf16.mxu0 0
      %4183 = vmatpush2.bf16.msra.mxu0 0
      %4184 = vmatprep.subr.bf16.mxu0 0
      %4185 = vmatpush2.bf16.msra.mxu0 0
      %4186 = vmatprep.subr.bf16.mxu0 0
      %4187 = vmatpush2.bf16.msra.mxu0 0
      %4188 = vmatprep.subr.bf16.mxu0 0
      %4189 = vmatpush2.bf16.msra.mxu0 0
      %4190 = vmatprep.subr.bf16.mxu0 0
      %4191 = vmatpush2.bf16.msra.mxu0 0
      %4192 = vmatprep.mubr.bf16.mxu0 0
      %4193 = vmatmul.mubr.bf16.gmra.mxu0 %v4110
      %v4194 = vpop.f32.mrf.mxu0
      %v4195 = vadd.f32 0.0, %v4194
      %v4196 = vpop.f32.mrf.mxu0
      %v4197 = vpop.f32.mrf.mxu0
      %v4198 = vadd.f32 0.0, %v4197
      %v4199 = vpop.f32.mrf.mxu0
      %4200 = vmatprep.mubr.bf16.mxu0 0
      %4201 = vmatmul.mubr.bf16.gmra.mxu0 %v4113
      %v4202 = vpop.f32.mrf.mxu0
      %v4203 = vadd.f32 0.0, %v4202
      %v4204 = vpop.f32.mrf.mxu0
      %v4205 = vpop.f32.mrf.mxu0
      %v4206 = vadd.f32 0.0, %v4205
      %v4207 = vpop.f32.mrf.mxu0
      %4208 = vmatprep.mubr.bf16.mxu0 0
      %4209 = vmatmul.mubr.bf16.gmra.mxu0 %v4116
      %v4210 = vpop.f32.mrf.mxu0
      %v4211 = vadd.f32 0.0, %v4210
      %v4212 = vpop.f32.mrf.mxu0
      %v4213 = vpop.f32.mrf.mxu0
      %v4214 = vadd.f32 0.0, %v4213
      %v4215 = vpop.f32.mrf.mxu0
      %4216 = vmatprep.mubr.bf16.mxu0 0
      %4217 = vmatmul.mubr.bf16.gmra.mxu0 %v4119
      %v4218 = vpop.f32.mrf.mxu0
      %v4219 = vadd.f32 0.0, %v4218
      %v4220 = vpop.f32.mrf.mxu0
      %v4221 = vpop.f32.mrf.mxu0
      %v4222 = vadd.f32 0.0, %v4221
      %v4223 = vpop.f32.mrf.mxu0
      %4224 = vmatprep.mubr.bf16.mxu0 0
      %4225 = vmatmul.mubr.bf16.gmra.mxu0 %v4122
      %v4226 = vpop.f32.mrf.mxu0
      %v4227 = vadd.f32 0.0, %v4226
      %v4228 = vpop.f32.mrf.mxu0
      %v4229 = vpop.f32.mrf.mxu0
      %v4230 = vadd.f32 0.0, %v4229
      %v4231 = vpop.f32.mrf.mxu0
      %4232 = vmatprep.mubr.bf16.mxu0 0
      %4233 = vmatmul.mubr.bf16.gmra.mxu0 %v4125
      %v4234 = vpop.f32.mrf.mxu0
      %v4235 = vadd.f32 0.0, %v4234
      %v4236 = vpop.f32.mrf.mxu0
      %v4237 = vpop.f32.mrf.mxu0
      %v4238 = vadd.f32 0.0, %v4237
      %v4239 = vpop.f32.mrf.mxu0
      %4240 = vmatprep.mubr.bf16.mxu0 0
      %4241 = vmatmul.mubr.bf16.gmra.mxu0 %v4128
      %v4242 = vpop.f32.mrf.mxu0
      %v4243 = vadd.f32 0.0, %v4242
      %v4244 = vpop.f32.mrf.mxu0
      %v4245 = vpop.f32.mrf.mxu0
      %v4246 = vadd.f32 0.0, %v4245
      %v4247 = vpop.f32.mrf.mxu0
      %4248 = vmatprep.mubr.bf16.mxu0 0
      %4249 = vmatmul.mubr.bf16.gmra.mxu0 %v4131
      %v4250 = vpop.f32.mrf.mxu0
      %v4251 = vadd.f32 0.0, %v4250
      %v4252 = vpop.f32.mrf.mxu0
      %v4253 = vpop.f32.mrf.mxu0
      %v4254 = vadd.f32 0.0, %v4253
      %v4255 = vpop.f32.mrf.mxu0
      %4256 = vmatprep.mubr.bf16.mxu0 0
      %4257 = vmatmul.mubr.bf16.gmra.mxu0 %v4134
      %v4258 = vpop.f32.mrf.mxu0
      %v4259 = vadd.f32 0.0, %v4258
      %v4260 = vpop.f32.mrf.mxu0
      %v4261 = vpop.f32.mrf.mxu0
      %v4262 = vadd.f32 0.0, %v4261
      %v4263 = vpop.f32.mrf.mxu0
      %4264 = vmatprep.mubr.bf16.mxu0 0
      %4265 = vmatmul.mubr.bf16.gmra.mxu0 %v4137
      %v4266 = vpop.f32.mrf.mxu0
      %v4267 = vadd.f32 0.0, %v4266
      %v4268 = vpop.f32.mrf.mxu0
      %v4269 = vpop.f32.mrf.mxu0
      %v4270 = vadd.f32 0.0, %v4269
      %v4271 = vpop.f32.mrf.mxu0
      %4272 = vmatprep.mubr.bf16.mxu0 0
      %4273 = vmatmul.mubr.bf16.gmra.mxu0 %v4140
      %v4274 = vpop.f32.mrf.mxu0
      %v4275 = vadd.f32 0.0, %v4274
      %v4276 = vpop.f32.mrf.mxu0
      %v4277 = vpop.f32.mrf.mxu0
      %v4278 = vadd.f32 0.0, %v4277
      %v4279 = vpop.f32.mrf.mxu0
      %4280 = vmatprep.mubr.bf16.mxu0 0
      %4281 = vmatmul.mubr.bf16.gmra.mxu0 %v4143
      %v4282 = vpop.f32.mrf.mxu0
      %v4283 = vadd.f32 0.0, %v4282
      %v4284 = vpop.f32.mrf.mxu0
      %v4285 = vpop.f32.mrf.mxu0
      %v4286 = vadd.f32 0.0, %v4285
      %v4287 = vpop.f32.mrf.mxu0
      %4288 = vmatprep.mubr.bf16.mxu0 0
      %4289 = vmatmul.mubr.bf16.gmra.mxu0 %v4146
      %v4290 = vpop.f32.mrf.mxu0
      %v4291 = vadd.f32 0.0, %v4290
      %v4292 = vpop.f32.mrf.mxu0
      %v4293 = vpop.f32.mrf.mxu0
      %v4294 = vadd.f32 0.0, %v4293
      %v4295 = vpop.f32.mrf.mxu0
      %4296 = vmatprep.mubr.bf16.mxu0 0
      %4297 = vmatmul.mubr.bf16.gmra.mxu0 %v4149
      %v4298 = vpop.f32.mrf.mxu0
      %v4299 = vadd.f32 0.0, %v4298
      %v4300 = vpop.f32.mrf.mxu0
      %v4301 = vpop.f32.mrf.mxu0
      %v4302 = vadd.f32 0.0, %v4301
      %v4303 = vpop.f32.mrf.mxu0
      %4304 = vmatprep.mubr.bf16.mxu0 0
      %4305 = vmatmul.mubr.bf16.gmra.mxu0 %v4152
      %v4306 = vpop.f32.mrf.mxu0
      %v4307 = vadd.f32 0.0, %v4306
      %v4308 = vpop.f32.mrf.mxu0
      %v4309 = vpop.f32.mrf.mxu0
      %v4310 = vadd.f32 0.0, %v4309
      %v4311 = vpop.f32.mrf.mxu0
      %4312 = vmatprep.mubr.bf16.mxu0 0
      %4313 = vmatmul.mubr.bf16.gmra.mxu0 %v4155
      %v4314 = vpop.f32.mrf.mxu0
      %v4315 = vadd.f32 0.0, %v4314
      %v4316 = vpop.f32.mrf.mxu0
      %v4317 = vpop.f32.mrf.mxu0
      %v4318 = vadd.f32 0.0, %v4317
      %v4319 = vpop.f32.mrf.mxu0
      %4320 = vdwg.mxu0
      %v4321 = vadd.f32 %v3595, %v4195
      %v4322 = vadd.f32 %v3596, %v4198
      %v4323 = vadd.f32 %v3597, %v4203
      %v4324 = vadd.f32 %v3598, %v4206
      %v4325 = vadd.f32 %v3599, %v4211
      %v4326 = vadd.f32 %v3600, %v4214
      %v4327 = vadd.f32 %v3601, %v4219
      %v4328 = vadd.f32 %v3602, %v4222
      %v4329 = vadd.f32 %v3603, %v4227
      %v4330 = vadd.f32 %v3604, %v4230
      %v4331 = vadd.f32 %v3605, %v4235
      %v4332 = vadd.f32 %v3606, %v4238
      %v4333 = vadd.f32 %v3607, %v4243
      %v4334 = vadd.f32 %v3608, %v4246
      %v4335 = vadd.f32 %v3609, %v4251
      %v4336 = vadd.f32 %v3610, %v4254
      %v4337 = vadd.f32 %v3611, %v4259
      %v4338 = vadd.f32 %v3612, %v4262
      %v4339 = vadd.f32 %v3613, %v4267
      %v4340 = vadd.f32 %v3614, %v4270
      %v4341 = vadd.f32 %v3615, %v4275
      %v4342 = vadd.f32 %v3616, %v4278
      %v4343 = vadd.f32 %v3617, %v4283
      %v4344 = vadd.f32 %v3618, %v4286
      %v4345 = vadd.f32 %v3619, %v4291
      %v4346 = vadd.f32 %v3620, %v4294
      %v4347 = vadd.f32 %v3621, %v4299
      %v4348 = vadd.f32 %v3622, %v4302
      %v4349 = vadd.f32 %v3623, %v4307
      %v4350 = vadd.f32 %v3624, %v4310
      %v4351 = vadd.f32 %v3625, %v4315
      %v4352 = vadd.f32 %v3626, %v4318
      %v4353 = vld [vmem:[%s3268] sm:$0xe]
      %v4354 = vld [vmem:[%s3268 + $0xc] sm:$0xe]
      %v4355 = vld [vmem:[%s3268 + $0x18] sm:$0xe]
      %v4356 = vld [vmem:[%s3268 + $0x24] sm:$0xe]
      %v4357 = vld [vmem:[%s3268 + $0x30] sm:$0xe]
      %v4358 = vld [vmem:[%s3268 + $0x3c] sm:$0xe]
      %v4359 = vld [vmem:[%s3268 + $0x48] sm:$0xe]
      %v4360 = vld [vmem:[%s3268 + $0x54] sm:$0xe]
      %v4361 = vld [vmem:[%s3268 + $0x60] sm:$0xe]
      %v4362 = vld [vmem:[%s3268 + $0x6c] sm:$0xe]
      %v4363 = vld [vmem:[%s3268 + $0x78] sm:$0xe]
      %v4364 = vld [vmem:[%s3268 + $0x84] sm:$0xe]
      %v4365 = vld [vmem:[%s3268 + $0x90] sm:$0xe]
      %v4366 = vld [vmem:[%s3268 + $0x9c] sm:$0xe]
      %v4367 = vld [vmem:[%s3268 + $0xa8] sm:$0xe]
      %v4368 = vld [vmem:[%s3268 + $0xb4] sm:$0xe]
      %v4417 = vrot.slane %v4353, 5
      %v4418 = vrot.slane %v4417, 4
      %v4419 = vrot.slane %v3628, 5
      %v4420 = vsel %vm1306, %v4418, %v4419
      %v4421 = vrot.slane %v4419, 4
      %v4422 = vrot.slane %v3629, 5
      %v4423 = vsel %vm1306, %v4421, %v4422
      %v4424 = vrot.slane %v4354, 5
      %v4425 = vrot.slane %v4424, 4
      %v4426 = vrot.slane %v3631, 5
      %v4427 = vsel %vm1306, %v4425, %v4426
      %v4428 = vrot.slane %v4426, 4
      %v4429 = vrot.slane %v3632, 5
      %v4430 = vsel %vm1306, %v4428, %v4429
      %v4431 = vrot.slane %v4355, 5
      %v4432 = vrot.slane %v4431, 4
      %v4433 = vrot.slane %v3634, 5
      %v4434 = vsel %vm1306, %v4432, %v4433
      %v4435 = vrot.slane %v4433, 4
      %v4436 = vrot.slane %v3635, 5
      %v4437 = vsel %vm1306, %v4435, %v4436
      %v4438 = vrot.slane %v4356, 5
      %v4439 = vrot.slane %v4438, 4
      %v4440 = vrot.slane %v3637, 5
      %v4441 = vsel %vm1306, %v4439, %v4440
      %v4442 = vrot.slane %v4440, 4
      %v4443 = vrot.slane %v3638, 5
      %v4444 = vsel %vm1306, %v4442, %v4443
      %v4445 = vrot.slane %v4357, 5
      %v4446 = vrot.slane %v4445, 4
      %v4447 = vrot.slane %v3640, 5
      %v4448 = vsel %vm1306, %v4446, %v4447
      %v4449 = vrot.slane %v4447, 4
      %v4450 = vrot.slane %v3641, 5
      %v4451 = vsel %vm1306, %v4449, %v4450
      %v4452 = vrot.slane %v4358, 5
      %v4453 = vrot.slane %v4452, 4
      %v4454 = vrot.slane %v3643, 5
      %v4455 = vsel %vm1306, %v4453, %v4454
      %v4456 = vrot.slane %v4454, 4
      %v4457 = vrot.slane %v3644, 5
      %v4458 = vsel %vm1306, %v4456, %v4457
      %v4459 = vrot.slane %v4359, 5
      %v4460 = vrot.slane %v4459, 4
      %v4461 = vrot.slane %v3646, 5
      %v4462 = vsel %vm1306, %v4460, %v4461
      %v4463 = vrot.slane %v4461, 4
      %v4464 = vrot.slane %v3647, 5
      %v4465 = vsel %vm1306, %v4463, %v4464
      %v4466 = vrot.slane %v4360, 5
      %v4467 = vrot.slane %v4466, 4
      %v4468 = vrot.slane %v3649, 5
      %v4469 = vsel %vm1306, %v4467, %v4468
      %v4470 = vrot.slane %v4468, 4
      %v4471 = vrot.slane %v3650, 5
      %v4472 = vsel %vm1306, %v4470, %v4471
      %v4473 = vrot.slane %v4361, 5
      %v4474 = vrot.slane %v4473, 4
      %v4475 = vrot.slane %v3652, 5
      %v4476 = vsel %vm1306, %v4474, %v4475
      %v4477 = vrot.slane %v4475, 4
      %v4478 = vrot.slane %v3653, 5
      %v4479 = vsel %vm1306, %v4477, %v4478
      %v4480 = vrot.slane %v4362, 5
      %v4481 = vrot.slane %v4480, 4
      %v4482 = vrot.slane %v3655, 5
      %v4483 = vsel %vm1306, %v4481, %v4482
      %v4484 = vrot.slane %v4482, 4
      %v4485 = vrot.slane %v3656, 5
      %v4486 = vsel %vm1306, %v4484, %v4485
      %v4487 = vrot.slane %v4363, 5
      %v4488 = vrot.slane %v4487, 4
      %v4489 = vrot.slane %v3658, 5
      %v4490 = vsel %vm1306, %v4488, %v4489
      %v4491 = vrot.slane %v4489, 4
      %v4492 = vrot.slane %v3659, 5
      %v4493 = vsel %vm1306, %v4491, %v4492
      %v4494 = vrot.slane %v4364, 5
      %v4495 = vrot.slane %v4494, 4
      %v4496 = vrot.slane %v3661, 5
      %v4497 = vsel %vm1306, %v4495, %v4496
      %v4498 = vrot.slane %v4496, 4
      %v4499 = vrot.slane %v3662, 5
      %v4500 = vsel %vm1306, %v4498, %v4499
      %v4501 = vrot.slane %v4365, 5
      %v4502 = vrot.slane %v4501, 4
      %v4503 = vrot.slane %v3664, 5
      %v4504 = vsel %vm1306, %v4502, %v4503
      %v4505 = vrot.slane %v4503, 4
      %v4506 = vrot.slane %v3665, 5
      %v4507 = vsel %vm1306, %v4505, %v4506
      %v4508 = vrot.slane %v4366, 5
      %v4509 = vrot.slane %v4508, 4
      %v4510 = vrot.slane %v3667, 5
      %v4511 = vsel %vm1306, %v4509, %v4510
      %v4512 = vrot.slane %v4510, 4
      %v4513 = vrot.slane %v3668, 5
      %v4514 = vsel %vm1306, %v4512, %v4513
      %v4515 = vrot.slane %v4367, 5
      %v4516 = vrot.slane %v4515, 4
      %v4517 = vrot.slane %v3670, 5
      %v4518 = vsel %vm1306, %v4516, %v4517
      %v4519 = vrot.slane %v4517, 4
      %v4520 = vrot.slane %v3671, 5
      %v4521 = vsel %vm1306, %v4519, %v4520
      %v4522 = vrot.slane %v4368, 5
      %v4523 = vrot.slane %v4522, 4
      %v4524 = vrot.slane %v3673, 5
      %v4525 = vsel %vm1306, %v4523, %v4524
      %v4526 = vrot.slane %v4524, 4
      %v4527 = vrot.slane %v3674, 5
      %v4528 = vsel %vm1306, %v4526, %v4527
      %s4529 = scalar_lea.vmem %s248, 16
      %v4530 = vld [vmem:[%s4529] sm:$0x3]
      %v4531 = vunpack.c.l.b16 %v4420
      %v4532 = vunpack.c.l.b16 %v4423
      %v4533 = vunpack.c.l.b16 %v4427
      %v4534 = vunpack.c.l.b16 %v4430
      %v4535 = vunpack.c.l.b16 %v4434
      %v4536 = vunpack.c.l.b16 %v4437
      %v4537 = vunpack.c.l.b16 %v4441
      %v4538 = vunpack.c.l.b16 %v4444
      %v4539 = vunpack.c.l.b16 %v4448
      %v4540 = vunpack.c.l.b16 %v4451
      %v4541 = vunpack.c.l.b16 %v4455
      %v4542 = vunpack.c.l.b16 %v4458
      %v4543 = vunpack.c.l.b16 %v4462
      %v4544 = vunpack.c.l.b16 %v4465
      %v4545 = vunpack.c.l.b16 %v4469
      %v4546 = vunpack.c.l.b16 %v4472
      %v4547 = vunpack.c.l.b16 %v4476
      %v4548 = vunpack.c.l.b16 %v4479
      %v4549 = vunpack.c.l.b16 %v4483
      %v4550 = vunpack.c.l.b16 %v4486
      %v4551 = vunpack.c.l.b16 %v4490
      %v4552 = vunpack.c.l.b16 %v4493
      %v4553 = vunpack.c.l.b16 %v4497
      %v4554 = vunpack.c.l.b16 %v4500
      %v4555 = vunpack.c.l.b16 %v4504
      %v4556 = vunpack.c.l.b16 %v4507
      %v4557 = vunpack.c.l.b16 %v4511
      %v4558 = vunpack.c.l.b16 %v4514
      %v4559 = vunpack.c.l.b16 %v4518
      %v4560 = vunpack.c.l.b16 %v4521
      %v4561 = vunpack.c.l.b16 %v4525
      %v4562 = vunpack.c.l.b16 %v4528
      %v4563 = vpack.c.b16 %v4532, %v4531
      %v4564 = vpack.c.b16 %v4534, %v4533
      %v4565 = vpack.c.b16 %v4536, %v4535
      %v4566 = vpack.c.b16 %v4538, %v4537
      %v4567 = vpack.c.b16 %v4540, %v4539
      %v4568 = vpack.c.b16 %v4542, %v4541
      %v4569 = vpack.c.b16 %v4544, %v4543
      %v4570 = vpack.c.b16 %v4546, %v4545
      %v4571 = vpack.c.b16 %v4548, %v4547
      %v4572 = vpack.c.b16 %v4550, %v4549
      %v4573 = vpack.c.b16 %v4552, %v4551
      %v4574 = vpack.c.b16 %v4554, %v4553
      %v4575 = vpack.c.b16 %v4556, %v4555
      %v4576 = vpack.c.b16 %v4558, %v4557
      %v4577 = vpack.c.b16 %v4560, %v4559
      %v4578 = vpack.c.b16 %v4562, %v4561
      %v4580 = vsel %vm750, %v4563, 0
      %v4583 = vsel %vm750, %v4564, 0
      %v4586 = vsel %vm750, %v4565, 0
      %v4589 = vsel %vm750, %v4566, 0
      %v4592 = vsel %vm750, %v4567, 0
      %v4595 = vsel %vm750, %v4568, 0
      %v4598 = vsel %vm750, %v4569, 0
      %v4601 = vsel %vm750, %v4570, 0
      %v4604 = vsel %vm750, %v4571, 0
      %v4607 = vsel %vm750, %v4572, 0
      %v4610 = vsel %vm750, %v4573, 0
      %v4613 = vsel %vm750, %v4574, 0
      %v4616 = vsel %vm750, %v4575, 0
      %v4619 = vsel %vm750, %v4576, 0
      %v4622 = vsel %vm750, %v4577, 0
      %v4625 = vsel %vm750, %v4578, 0
      %v4628 = vsel %vm799, %v4530, 0
      %4630 = vmatprep.subr.bf16.mxu0 0
      %4631 = vmatpush1.bf16.msra.mxu0 0
      %4632 = vmatprep.subr.bf16.mxu0 0
      %4633 = vmatpush1.bf16.msra.mxu0 0
      %4634 = vmatprep.subr.bf16.mxu0 0
      %4635 = vmatpush1.bf16.msra.mxu0 0
      %4636 = vmatprep.subr.bf16.mxu0 0
      %4637 = vmatpush1.bf16.msra.mxu0 0
      %4638 = vmatprep.subr.bf16.mxu0 0
      %4639 = vmatpush1.bf16.msra.mxu0 0
      %4640 = vmatprep.subr.bf16.mxu0 0
      %4641 = vmatpush1.bf16.msra.mxu0 0
      %4642 = vmatprep.subr.bf16.mxu0 0
      %4643 = vmatpush1.bf16.msra.mxu0 0
      %4644 = vmatprep.subr.bf16.mxu0 0
      %4645 = vmatpush1.bf16.msra.mxu0 %v4628
      %4646 = vmatprep.subr.bf16.mxu0 0
      %4647 = vmatpush2.bf16.msra.mxu0 0
      %4648 = vmatprep.subr.bf16.mxu0 0
      %4649 = vmatpush2.bf16.msra.mxu0 0
      %4650 = vmatprep.subr.bf16.mxu0 0
      %4651 = vmatpush2.bf16.msra.mxu0 0
      %4652 = vmatprep.subr.bf16.mxu0 0
      %4653 = vmatpush2.bf16.msra.mxu0 0
      %4654 = vmatprep.subr.bf16.mxu0 0
      %4655 = vmatpush2.bf16.msra.mxu0 0
      %4656 = vmatprep.subr.bf16.mxu0 0
      %4657 = vmatpush2.bf16.msra.mxu0 0
      %4658 = vmatprep.subr.bf16.mxu0 0
      %4659 = vmatpush2.bf16.msra.mxu0 0
      %4660 = vmatprep.subr.bf16.mxu0 0
      %4661 = vmatpush2.bf16.msra.mxu0 0
      %4662 = vmatprep.mubr.bf16.mxu0 0
      %4663 = vmatmul.mubr.bf16.gmra.mxu0 %v4580
      %v4664 = vpop.f32.mrf.mxu0
      %v4665 = vadd.f32 0.0, %v4664
      %v4666 = vpop.f32.mrf.mxu0
      %v4667 = vpop.f32.mrf.mxu0
      %v4668 = vadd.f32 0.0, %v4667
      %v4669 = vpop.f32.mrf.mxu0
      %4670 = vmatprep.mubr.bf16.mxu0 0
      %4671 = vmatmul.mubr.bf16.gmra.mxu0 %v4583
      %v4672 = vpop.f32.mrf.mxu0
      %v4673 = vadd.f32 0.0, %v4672
      %v4674 = vpop.f32.mrf.mxu0
      %v4675 = vpop.f32.mrf.mxu0
      %v4676 = vadd.f32 0.0, %v4675
      %v4677 = vpop.f32.mrf.mxu0
      %4678 = vmatprep.mubr.bf16.mxu0 0
      %4679 = vmatmul.mubr.bf16.gmra.mxu0 %v4586
      %v4680 = vpop.f32.mrf.mxu0
      %v4681 = vadd.f32 0.0, %v4680
      %v4682 = vpop.f32.mrf.mxu0
      %v4683 = vpop.f32.mrf.mxu0
      %v4684 = vadd.f32 0.0, %v4683
      %v4685 = vpop.f32.mrf.mxu0
      %4686 = vmatprep.mubr.bf16.mxu0 0
      %4687 = vmatmul.mubr.bf16.gmra.mxu0 %v4589
      %v4688 = vpop.f32.mrf.mxu0
      %v4689 = vadd.f32 0.0, %v4688
      %v4690 = vpop.f32.mrf.mxu0
      %v4691 = vpop.f32.mrf.mxu0
      %v4692 = vadd.f32 0.0, %v4691
      %v4693 = vpop.f32.mrf.mxu0
      %4694 = vmatprep.mubr.bf16.mxu0 0
      %4695 = vmatmul.mubr.bf16.gmra.mxu0 %v4592
      %v4696 = vpop.f32.mrf.mxu0
      %v4697 = vadd.f32 0.0, %v4696
      %v4698 = vpop.f32.mrf.mxu0
      %v4699 = vpop.f32.mrf.mxu0
      %v4700 = vadd.f32 0.0, %v4699
      %v4701 = vpop.f32.mrf.mxu0
      %4702 = vmatprep.mubr.bf16.mxu0 0
      %4703 = vmatmul.mubr.bf16.gmra.mxu0 %v4595
      %v4704 = vpop.f32.mrf.mxu0
      %v4705 = vadd.f32 0.0, %v4704
      %v4706 = vpop.f32.mrf.mxu0
      %v4707 = vpop.f32.mrf.mxu0
      %v4708 = vadd.f32 0.0, %v4707
      %v4709 = vpop.f32.mrf.mxu0
      %4710 = vmatprep.mubr.bf16.mxu0 0
      %4711 = vmatmul.mubr.bf16.gmra.mxu0 %v4598
      %v4712 = vpop.f32.mrf.mxu0
      %v4713 = vadd.f32 0.0, %v4712
      %v4714 = vpop.f32.mrf.mxu0
      %v4715 = vpop.f32.mrf.mxu0
      %v4716 = vadd.f32 0.0, %v4715
      %v4717 = vpop.f32.mrf.mxu0
      %4718 = vmatprep.mubr.bf16.mxu0 0
      %4719 = vmatmul.mubr.bf16.gmra.mxu0 %v4601
      %v4720 = vpop.f32.mrf.mxu0
      %v4721 = vadd.f32 0.0, %v4720
      %v4722 = vpop.f32.mrf.mxu0
      %v4723 = vpop.f32.mrf.mxu0
      %v4724 = vadd.f32 0.0, %v4723
      %v4725 = vpop.f32.mrf.mxu0
      %4726 = vmatprep.mubr.bf16.mxu0 0
      %4727 = vmatmul.mubr.bf16.gmra.mxu0 %v4604
      %v4728 = vpop.f32.mrf.mxu0
      %v4729 = vadd.f32 0.0, %v4728
      %v4730 = vpop.f32.mrf.mxu0
      %v4731 = vpop.f32.mrf.mxu0
      %v4732 = vadd.f32 0.0, %v4731
      %v4733 = vpop.f32.mrf.mxu0
      %4734 = vmatprep.mubr.bf16.mxu0 0
      %4735 = vmatmul.mubr.bf16.gmra.mxu0 %v4607
      %v4736 = vpop.f32.mrf.mxu0
      %v4737 = vadd.f32 0.0, %v4736
      %v4738 = vpop.f32.mrf.mxu0
      %v4739 = vpop.f32.mrf.mxu0
      %v4740 = vadd.f32 0.0, %v4739
      %v4741 = vpop.f32.mrf.mxu0
      %4742 = vmatprep.mubr.bf16.mxu0 0
      %4743 = vmatmul.mubr.bf16.gmra.mxu0 %v4610
      %v4744 = vpop.f32.mrf.mxu0
      %v4745 = vadd.f32 0.0, %v4744
      %v4746 = vpop.f32.mrf.mxu0
      %v4747 = vpop.f32.mrf.mxu0
      %v4748 = vadd.f32 0.0, %v4747
      %v4749 = vpop.f32.mrf.mxu0
      %4750 = vmatprep.mubr.bf16.mxu0 0
      %4751 = vmatmul.mubr.bf16.gmra.mxu0 %v4613
      %v4752 = vpop.f32.mrf.mxu0
      %v4753 = vadd.f32 0.0, %v4752
      %v4754 = vpop.f32.mrf.mxu0
      %v4755 = vpop.f32.mrf.mxu0
      %v4756 = vadd.f32 0.0, %v4755
      %v4757 = vpop.f32.mrf.mxu0
      %4758 = vmatprep.mubr.bf16.mxu0 0
      %4759 = vmatmul.mubr.bf16.gmra.mxu0 %v4616
      %v4760 = vpop.f32.mrf.mxu0
      %v4761 = vadd.f32 0.0, %v4760
      %v4762 = vpop.f32.mrf.mxu0
      %v4763 = vpop.f32.mrf.mxu0
      %v4764 = vadd.f32 0.0, %v4763
      %v4765 = vpop.f32.mrf.mxu0
      %4766 = vmatprep.mubr.bf16.mxu0 0
      %4767 = vmatmul.mubr.bf16.gmra.mxu0 %v4619
      %v4768 = vpop.f32.mrf.mxu0
      %v4769 = vadd.f32 0.0, %v4768
      %v4770 = vpop.f32.mrf.mxu0
      %v4771 = vpop.f32.mrf.mxu0
      %v4772 = vadd.f32 0.0, %v4771
      %v4773 = vpop.f32.mrf.mxu0
      %4774 = vmatprep.mubr.bf16.mxu0 0
      %4775 = vmatmul.mubr.bf16.gmra.mxu0 %v4622
      %v4776 = vpop.f32.mrf.mxu0
      %v4777 = vadd.f32 0.0, %v4776
      %v4778 = vpop.f32.mrf.mxu0
      %v4779 = vpop.f32.mrf.mxu0
      %v4780 = vadd.f32 0.0, %v4779
      %v4781 = vpop.f32.mrf.mxu0
      %4782 = vmatprep.mubr.bf16.mxu0 0
      %4783 = vmatmul.mubr.bf16.gmra.mxu0 %v4625
      %v4784 = vpop.f32.mrf.mxu0
      %v4785 = vadd.f32 0.0, %v4784
      %v4786 = vpop.f32.mrf.mxu0
      %v4787 = vpop.f32.mrf.mxu0
      %v4788 = vadd.f32 0.0, %v4787
      %v4789 = vpop.f32.mrf.mxu0
      %4790 = vdwg.mxu0
      %v4791 = vadd.f32 %v4321, %v4665
      %v4792 = vadd.f32 %v4322, %v4668
      %v4793 = vadd.f32 %v4323, %v4673
      %v4794 = vadd.f32 %v4324, %v4676
      %v4795 = vadd.f32 %v4325, %v4681
      %v4796 = vadd.f32 %v4326, %v4684
      %v4797 = vadd.f32 %v4327, %v4689
      %v4798 = vadd.f32 %v4328, %v4692
      %v4799 = vadd.f32 %v4329, %v4697
      %v4800 = vadd.f32 %v4330, %v4700
      %v4801 = vadd.f32 %v4331, %v4705
      %v4802 = vadd.f32 %v4332, %v4708
      %v4803 = vadd.f32 %v4333, %v4713
      %v4804 = vadd.f32 %v4334, %v4716
      %v4805 = vadd.f32 %v4335, %v4721
      %v4806 = vadd.f32 %v4336, %v4724
      %v4807 = vadd.f32 %v4337, %v4729
      %v4808 = vadd.f32 %v4338, %v4732
      %v4809 = vadd.f32 %v4339, %v4737
      %v4810 = vadd.f32 %v4340, %v4740
      %v4811 = vadd.f32 %v4341, %v4745
      %v4812 = vadd.f32 %v4342, %v4748
      %v4813 = vadd.f32 %v4343, %v4753
      %v4814 = vadd.f32 %v4344, %v4756
      %v4815 = vadd.f32 %v4345, %v4761
      %v4816 = vadd.f32 %v4346, %v4764
      %v4817 = vadd.f32 %v4347, %v4769
      %v4818 = vadd.f32 %v4348, %v4772
      %v4819 = vadd.f32 %v4349, %v4777
      %v4820 = vadd.f32 %v4350, %v4780
      %v4821 = vadd.f32 %v4351, %v4785
      %v4822 = vadd.f32 %v4352, %v4788
      %v4823 = vld [vmem:[%s251] sm:$0x1]
      %v4825 = vlaneseq
      %v4826 = vshrl.u32 %v4825, 7
      %v4827 = vsub.s32 0, %v4826
      %v4828 = vrot.slane %v4823, %v4827
      %v4830 = vmul.f32 %v4791, %v4828
      %v4831 = vmul.f32 %v4792, %v4828
      %v4832 = vmul.f32 %v4793, %v4828
      %v4833 = vmul.f32 %v4794, %v4828
      %v4834 = vmul.f32 %v4795, %v4828
      %v4835 = vmul.f32 %v4796, %v4828
      %v4836 = vmul.f32 %v4797, %v4828
      %v4837 = vmul.f32 %v4798, %v4828
      %v4838 = vmul.f32 %v4799, %v4828
      %v4839 = vmul.f32 %v4800, %v4828
      %v4840 = vmul.f32 %v4801, %v4828
      %v4841 = vmul.f32 %v4802, %v4828
      %v4842 = vmul.f32 %v4803, %v4828
      %v4843 = vmul.f32 %v4804, %v4828
      %v4844 = vmul.f32 %v4805, %v4828
      %v4845 = vmul.f32 %v4806, %v4828
      %v4846 = vmul.f32 %v4807, %v4828
      %v4847 = vmul.f32 %v4808, %v4828
      %v4848 = vmul.f32 %v4809, %v4828
      %v4849 = vmul.f32 %v4810, %v4828
      %v4850 = vmul.f32 %v4811, %v4828
      %v4851 = vmul.f32 %v4812, %v4828
      %v4852 = vmul.f32 %v4813, %v4828
      %v4853 = vmul.f32 %v4814, %v4828
      %v4854 = vmul.f32 %v4815, %v4828
      %v4855 = vmul.f32 %v4816, %v4828
      %v4856 = vmul.f32 %v4817, %v4828
      %v4857 = vmul.f32 %v4818, %v4828
      %v4858 = vmul.f32 %v4819, %v4828
      %v4859 = vmul.f32 %v4820, %v4828
      %v4860 = vmul.f32 %v4821, %v4828
      %v4861 = vmul.f32 %v4822, %v4828
      %v4862 = vld [vmem:[%s254] sm:$0x1]
      %v4864 = vlaneseq
      %v4865 = vshrl.u32 %v4864, 7
      %v4866 = vsub.s32 0, %v4865
      %v4867 = vrot.slane %v4862, %v4866
      %v4869 = vadd.f32 %v4830, %v4867
      %v4870 = vadd.f32 %v4831, %v4867
      %v4871 = vadd.f32 %v4832, %v4867
      %v4872 = vadd.f32 %v4833, %v4867
      %v4873 = vadd.f32 %v4834, %v4867
      %v4874 = vadd.f32 %v4835, %v4867
      %v4875 = vadd.f32 %v4836, %v4867
      %v4876 = vadd.f32 %v4837, %v4867
      %v4877 = vadd.f32 %v4838, %v4867
      %v4878 = vadd.f32 %v4839, %v4867
      %v4879 = vadd.f32 %v4840, %v4867
      %v4880 = vadd.f32 %v4841, %v4867
      %v4881 = vadd.f32 %v4842, %v4867
      %v4882 = vadd.f32 %v4843, %v4867
      %v4883 = vadd.f32 %v4844, %v4867
      %v4884 = vadd.f32 %v4845, %v4867
      %v4885 = vadd.f32 %v4846, %v4867
      %v4886 = vadd.f32 %v4847, %v4867
      %v4887 = vadd.f32 %v4848, %v4867
      %v4888 = vadd.f32 %v4849, %v4867
      %v4889 = vadd.f32 %v4850, %v4867
      %v4890 = vadd.f32 %v4851, %v4867
      %v4891 = vadd.f32 %v4852, %v4867
      %v4892 = vadd.f32 %v4853, %v4867
      %v4893 = vadd.f32 %v4854, %v4867
      %v4894 = vadd.f32 %v4855, %v4867
      %v4895 = vadd.f32 %v4856, %v4867
      %v4896 = vadd.f32 %v4857, %v4867
      %v4897 = vadd.f32 %v4858, %v4867
      %v4898 = vadd.f32 %v4859, %v4867
      %v4899 = vadd.f32 %v4860, %v4867
      %v4900 = vadd.f32 %v4861, %v4867
      %4901 = vst [vmem:[%s262] sm:$0xff] %v4869
      %4902 = vst [vmem:[%s262 + $0x8] sm:$0xff] %v4870
      %4903 = vst [vmem:[%s262 + $0x10] sm:$0xff] %v4871
      %4904 = vst [vmem:[%s262 + $0x18] sm:$0xff] %v4872
      %4905 = vst [vmem:[%s262 + $0x20] sm:$0xff] %v4873
      %4906 = vst [vmem:[%s262 + $0x28] sm:$0xff] %v4874
      %4907 = vst [vmem:[%s262 + $0x30] sm:$0xff] %v4875
      %4908 = vst [vmem:[%s262 + $0x38] sm:$0xff] %v4876
      %4909 = vst [vmem:[%s262 + $0x40] sm:$0xff] %v4877
      %4910 = vst [vmem:[%s262 + $0x48] sm:$0xff] %v4878
      %4911 = vst [vmem:[%s262 + $0x50] sm:$0xff] %v4879
      %4912 = vst [vmem:[%s262 + $0x58] sm:$0xff] %v4880
      %4913 = vst [vmem:[%s262 + $0x60] sm:$0xff] %v4881
      %4914 = vst [vmem:[%s262 + $0x68] sm:$0xff] %v4882
      %4915 = vst [vmem:[%s262 + $0x70] sm:$0xff] %v4883
      %4916 = vst [vmem:[%s262 + $0x78] sm:$0xff] %v4884
      %4917 = vst [vmem:[%s262 + $0x80] sm:$0xff] %v4885
      %4918 = vst [vmem:[%s262 + $0x88] sm:$0xff] %v4886
      %4919 = vst [vmem:[%s262 + $0x90] sm:$0xff] %v4887
      %4920 = vst [vmem:[%s262 + $0x98] sm:$0xff] %v4888
      %4921 = vst [vmem:[%s262 + $0xa0] sm:$0xff] %v4889
      %4922 = vst [vmem:[%s262 + $0xa8] sm:$0xff] %v4890
      %4923 = vst [vmem:[%s262 + $0xb0] sm:$0xff] %v4891
      %4924 = vst [vmem:[%s262 + $0xb8] sm:$0xff] %v4892
      %4925 = vst [vmem:[%s262 + $0xc0] sm:$0xff] %v4893
      %4926 = vst [vmem:[%s262 + $0xc8] sm:$0xff] %v4894
      %4927 = vst [vmem:[%s262 + $0xd0] sm:$0xff] %v4895
      %4928 = vst [vmem:[%s262 + $0xd8] sm:$0xff] %v4896
      %4929 = vst [vmem:[%s262 + $0xe0] sm:$0xff] %v4897
      %4930 = vst [vmem:[%s262 + $0xe8] sm:$0xff] %v4898
      %4931 = vst [vmem:[%s262 + $0xf0] sm:$0xff] %v4899
      %4932 = vst [vmem:[%s262 + $0xf8] sm:$0xff] %v4900
      %p4933 = scmp.lt.s32.totalorder %s19, 1
      %s4934 = scalar_select %p4933, %s19, 1
      %p4935 = scmp.lt.s32.totalorder %s20, 0
      %s4936 = scalar_select %p4935, %s20, 0
      %s4937 = smul.addr %s4934, 32
      %s4938 = sadd.s32 %s4936, %s4937
      %s4939 = smul.addr %s4938, 8
      %s4940 = scalar_lea.vmem %s4, %s4939
      // Predicated region
      $region37: #{basic_conv2d.1} parent=35 // pred_check
        %p4941 = pneg %p151
      $region38: #{basic_conv2d.1} parent=35 // pred_check_branch
        %4943 = sbr.rel (%p4941) target = $region40
      $region39: #{basic_conv2d.1} parent=35 // pred_region
        _
      $region40: #{basic_conv2d.1} parent=35 // pred_fallthru
        _
    $region36: #{basic_conv2d.1} parent=5 // pred_fallthru
      _
    %p4944 = scmp.le.s32.totalorder 2, %s10
    // Predicated region
    $region41: #{basic_conv2d.1} parent=5 // pred_check
      %p4945 = pneg %p4944
    $region42: #{basic_conv2d.1} parent=5 // pred_check_branch
      %4947 = sbr.rel (%p4945) target = $region44
    $region43: #{basic_conv2d.1} parent=5 // pred_region
      %s4948 = ssub.s32 %s10, 2
      // Predicated region
      $region45: #{basic_conv2d.1} parent=43 // pred_check
        %p4949 = pneg %p157
      $region46: #{basic_conv2d.1} parent=43 // pred_check_branch
        %4951 = sbr.rel (%p4949) target = $region48
      $region47: #{basic_conv2d.1} parent=43 // pred_region
        %p4952 = scmp.lt.s32.totalorder %s21, 1
        %s4953 = scalar_select %p4952, %s21, 1
        %p4954 = scmp.lt.s32.totalorder %s22, 0
        %s4955 = scalar_select %p4954, %s22, 0
        %s4956 = smul.addr %s4953, 32
        %s4957 = sadd.s32 %s4955, %s4956
        %s4958 = smul.addr %s4957, 8
        %s4959 = scalar_lea.vmem %s4, %s4958
      $region48: #{basic_conv2d.1} parent=43 // pred_fallthru
        _
    $region44: #{basic_conv2d.1} parent=5 // pred_fallthru
      _
  $region6: #{basic_conv2d.1} parent=0 // loop_footer
    %s14 = sadd.s32 1, %s10
  $region7: #{basic_conv2d.1} parent=0 // loop_footer_branch
    %9 = sbr.rel target = $region3
  $region8: #{basic_conv2d.1} parent=0 // loop_exit
    _

</llo_original>
